<compile_context>
chip_gen: v7x
topology: tpu7x:2x2x1
jax: 0.10.0
libtpu: 0.0.40
codegen_flags: <defaults>
</compile_context>

<pallas_src>
import functools

import jax
import jax.numpy as jnp
from jax.experimental import pallas as pl
from jax.experimental.pallas import tpu as pltpu

LANE = 128
SUBLANE = 8
ROW_TILE = 512


def _round_up(x, m):
    return (x + m - 1) // m * m


# ---------------------------------------------------------------------------
# Kernels (all matmuls: bf16 operands, f32 accumulation on the MXU)
# ---------------------------------------------------------------------------

def xw_kernel(x_ref, w_ref, z_ref):
    # Z = X @ W1   (layer-1 feature transform, row tile of X)
    z_ref[...] = jnp.dot(
        x_ref[...], w_ref[...], preferred_element_type=jnp.float32
    ).astype(z_ref.dtype)


def fused_agg_kernel(adj_ref, z_ref, b1_ref, w2_ref, b2_ref, out_ref,
                     adj_scr, p_scr):
    # Two-phase fused aggregation.  grid = (phase, row_tile); phase is the
    # slow axis, so every phase-0 step completes before phase 1 starts.
    #   phase 0: stream adj row-stripe i from HBM (exactly once), stash it in
    #            adj_scr, and compute P[i] = ReLU(A[i] @ Z + b1) @ W2 -> p_scr.
    #   phase 1: OUT[i] = A[i] @ P + b2 using only the VMEM-resident scratch.
    ph = pl.program_id(0)
    i = pl.program_id(1)
    tm = out_ref.shape[0]
    row0 = pl.multiple_of(i * tm, tm)

    @pl.when(ph == 0)
    def _phase0():
        a_rows = adj_ref[...]                        # (tm, n_pad) bf16 stripe
        adj_scr[pl.ds(row0, tm), :] = a_rows         # keep resident for phase 1
        h = jnp.dot(a_rows, z_ref[...], preferred_element_type=jnp.float32)
        h = jnp.maximum(h + b1_ref[...], 0.0)
        # TODO(synk): training-mode dropout(p=0.6) mask not applied; eval mode.
        p_scr[pl.ds(row0, tm), :] = jnp.dot(
            h.astype(w2_ref.dtype), w2_ref[...],
            preferred_element_type=jnp.float32,
        ).astype(p_scr.dtype)

    @pl.when(ph == 1)
    def _phase1():
        a_rows = adj_scr[pl.ds(row0, tm), :]
        out_ref[...] = (
            jnp.dot(a_rows, p_scr[...], preferred_element_type=jnp.float32)
            + b2_ref[...]
        )


# ---------------------------------------------------------------------------
# One-time padding / casting (hoisted out of the forward path)
# ---------------------------------------------------------------------------

def prepare_padded_inputs(x, adj, w1, b1, w2, b2, *, row_tile=ROW_TILE):
    """Pad + cast every operand ONCE; reuse the results across forward calls."""
    n, f_in = x.shape
    hid = w1.shape[1]
    out_dim = w2.shape[1]

    k_pad = _round_up(f_in, LANE)             # 1433 -> 1536 (aligned MXU K)
    h_pad = _round_up(hid, LANE)              # 256  -> 256
    o_pad = _round_up(out_dim, LANE)          # 7    -> 128 (lane-dense stores)
    tm = min(row_tile, _round_up(n, SUBLANE))
    n_pad = _round_up(n, tm)

    bf = jnp.bfloat16
    x_p = jnp.zeros((n_pad, k_pad), bf).at[:n, :f_in].set(x.astype(bf))
    # INVARIANT: padded adj rows/cols >= n must stay zero.  Padded rows of the
    # hidden state are ReLU(b1) != 0 and would otherwise leak into valid rows.
    adj_p = jnp.zeros((n_pad, n_pad), bf).at[:n, :n].set(adj.astype(bf))
    w1_p = jnp.zeros((k_pad, h_pad), bf).at[:f_in, :hid].set(w1.astype(bf))
    b1_p = jnp.zeros((1, h_pad), jnp.float32).at[:, :hid].set(
        b1.reshape(1, hid).astype(jnp.float32))
    w2_p = jnp.zeros((h_pad, o_pad), bf).at[:hid, :out_dim].set(w2.astype(bf))
    b2_p = jnp.zeros((1, o_pad), jnp.float32).at[:, :out_dim].set(
        b2.reshape(1, out_dim).astype(jnp.float32))
    return x_p, adj_p, w1_p, b1_p, w2_p, b2_p


# ---------------------------------------------------------------------------
# Forward pass over the padded operands
# ---------------------------------------------------------------------------

@functools.partial(jax.jit, static_argnames=("row_tile",))
def gcn_forward_padded(x_p, adj_p, w1_p, b1_p, w2_p, b2_p, *, row_tile=ROW_TILE):
    n_pad, k_pad = x_p.shape
    h_pad = w1_p.shape[1]
    o_pad = w2_p.shape[1]
    bf = x_p.dtype

    tm = min(row_tile, n_pad)
    assert n_pad % tm == 0, (n_pad, tm)
    nt = n_pad // tm
    last = nt - 1

    # ---- stage 1: Z = X @ W1 (independent row tiles -> "parallel" axis,
    #      shards across both TensorCores on v7x when nt >= 2) ----
    z = pl.pallas_call(
        xw_kernel,
        out_shape=jax.ShapeDtypeStruct((n_pad, h_pad), bf),
        grid=(nt,),
        in_specs=[
            pl.BlockSpec((tm, k_pad), lambda i: (i, 0)),
            pl.BlockSpec((k_pad, h_pad), lambda i: (0, 0)),
        ],
        out_specs=pl.BlockSpec((tm, h_pad), lambda i: (i, 0)),
        compiler_params=pltpu.CompilerParams(
            dimension_semantics=("parallel",)),
    )(x_p, w1_p)

    # ---- stage 2+3 fused: OUT = A @ (ReLU(A @ Z + b1) @ W2) + b2 ----
    # Static VMEM estimate; only raise the scoped limit when we actually need
    # more than the conservative 16 MiB default (real-Cora shapes).
    est_vmem = (
        n_pad * n_pad * 2            # adj scratch (bf16, single copy)
        + n_pad * o_pad * 2          # P scratch (bf16)
        + 2 * tm * n_pad * 2         # streamed adj stripe (double-buffered)
        + 2 * n_pad * h_pad * 2      # resident Z (double-buffered)
        + 2 * h_pad * o_pad * 2      # W2
        + 2 * tm * o_pad * 4         # output tile (f32)
        + 2 * (h_pad + o_pad) * 4    # biases
    )
    vmem_limit = None
    if est_vmem > 14 * (1 << 20):
        vmem_limit = min(int(est_vmem * 1.3), 56 * (1 << 20))

    out_full = pl.pallas_call(
        fused_agg_kernel,
        out_shape=jax.ShapeDtypeStruct((n_pad, o_pad), jnp.float32),
        grid=(2, nt),                                  # (phase, row tile)
        in_specs=[
            # phase 0: stripe i; phase 1: pinned to the last stripe already in
            # the buffer, so adj is never re-fetched from HBM.
            pl.BlockSpec((tm, n_pad),
                         lambda ph, i: (i * (1 - ph) + last * ph, 0)),
            pl.BlockSpec((n_pad, h_pad), lambda ph, i: (0, 0)),
            pl.BlockSpec((1, h_pad), lambda ph, i: (0, 0)),
            pl.BlockSpec((h_pad, o_pad), lambda ph, i: (0, 0)),
            pl.BlockSpec((1, o_pad), lambda ph, i: (0, 0)),
        ],
        # phase 0: parked on block 0 (never written, never flushed);
        # phase 1: block i, fully written exactly once.
        out_specs=pl.BlockSpec((tm, o_pad), lambda ph, i: (i * ph, 0)),
        scratch_shapes=[
            pltpu.VMEM((n_pad, n_pad), bf),     # adjacency, resident copy
            pltpu.VMEM((n_pad, o_pad), bf),     # P = ReLU(A@Z+b1) @ W2
        ],
        compiler_params=pltpu.CompilerParams(
            dimension_semantics=("arbitrary", "arbitrary"),
            vmem_limit_bytes=vmem_limit),
    )(adj_p, z, b1_p, w2_p, b2_p)

    return out_full


# ---------------------------------------------------------------------------
# Reference / inputs
# ---------------------------------------------------------------------------

def ref_forward_bf16(x, adj, w1, b1, w2, b2):
    # Pure-JAX reference with the same bf16-input / f32-accumulate data flow.
    bf = jnp.bfloat16
    xb, ab = x.astype(bf), adj.astype(bf)
    w1b, w2b = w1.astype(bf), w2.astype(bf)
    z = jnp.dot(xb, w1b, preferred_element_type=jnp.float32).astype(bf)
    h = jnp.maximum(jnp.dot(ab, z, preferred_element_type=jnp.float32) + b1, 0.0)
    pp = jnp.dot(h.astype(bf), w2b, preferred_element_type=jnp.float32).astype(bf)
    return jnp.dot(ab, pp, preferred_element_type=jnp.float32) + b2


def init_params(key, in_dim, hid_dim, out_dim):
    k1, k2 = jax.random.split(key, 2)
    w1 = jax.random.normal(k1, (in_dim, hid_dim), jnp.float32) * (1.0 / jnp.sqrt(in_dim))
    b1 = jnp.zeros((1, hid_dim), jnp.float32)
    w2 = jax.random.normal(k2, (hid_dim, out_dim), jnp.float32) * (1.0 / jnp.sqrt(hid_dim))
    b2 = jnp.zeros((1, out_dim), jnp.float32)
    return w1, b1, w2, b2


def make_inputs(key, n_nodes, in_dim):
    kx, ka = jax.random.split(key, 2)
    x = jax.random.normal(kx, (n_nodes, in_dim), jnp.float32)
    # random symmetric adjacency with self-loops, row-normalized
    a = (jax.random.uniform(ka, (n_nodes, n_nodes)) < 0.05).astype(jnp.float32)
    a = jnp.maximum(a, a.T) + jnp.eye(n_nodes, dtype=jnp.float32)
    a = a / jnp.sum(a, axis=1, keepdims=True)
    return x, a


if __name__ == "__main__":
    # Small graph; feature dims match the module: 1433 -> 256 -> 7
    N_NODES, IN_DIM, HID_DIM, OUT_DIM = 256, 1433, 256, 7

    key = jax.random.PRNGKey(0)
    k_in, k_par = jax.random.split(key)

    x, adj = make_inputs(k_in, N_NODES, IN_DIM)
    w1, b1, w2, b2 = init_params(k_par, IN_DIM, HID_DIM, OUT_DIM)

    # Pad + cast static operands ONCE (hoisted out of the forward path).
    padded = prepare_padded_inputs(x, adj, w1, b1, w2, b2, row_tile=ROW_TILE)
    padded = jax.block_until_ready(padded)

    out_full = gcn_forward_padded(*padded, row_tile=ROW_TILE)
    jax.block_until_ready(out_full)
    out = out_full[:N_NODES, :OUT_DIM]
    assert out.shape == (N_NODES, OUT_DIM)

    # exact-path check against a bf16-input / f32-accumulate JAX reference
    ref = ref_forward_bf16(x, adj, w1, b1, w2, b2)
    assert jnp.allclose(out, ref, atol=1e-2, rtol=1e-2), float(jnp.max(jnp.abs(out - ref)))

    # loose sanity check against pure-f32 math (bf16 matmul inputs => small rel error)
    h32 = jnp.maximum(adj @ (x @ w1) + b1, 0.0)
    ref32 = adj @ (h32 @ w2) + b2
    rel_err = jnp.linalg.norm(out - ref32) / (jnp.linalg.norm(ref32) + 1e-12)
    assert rel_err < 5e-2, float(rel_err)

    print("KERNEL_OK")
</pallas_src>

<mosaic_0001>
module attributes {stable_mosaic.version = 11 : i64} {
  func.func @xw_kernel(%arg0: i32, %arg1: memref<256x1536xbf16, #tpu.memory_space<vmem>>, %arg2: memref<1536x256xbf16, #tpu.memory_space<vmem>>, %arg3: memref<256x256xbf16, #tpu.memory_space<vmem>>) attributes {dimension_semantics = [#tpu.dimension_semantics<parallel>], iteration_bounds = array<i64: 1>, scalar_prefetch = 0 : i64, scratch_operands = 0 : i64, tpu.core_type = #tpu.core_type<tc>, window_params = [{transform_indices = @transform_0, window_bounds = array<i64: 256, 1536>}, {pipeline_mode = #tpu.pipeline_mode<synchronous>, transform_indices = @transform_1, window_bounds = array<i64: 1536, 256>}, {transform_indices = @transform_2, window_bounds = array<i64: 256, 256>}]} {
    %c0 = arith.constant 0 : index
    %c0_0 = arith.constant 0 : index
    %0 = vector.load %arg1[%c0, %c0_0] : memref<256x1536xbf16, #tpu.memory_space<vmem>>, vector<256x1536xbf16>
    %c0_1 = arith.constant 0 : index
    %c0_2 = arith.constant 0 : index
    %1 = vector.load %arg2[%c0_1, %c0_2] : memref<1536x256xbf16, #tpu.memory_space<vmem>>, vector<1536x256xbf16>
    %cst = arith.constant dense<0.000000e+00> : vector<256x256xf32>
    %2 = tpu.matmul %0, %1, %cst {dimension_numbers = #tpu.dot_dimension_numbers<[1], [0], [0], [1], [0, 0, 1, 1], [], []>} : vector<256x1536xbf16>, vector<1536x256xbf16>, vector<256x256xf32> -> vector<256x256xf32>
    %3 = arith.truncf %2 : vector<256x256xf32> to vector<256x256xbf16>
    %c0_3 = arith.constant 0 : index
    %c0_4 = arith.constant 0 : index
    %4 = vector.load %arg3[%c0_3, %c0_4] : memref<256x256xbf16, #tpu.memory_space<vmem>>, vector<256x256xbf16>
    tpu.vector_store %arg3[%c0_3, %c0_4], %3 {strides = array<i32>} : memref<256x256xbf16, #tpu.memory_space<vmem>>, vector<256x256xbf16>,
    return
  }
  func.func @transform_0(%arg0: i32) -> (i32, i32) {
    %c0_i32 = arith.constant 0 : i32
    %c0_i32_0 = arith.constant 0 : i32
    return %arg0, %c0_i32 : i32, i32
  }
  func.func @transform_1(%arg0: i32) -> (i32, i32) {
    %c0_i32 = arith.constant 0 : i32
    %c0_i32_0 = arith.constant 0 : i32
    %c0_i32_1 = arith.constant 0 : i32
    return %c0_i32, %c0_i32_0 : i32, i32
  }
  func.func @transform_2(%arg0: i32) -> (i32, i32) {
    %c0_i32 = arith.constant 0 : i32
    %c0_i32_0 = arith.constant 0 : i32
    return %arg0, %c0_i32 : i32, i32
  }
}

module attributes {stable_mosaic.version = 11 : i64} {
  func.func @fused_agg_kernel(%arg0: i32, %arg1: i32, %arg2: memref<256x256xbf16, #tpu.memory_space<vmem>>, %arg3: memref<256x256xbf16, #tpu.memory_space<vmem>>, %arg4: memref<1x256xf32, #tpu.memory_space<vmem>>, %arg5: memref<256x128xbf16, #tpu.memory_space<vmem>>, %arg6: memref<1x128xf32, #tpu.memory_space<vmem>>, %arg7: memref<256x128xf32, #tpu.memory_space<vmem>>, %arg8: memref<256x256xbf16, #tpu.memory_space<vmem>>, %arg9: memref<256x128xbf16, #tpu.memory_space<vmem>>) attributes {dimension_semantics = [#tpu.dimension_semantics<arbitrary>, #tpu.dimension_semantics<arbitrary>], iteration_bounds = array<i64: 2, 1>, scalar_prefetch = 0 : i64, scratch_operands = 2 : i64, tpu.core_type = #tpu.core_type<tc>, window_params = [{transform_indices = @transform_0, window_bounds = array<i64: 256, 256>}, {pipeline_mode = #tpu.pipeline_mode<synchronous>, transform_indices = @transform_1, window_bounds = array<i64: 256, 256>}, {pipeline_mode = #tpu.pipeline_mode<synchronous>, transform_indices = @transform_2, window_bounds = array<i64: 1, 256>}, {pipeline_mode = #tpu.pipeline_mode<synchronous>, transform_indices = @transform_3, window_bounds = array<i64: 256, 128>}, {pipeline_mode = #tpu.pipeline_mode<synchronous>, transform_indices = @transform_4, window_bounds = array<i64: 1, 128>}, {transform_indices = @transform_5, window_bounds = array<i64: 256, 128>}]} {
    %c256_i32 = arith.constant 256 : i32
    %0 = arith.muli %arg1, %c256_i32 : i32
    %1 = tpu.assume_multiple %0, 256 : i32
    %c0_i32 = arith.constant 0 : i32
    %2 = arith.cmpi eq, %arg0, %c0_i32 : i32
    %3 = arith.extui %2 : i1 to i32
    %c0_i32_0 = arith.constant 0 : i32
    %4 = arith.cmpi ne, %3, %c0_i32_0 : i32
    scf.if %4 {
      %c0 = arith.constant 0 : index
      %c0_2 = arith.constant 0 : index
      %8 = vector.load %arg2[%c0, %c0_2] : memref<256x256xbf16, #tpu.memory_space<vmem>>, vector<256x256xbf16>
      %9 = arith.index_cast %1 : i32 to index
      %c0_3 = arith.constant 0 : index
      %10 = vector.load %arg8[%9, %c0_3] : memref<256x256xbf16, #tpu.memory_space<vmem>>, vector<256x256xbf16>
      tpu.vector_store %arg8[%9, %c0_3], %8 {strides = array<i32>} : memref<256x256xbf16, #tpu.memory_space<vmem>>, vector<256x256xbf16>,
      %c0_4 = arith.constant 0 : index
      %c0_5 = arith.constant 0 : index
      %11 = vector.load %arg3[%c0_4, %c0_5] : memref<256x256xbf16, #tpu.memory_space<vmem>>, vector<256x256xbf16>
      %cst = arith.constant dense<0.000000e+00> : vector<256x256xf32>
      %12 = tpu.matmul %8, %11, %cst {dimension_numbers = #tpu.dot_dimension_numbers<[1], [0], [0], [1], [0, 0, 1, 1], [], []>} : vector<256x256xbf16>, vector<256x256xbf16>, vector<256x256xf32> -> vector<256x256xf32>
      %c0_6 = arith.constant 0 : index
      %c0_7 = arith.constant 0 : index
      %13 = vector.load %arg4[%c0_6, %c0_7] : memref<1x256xf32, #tpu.memory_space<vmem>>, vector<1x256xf32>
      %14 = vector.broadcast %13 : vector<1x256xf32> to vector<256x256xf32>
      %15 = arith.addf %12, %14 : vector<256x256xf32>
      %cst_8 = arith.constant 0.000000e+00 : f32
      %16 = vector.broadcast %cst_8 : f32 to vector<256x256xf32>
      %17 = arith.maximumf %15, %16 : vector<256x256xf32>
      %18 = arith.truncf %17 : vector<256x256xf32> to vector<256x256xbf16>
      %c0_9 = arith.constant 0 : index
      %c0_10 = arith.constant 0 : index
      %19 = vector.load %arg5[%c0_9, %c0_10] : memref<256x128xbf16, #tpu.memory_space<vmem>>, vector<256x128xbf16>
      %cst_11 = arith.constant dense<0.000000e+00> : vector<256x128xf32>
      %20 = tpu.matmul %18, %19, %cst_11 {dimension_numbers = #tpu.dot_dimension_numbers<[1], [0], [0], [1], [0, 0, 1, 1], [], []>} : vector<256x256xbf16>, vector<256x128xbf16>, vector<256x128xf32> -> vector<256x128xf32>
      %21 = arith.truncf %20 : vector<256x128xf32> to vector<256x128xbf16>
      %22 = arith.index_cast %1 : i32 to index
      %c0_12 = arith.constant 0 : index
      %23 = vector.load %arg9[%22, %c0_12] : memref<256x128xbf16, #tpu.memory_space<vmem>>, vector<256x128xbf16>
      tpu.vector_store %arg9[%22, %c0_12], %21 {strides = array<i32>} : memref<256x128xbf16, #tpu.memory_space<vmem>>, vector<256x128xbf16>,
    } else {
    }
    %c1_i32 = arith.constant 1 : i32
    %5 = arith.cmpi eq, %arg0, %c1_i32 : i32
    %6 = arith.extui %5 : i1 to i32
    %c0_i32_1 = arith.constant 0 : i32
    %7 = arith.cmpi ne, %6, %c0_i32_1 : i32
    scf.if %7 {
      %8 = arith.index_cast %1 : i32 to index
      %c0 = arith.constant 0 : index
      %9 = vector.load %arg8[%8, %c0] : memref<256x256xbf16, #tpu.memory_space<vmem>>, vector<256x256xbf16>
      %c0_2 = arith.constant 0 : index
      %c0_3 = arith.constant 0 : index
      %10 = vector.load %arg9[%c0_2, %c0_3] : memref<256x128xbf16, #tpu.memory_space<vmem>>, vector<256x128xbf16>
      %cst = arith.constant dense<0.000000e+00> : vector<256x128xf32>
      %11 = tpu.matmul %9, %10, %cst {dimension_numbers = #tpu.dot_dimension_numbers<[1], [0], [0], [1], [0, 0, 1, 1], [], []>} : vector<256x256xbf16>, vector<256x128xbf16>, vector<256x128xf32> -> vector<256x128xf32>
      %c0_4 = arith.constant 0 : index
      %c0_5 = arith.constant 0 : index
      %12 = vector.load %arg6[%c0_4, %c0_5] : memref<1x128xf32, #tpu.memory_space<vmem>>, vector<1x128xf32>
      %13 = vector.broadcast %12 : vector<1x128xf32> to vector<256x128xf32>
      %14 = arith.addf %11, %13 : vector<256x128xf32>
      %c0_6 = arith.constant 0 : index
      %c0_7 = arith.constant 0 : index
      %15 = vector.load %arg7[%c0_6, %c0_7] : memref<256x128xf32, #tpu.memory_space<vmem>>, vector<256x128xf32>
      tpu.vector_store %arg7[%c0_6, %c0_7], %14 {strides = array<i32>} : memref<256x128xf32, #tpu.memory_space<vmem>>, vector<256x128xf32>,
    } else {
    }
    return
  }
  func.func @transform_0(%arg0: i32, %arg1: i32) -> (i32, i32) {
    %c1_i32 = arith.constant 1 : i32
    %0 = arith.subi %c1_i32, %arg0 : i32
    %1 = arith.muli %arg1, %0 : i32
    %c0_i32 = arith.constant 0 : i32
    %2 = arith.muli %c0_i32, %arg0 : i32
    %3 = arith.addi %1, %2 : i32
    %c0_i32_0 = arith.constant 0 : i32
    %c0_i32_1 = arith.constant 0 : i32
    return %3, %c0_i32_0 : i32, i32
  }
  func.func @transform_1(%arg0: i32, %arg1: i32) -> (i32, i32) {
    %c0_i32 = arith.constant 0 : i32
    %c0_i32_0 = arith.constant 0 : i32
    %c0_i32_1 = arith.constant 0 : i32
    return %c0_i32, %c0_i32_0 : i32, i32
  }
  func.func @transform_2(%arg0: i32, %arg1: i32) -> (i32, i32) {
    %c0_i32 = arith.constant 0 : i32
    %c0_i32_0 = arith.constant 0 : i32
    %c0_i32_1 = arith.constant 0 : i32
    return %c0_i32, %c0_i32_0 : i32, i32
  }
  func.func @transform_3(%arg0: i32, %arg1: i32) -> (i32, i32) {
    %c0_i32 = arith.constant 0 : i32
    %c0_i32_0 = arith.constant 0 : i32
    %c0_i32_1 = arith.constant 0 : i32
    return %c0_i32, %c0_i32_0 : i32, i32
  }
  func.func @transform_4(%arg0: i32, %arg1: i32) -> (i32, i32) {
    %c0_i32 = arith.constant 0 : i32
    %c0_i32_0 = arith.constant 0 : i32
    %c0_i32_1 = arith.constant 0 : i32
    return %c0_i32, %c0_i32_0 : i32, i32
  }
  func.func @transform_5(%arg0: i32, %arg1: i32) -> (i32, i32) {
    %0 = arith.muli %arg1, %arg0 : i32
    %c0_i32 = arith.constant 0 : i32
    %c0_i32_0 = arith.constant 0 : i32
    return %0, %c0_i32 : i32, i32
  }
}

</mosaic_0001>

<llo_original>
// kernel: gcn_forward_padded.3
$region0: #{gcn_forward_padded.3}
  #allocation0 [shape = 'u32[]', space=smem, size = 0x4, offset = 0x4, fixed_abs, tag = 'smem constant byte address 0x4 - core index']
  #allocation1 [shape = 'u32[144,128]{1,0:T(1,128)}', space=vmem, size = 0x12000, scoped, tag = 'internal scratch']
  #allocation2 [shape = 'bf16[256,256]{1,0:T(16,128)(2,1)}', space=vmem, size = 0x20000, scoped, tag = 'scratch operand']
  #allocation3 [shape = 'bf16[256,128]{1,0:T(16,128)(2,1)}', space=vmem, size = 0x10000, scoped, tag = 'scratch operand']
  %s0 = inlined_call_operand.vmem [shape: bf16[256,256], index: 0, kind: input, shape index: {}]
  %s1 = inlined_call_operand.vmem [shape: bf16[256,256], index: 1, kind: input, shape index: {}]
  %s2 = inlined_call_operand.vmem [shape: f32[1,256], index: 2, kind: input, shape index: {}]
  %s3 = inlined_call_operand.vmem [shape: bf16[256,128], index: 3, kind: input, shape index: {}]
  %s4 = inlined_call_operand.vmem [shape: f32[1,128], index: 4, kind: input, shape index: {}]
  %s5 = inlined_call_operand.hbm [shape: f32[256,128], index: 5, kind: output, shape index: {}]
  %s6 = sld [smem:[#allocation0]]
  $region61: #{gcn_forward_padded.3} parent=0
    _
  %s8 = ssub.s32 1, %s6
  %s9 = scalar_select 0, %s8, %s6
  $region1: #{gcn_forward_padded.3} parent=0
    #allocation4 [shape = 'u8[262144]{0}', space=vmem, size = 0x40000, scoped, tag = 'output window, operand 0']
    #allocation5 [shape = 's32[2]{0}', space=sflag, size = 0x8, scoped, tag = 'scoped memory for gcn_forward_padded.3']
    %10 = vsyncpa [#allocation5], 0
    %s11 = scalar_lea.sflag [#allocation5], 1
    %12 = vsyncpa %s11, 0
    loop: start=0, step=1, limit=4
    $region2: #{gcn_forward_padded.3} parent=1 // loop_pre_header
      _
    $region3: #{gcn_forward_padded.3} parent=1 // loop_header
      %s14 = sphi 0, %s18
      %p15 = scmp.ge.s32.totalorder %s14, 4
      %s21 = sphi 0, %s33
      %s22 = sphi 0, %s29
      %s23 = sphi 0, %s21
      %s24 = sphi 0, %s22
      %s25 = sphi 0, %s23
      %s26 = sphi 0, %s24
      %s40 = sphi 0, %s42
      %s43 = sphi 0, %s40
      %s44 = sphi 0, %s43
      %s60 = sphi 0, %s44
      %s64 = sphi 0, %s64
      %s66 = sphi 0, %s64
      %s67 = sphi 0, %s66
      %s81 = sphi 0, %s67
      %s85 = sphi 0, %s85
      %s87 = sphi 0, %s85
      %s88 = sphi 0, %s87
      %s102 = sphi 0, %s88
      %s106 = sphi 0, %s106
      %s108 = sphi 0, %s106
      %s109 = sphi 0, %s108
      %s123 = sphi 0, %s109
      %s127 = sphi 0, %s127
      %s129 = sphi 0, %s127
      %s130 = sphi 0, %s129
      %s144 = sphi 0, %s130
      %s152 = sphi 0, %s154
      %s155 = sphi 0, %s152
      %s156 = sphi 0, %s155
      %s172 = sphi 0, %s156
    $region4: #{gcn_forward_padded.3} parent=1 // loop_header_branch
      %17 = sbr.rel (%p15) target = $region8
    $region5: #{gcn_forward_padded.3} parent=1 // loop_body
      %s19 = ssub.s32 %s14, 1
      %s20 = ssub.s32 %s14, 2
      %s27 = sadd.s32 1, %s22
      %p28 = scmp.ge.s32.totalorder %s27, 1
      %s29 = scalar_select %p28, 0, %s27
      %s30 = sadd.s32 1, %s21
      %s31 = scalar_select %p28, %s30, %s21
      %p32 = scmp.ge.s32.totalorder %s31, 2
      %s33 = scalar_select %p32, 0, %s31
      %s34 = ssub.s32 1, %s21
      %s35 = smul.u32 %s22, %s34
      %s36 = ssub.s32 1, %s33
      %s37 = smul.u32 %s29, %s36
      %s38 = ssub.s32 %s35, %s37
      %p39 = scmp.eq.s32.totalorder %s38, 0
      %s41 = sadd.s32 %s40, 1
      %s42 = scalar_select %p39, %s40, %s41
      %p45 = pneg %p39
      %p46 = scmp.eq.s32.totalorder %s14, 1
      %p47 = por %p45, %p46
      %p48 = scmp.ne.s32.totalorder %s40, %s43
      %p49 = scmp.eq.s32.totalorder %s14, 0
      %p50 = por %p48, %p49
      %p51 = scmp.ne.s32.totalorder %s40, %s43
      %p52 = scmp.eq.s32.totalorder %s19, 1
      %p53 = por %p51, %p52
      %p54 = scmp.ne.s32.totalorder %s43, %s44
      %p55 = scmp.eq.s32.totalorder %s19, 0
      %p56 = por %p54, %p55
      %p57 = scmp.ne.s32.totalorder %s43, %s44
      %p58 = scmp.eq.s32.totalorder %s20, 1
      %p59 = por %p57, %p58
      %p61 = scmp.ne.s32.totalorder %s44, %s60
      %p62 = scmp.eq.s32.totalorder %s20, 0
      %p63 = por %p61, %p62
      %s65 = sadd.s32 %s64, 1
      %p68 = scmp.eq.s32.totalorder %s14, 1
      %p69 = scmp.ne.s32.totalorder %s64, %s66
      %p70 = scmp.eq.s32.totalorder %s14, 0
      %p71 = por %p69, %p70
      %p72 = scmp.ne.s32.totalorder %s64, %s66
      %p73 = scmp.eq.s32.totalorder %s19, 1
      %p74 = por %p72, %p73
      %p75 = scmp.ne.s32.totalorder %s66, %s67
      %p76 = scmp.eq.s32.totalorder %s19, 0
      %p77 = por %p75, %p76
      %p78 = scmp.ne.s32.totalorder %s66, %s67
      %p79 = scmp.eq.s32.totalorder %s20, 1
      %p80 = por %p78, %p79
      %p82 = scmp.ne.s32.totalorder %s67, %s81
      %p83 = scmp.eq.s32.totalorder %s20, 0
      %p84 = por %p82, %p83
      %s86 = sadd.s32 %s85, 1
      %p89 = scmp.eq.s32.totalorder %s14, 1
      %p90 = scmp.ne.s32.totalorder %s85, %s87
      %p91 = scmp.eq.s32.totalorder %s14, 0
      %p92 = por %p90, %p91
      %p93 = scmp.ne.s32.totalorder %s85, %s87
      %p94 = scmp.eq.s32.totalorder %s19, 1
      %p95 = por %p93, %p94
      %p96 = scmp.ne.s32.totalorder %s87, %s88
      %p97 = scmp.eq.s32.totalorder %s19, 0
      %p98 = por %p96, %p97
      %p99 = scmp.ne.s32.totalorder %s87, %s88
      %p100 = scmp.eq.s32.totalorder %s20, 1
      %p101 = por %p99, %p100
      %p103 = scmp.ne.s32.totalorder %s88, %s102
      %p104 = scmp.eq.s32.totalorder %s20, 0
      %p105 = por %p103, %p104
      %s107 = sadd.s32 %s106, 1
      %p110 = scmp.eq.s32.totalorder %s14, 1
      %p111 = scmp.ne.s32.totalorder %s106, %s108
      %p112 = scmp.eq.s32.totalorder %s14, 0
      %p113 = por %p111, %p112
      %p114 = scmp.ne.s32.totalorder %s106, %s108
      %p115 = scmp.eq.s32.totalorder %s19, 1
      %p116 = por %p114, %p115
      %p117 = scmp.ne.s32.totalorder %s108, %s109
      %p118 = scmp.eq.s32.totalorder %s19, 0
      %p119 = por %p117, %p118
      %p120 = scmp.ne.s32.totalorder %s108, %s109
      %p121 = scmp.eq.s32.totalorder %s20, 1
      %p122 = por %p120, %p121
      %p124 = scmp.ne.s32.totalorder %s109, %s123
      %p125 = scmp.eq.s32.totalorder %s20, 0
      %p126 = por %p124, %p125
      %s128 = sadd.s32 %s127, 1
      %p131 = scmp.eq.s32.totalorder %s14, 1
      %p132 = scmp.ne.s32.totalorder %s127, %s129
      %p133 = scmp.eq.s32.totalorder %s14, 0
      %p134 = por %p132, %p133
      %p135 = scmp.ne.s32.totalorder %s127, %s129
      %p136 = scmp.eq.s32.totalorder %s19, 1
      %p137 = por %p135, %p136
      %p138 = scmp.ne.s32.totalorder %s129, %s130
      %p139 = scmp.eq.s32.totalorder %s19, 0
      %p140 = por %p138, %p139
      %p141 = scmp.ne.s32.totalorder %s129, %s130
      %p142 = scmp.eq.s32.totalorder %s20, 1
      %p143 = por %p141, %p142
      %p145 = scmp.ne.s32.totalorder %s130, %s144
      %p146 = scmp.eq.s32.totalorder %s20, 0
      %p147 = por %p145, %p146
      %s148 = smul.u32 %s22, %s21
      %s149 = smul.u32 %s29, %s33
      %s150 = ssub.s32 %s148, %s149
      %p151 = scmp.eq.s32.totalorder %s150, 0
      %s153 = sadd.s32 %s152, 1
      %s154 = scalar_select %p151, %s152, %s153
      %p157 = pneg %p151
      %p158 = scmp.eq.s32.totalorder %s14, 1
      %p159 = por %p157, %p158
      %p160 = scmp.ne.s32.totalorder %s152, %s155
      %p161 = scmp.eq.s32.totalorder %s14, 0
      %p162 = por %p160, %p161
      %p163 = scmp.ne.s32.totalorder %s152, %s155
      %p164 = scmp.eq.s32.totalorder %s19, 1
      %p165 = por %p163, %p164
      %p166 = scmp.ne.s32.totalorder %s155, %s156
      %p167 = scmp.eq.s32.totalorder %s19, 0
      %p168 = por %p166, %p167
      %p169 = scmp.ne.s32.totalorder %s155, %s156
      %p170 = scmp.eq.s32.totalorder %s20, 1
      %p171 = por %p169, %p170
      %p173 = scmp.ne.s32.totalorder %s156, %s172
      %p174 = scmp.eq.s32.totalorder %s20, 0
      %p175 = por %p173, %p174
      %p176 = scmp.le.s32.totalorder 1, %s14
      %p177 = scmp.lt.s32.totalorder %s14, 3
      %p178 = pnand %p176, %p177
      %p179 = pneg %p178
      // Predicated region
      $region9: #{gcn_forward_padded.3} parent=5 // pred_check
        _
      $region10: #{gcn_forward_padded.3} parent=5 // pred_check_branch
        %181 = sbr.rel (%p178) target = $region12
      $region11: #{gcn_forward_padded.3} parent=5 // pred_region
        %s182 = ssub.s32 %s14, 1
        // Predicated region
        $region13: #{gcn_forward_padded.3} parent=11 // pred_check
          %p183 = pneg %p77
        $region14: #{gcn_forward_padded.3} parent=11 // pred_check_branch
          %185 = sbr.rel (%p183) target = $region16
        $region15: #{gcn_forward_padded.3} parent=11 // pred_region
          _
        $region16: #{gcn_forward_padded.3} parent=11 // pred_fallthru
          _
        // Predicated region
        $region17: #{gcn_forward_padded.3} parent=11 // pred_check
          %p186 = pneg %p98
        $region18: #{gcn_forward_padded.3} parent=11 // pred_check_branch
          %188 = sbr.rel (%p186) target = $region20
        $region19: #{gcn_forward_padded.3} parent=11 // pred_region
          _
        $region20: #{gcn_forward_padded.3} parent=11 // pred_fallthru
          _
        // Predicated region
        $region21: #{gcn_forward_padded.3} parent=11 // pred_check
          %p189 = pneg %p119
        $region22: #{gcn_forward_padded.3} parent=11 // pred_check_branch
          %191 = sbr.rel (%p189) target = $region24
        $region23: #{gcn_forward_padded.3} parent=11 // pred_region
          _
        $region24: #{gcn_forward_padded.3} parent=11 // pred_fallthru
          _
        // Predicated region
        $region25: #{gcn_forward_padded.3} parent=11 // pred_check
          %p192 = pneg %p140
        $region26: #{gcn_forward_padded.3} parent=11 // pred_check_branch
          %194 = sbr.rel (%p192) target = $region28
        $region27: #{gcn_forward_padded.3} parent=11 // pred_region
          _
        $region28: #{gcn_forward_padded.3} parent=11 // pred_fallthru
          _
      $region12: #{gcn_forward_padded.3} parent=5 // pred_fallthru
        _
      %p195 = scmp.lt.s32.totalorder %s14, 2
      // Predicated region
      $region29: #{gcn_forward_padded.3} parent=5 // pred_check
        %p196 = pneg %p195
      $region30: #{gcn_forward_padded.3} parent=5 // pred_check_branch
        %198 = sbr.rel (%p196) target = $region32
      $region31: #{gcn_forward_padded.3} parent=5 // pred_region
        // Predicated region
        $region33: #{gcn_forward_padded.3} parent=31 // pred_check
          %p199 = pneg %p50
        $region34: #{gcn_forward_padded.3} parent=31 // pred_check_branch
          %201 = sbr.rel (%p199) target = $region36
        $region35: #{gcn_forward_padded.3} parent=31 // pred_region
          %s202 = ssub.s32 1, %s21
          %s203 = smul.u32 %s22, %s202
          %s204 = smul.u32 32, %s203
          %p205 = scmp.lt.s32.totalorder %s204, 31
          %s206 = scalar_select %p205, %s204, 31
          %s207 = smul.addr %s206, 2
          %s208 = smul.addr %s207, 4
          %s209 = scalar_lea.vmem %s0, %s208
          %s210 = ssub.s32 1, %s21
          %s211 = smul.u32 %s22, %s210
          %s212 = smul.u32 32, %s211
        $region36: #{gcn_forward_padded.3} parent=31 // pred_fallthru
          _
      $region32: #{gcn_forward_padded.3} parent=5 // pred_fallthru
        _
      %p213 = scmp.le.s32.totalorder 1, %s14
      %p214 = scmp.lt.s32.totalorder %s14, 3
      %p215 = pnand %p213, %p214
      %p216 = pneg %p215
      // Predicated region
      $region37: #{gcn_forward_padded.3} parent=5 // pred_check
        _
      $region38: #{gcn_forward_padded.3} parent=5 // pred_check_branch
        %218 = sbr.rel (%p215) target = $region40
      $region39: #{gcn_forward_padded.3} parent=5 // pred_region
        %s219 = ssub.s32 %s14, 1
        %s220 = ssub.s32 1, %s23
        %s221 = smul.u32 %s24, %s220
        %s222 = smul.u32 32, %s221
        %p223 = scmp.lt.s32.totalorder %s222, 31
        %s224 = scalar_select %p223, %s222, 31
        %s225 = smul.addr %s224, 2
        %s226 = smul.addr %s225, 4
        %s227 = scalar_lea.vmem %s0, %s226
        %p228 = pneg %p56
        %p229 = pneg %p53
        %p230 = pneg %p77
        %p231 = pneg %p74
        %p232 = pneg %p98
        %p233 = pneg %p95
        %p234 = pneg %p119
        %p235 = pneg %p116
        %p236 = pneg %p140
        %p237 = pneg %p137
        %p238 = pneg %p168
        %p239 = pneg %p165
        %s240 = sand.u32 %s155, 1
        %s241 = scalar_lea.sflag [#allocation5], %s240
        %s242 = sand.u32 %s155, 1
        %s243 = smul.addr %s242, 256
        %s244 = scalar_lea.vmem [#allocation4], %s243
        %s245 = ssub.s32 1, %s23
        %s246 = smul.u32 %s24, %s245
        %s247 = smul.u32 32, %s246
        %p248 = scmp.lt.s32.totalorder %s247, 31
        %s249 = scalar_select %p248, %s247, 31
        %s250 = smul.addr %s249, 2
        %s251 = smul.addr %s250, 4
        %s252 = scalar_lea.vmem %s0, %s251
        %s253 = ssub.s32 1, %s23
        %s254 = smul.u32 %s24, %s253
        %s255 = smul.u32 32, %s254
        %s256 = smul.u32 %s24, %s23
        %s257 = smul.u32 32, %s256
        %s259 = smul.u32 %s24, 256
        %p260 = scmp.eq.s32.totalorder %s23, 0
        // Predicated region
        $region41: #{gcn_forward_padded.3} parent=39 // pred_check
          %p261 = pneg %p260
        $region42: #{gcn_forward_padded.3} parent=39 // pred_check_branch
          %263 = sbr.rel (%p261) target = $region44
        $region43: #{gcn_forward_padded.3} parent=39 // pred_region
          %v264 = vld [vmem:[%s252] sm:$0xff]
          %v265 = vld [vmem:[%s252 + $0x8] sm:$0xff]
          %v266 = vld [vmem:[%s252 + $0x10] sm:$0xff]
          %v267 = vld [vmem:[%s252 + $0x18] sm:$0xff]
          %v268 = vld [vmem:[%s252 + $0x20] sm:$0xff]
          %v269 = vld [vmem:[%s252 + $0x28] sm:$0xff]
          %v270 = vld [vmem:[%s252 + $0x30] sm:$0xff]
          %v271 = vld [vmem:[%s252 + $0x38] sm:$0xff]
          %v272 = vld [vmem:[%s252 + $0x40] sm:$0xff]
          %v273 = vld [vmem:[%s252 + $0x48] sm:$0xff]
          %v274 = vld [vmem:[%s252 + $0x50] sm:$0xff]
          %v275 = vld [vmem:[%s252 + $0x58] sm:$0xff]
          %v276 = vld [vmem:[%s252 + $0x60] sm:$0xff]
          %v277 = vld [vmem:[%s252 + $0x68] sm:$0xff]
          %v278 = vld [vmem:[%s252 + $0x70] sm:$0xff]
          %v279 = vld [vmem:[%s252 + $0x78] sm:$0xff]
          %v280 = vld [vmem:[%s252 + $0x80] sm:$0xff]
          %v281 = vld [vmem:[%s252 + $0x88] sm:$0xff]
          %v282 = vld [vmem:[%s252 + $0x90] sm:$0xff]
          %v283 = vld [vmem:[%s252 + $0x98] sm:$0xff]
          %v284 = vld [vmem:[%s252 + $0xa0] sm:$0xff]
          %v285 = vld [vmem:[%s252 + $0xa8] sm:$0xff]
          %v286 = vld [vmem:[%s252 + $0xb0] sm:$0xff]
          %v287 = vld [vmem:[%s252 + $0xb8] sm:$0xff]
          %v288 = vld [vmem:[%s252 + $0xc0] sm:$0xff]
          %v289 = vld [vmem:[%s252 + $0xc8] sm:$0xff]
          %v290 = vld [vmem:[%s252 + $0xd0] sm:$0xff]
          %v291 = vld [vmem:[%s252 + $0xd8] sm:$0xff]
          %v292 = vld [vmem:[%s252 + $0xe0] sm:$0xff]
          %v293 = vld [vmem:[%s252 + $0xe8] sm:$0xff]
          %v294 = vld [vmem:[%s252 + $0xf0] sm:$0xff]
          %v295 = vld [vmem:[%s252 + $0xf8] sm:$0xff]
          %v328 = vunpack.c.l.b16 %v264
          %v329 = vunpack.c.h.b16 %v264
          %v330 = vunpack.c.l.b16 %v265
          %v331 = vunpack.c.h.b16 %v265
          %v332 = vunpack.c.l.b16 %v266
          %v333 = vunpack.c.h.b16 %v266
          %v334 = vunpack.c.l.b16 %v267
          %v335 = vunpack.c.h.b16 %v267
          %v336 = vunpack.c.l.b16 %v268
          %v337 = vunpack.c.h.b16 %v268
          %v338 = vunpack.c.l.b16 %v269
          %v339 = vunpack.c.h.b16 %v269
          %v340 = vunpack.c.l.b16 %v270
          %v341 = vunpack.c.h.b16 %v270
          %v342 = vunpack.c.l.b16 %v271
          %v343 = vunpack.c.h.b16 %v271
          %v344 = vunpack.c.l.b16 %v272
          %v345 = vunpack.c.h.b16 %v272
          %v346 = vunpack.c.l.b16 %v273
          %v347 = vunpack.c.h.b16 %v273
          %v348 = vunpack.c.l.b16 %v274
          %v349 = vunpack.c.h.b16 %v274
          %v350 = vunpack.c.l.b16 %v275
          %v351 = vunpack.c.h.b16 %v275
          %v352 = vunpack.c.l.b16 %v276
          %v353 = vunpack.c.h.b16 %v276
          %v354 = vunpack.c.l.b16 %v277
          %v355 = vunpack.c.h.b16 %v277
          %v356 = vunpack.c.l.b16 %v278
          %v357 = vunpack.c.h.b16 %v278
          %v358 = vunpack.c.l.b16 %v279
          %v359 = vunpack.c.h.b16 %v279
          %v360 = vunpack.c.l.b16 %v280
          %v361 = vunpack.c.h.b16 %v280
          %v362 = vunpack.c.l.b16 %v281
          %v363 = vunpack.c.h.b16 %v281
          %v364 = vunpack.c.l.b16 %v282
          %v365 = vunpack.c.h.b16 %v282
          %v366 = vunpack.c.l.b16 %v283
          %v367 = vunpack.c.h.b16 %v283
          %v368 = vunpack.c.l.b16 %v284
          %v369 = vunpack.c.h.b16 %v284
          %v370 = vunpack.c.l.b16 %v285
          %v371 = vunpack.c.h.b16 %v285
          %v372 = vunpack.c.l.b16 %v286
          %v373 = vunpack.c.h.b16 %v286
          %v374 = vunpack.c.l.b16 %v287
          %v375 = vunpack.c.h.b16 %v287
          %v376 = vunpack.c.l.b16 %v288
          %v377 = vunpack.c.h.b16 %v288
          %v378 = vunpack.c.l.b16 %v289
          %v379 = vunpack.c.h.b16 %v289
          %v380 = vunpack.c.l.b16 %v290
          %v381 = vunpack.c.h.b16 %v290
          %v382 = vunpack.c.l.b16 %v291
          %v383 = vunpack.c.h.b16 %v291
          %v384 = vunpack.c.l.b16 %v292
          %v385 = vunpack.c.h.b16 %v292
          %v386 = vunpack.c.l.b16 %v293
          %v387 = vunpack.c.h.b16 %v293
          %v388 = vunpack.c.l.b16 %v294
          %v389 = vunpack.c.h.b16 %v294
          %v390 = vunpack.c.l.b16 %v295
          %v391 = vunpack.c.h.b16 %v295
          %v392 = vpack.c.b16 %v330, %v328
          %v393 = vpack.c.b16 %v331, %v329
          %v394 = vpack.c.b16 %v334, %v332
          %v395 = vpack.c.b16 %v335, %v333
          %v396 = vpack.c.b16 %v338, %v336
          %v397 = vpack.c.b16 %v339, %v337
          %v398 = vpack.c.b16 %v342, %v340
          %v399 = vpack.c.b16 %v343, %v341
          %v400 = vpack.c.b16 %v346, %v344
          %v401 = vpack.c.b16 %v347, %v345
          %v402 = vpack.c.b16 %v350, %v348
          %v403 = vpack.c.b16 %v351, %v349
          %v404 = vpack.c.b16 %v354, %v352
          %v405 = vpack.c.b16 %v355, %v353
          %v406 = vpack.c.b16 %v358, %v356
          %v407 = vpack.c.b16 %v359, %v357
          %v408 = vpack.c.b16 %v362, %v360
          %v409 = vpack.c.b16 %v363, %v361
          %v410 = vpack.c.b16 %v366, %v364
          %v411 = vpack.c.b16 %v367, %v365
          %v412 = vpack.c.b16 %v370, %v368
          %v413 = vpack.c.b16 %v371, %v369
          %v414 = vpack.c.b16 %v374, %v372
          %v415 = vpack.c.b16 %v375, %v373
          %v416 = vpack.c.b16 %v378, %v376
          %v417 = vpack.c.b16 %v379, %v377
          %v418 = vpack.c.b16 %v382, %v380
          %v419 = vpack.c.b16 %v383, %v381
          %v420 = vpack.c.b16 %v386, %v384
          %v421 = vpack.c.b16 %v387, %v385
          %v422 = vpack.c.b16 %v390, %v388
          %v423 = vpack.c.b16 %v391, %v389
          %s456 = sshra.s32 %s259, 4
          %s457 = sand.u32 %s259, 15
          %s458 = smul.u32 %s456, 2
          %s459 = smul.addr %s458, 8
          %s460 = scalar_lea.vmem [#allocation2], %s459
          %461 = vst [vmem:[%s460] sm:$0xff] %v392
          %462 = vst [vmem:[%s460 + $0x8] sm:$0xff] %v393
          %463 = vst [vmem:[%s460 + $0x10] sm:$0xff] %v394
          %464 = vst [vmem:[%s460 + $0x18] sm:$0xff] %v395
          %465 = vst [vmem:[%s460 + $0x20] sm:$0xff] %v396
          %466 = vst [vmem:[%s460 + $0x28] sm:$0xff] %v397
          %467 = vst [vmem:[%s460 + $0x30] sm:$0xff] %v398
          %468 = vst [vmem:[%s460 + $0x38] sm:$0xff] %v399
          %469 = vst [vmem:[%s460 + $0x40] sm:$0xff] %v400
          %470 = vst [vmem:[%s460 + $0x48] sm:$0xff] %v401
          %471 = vst [vmem:[%s460 + $0x50] sm:$0xff] %v402
          %472 = vst [vmem:[%s460 + $0x58] sm:$0xff] %v403
          %473 = vst [vmem:[%s460 + $0x60] sm:$0xff] %v404
          %474 = vst [vmem:[%s460 + $0x68] sm:$0xff] %v405
          %475 = vst [vmem:[%s460 + $0x70] sm:$0xff] %v406
          %476 = vst [vmem:[%s460 + $0x78] sm:$0xff] %v407
          %477 = vst [vmem:[%s460 + $0x80] sm:$0xff] %v408
          %478 = vst [vmem:[%s460 + $0x88] sm:$0xff] %v409
          %479 = vst [vmem:[%s460 + $0x90] sm:$0xff] %v410
          %480 = vst [vmem:[%s460 + $0x98] sm:$0xff] %v411
          %481 = vst [vmem:[%s460 + $0xa0] sm:$0xff] %v412
          %482 = vst [vmem:[%s460 + $0xa8] sm:$0xff] %v413
          %483 = vst [vmem:[%s460 + $0xb0] sm:$0xff] %v414
          %484 = vst [vmem:[%s460 + $0xb8] sm:$0xff] %v415
          %485 = vst [vmem:[%s460 + $0xc0] sm:$0xff] %v416
          %486 = vst [vmem:[%s460 + $0xc8] sm:$0xff] %v417
          %487 = vst [vmem:[%s460 + $0xd0] sm:$0xff] %v418
          %488 = vst [vmem:[%s460 + $0xd8] sm:$0xff] %v419
          %489 = vst [vmem:[%s460 + $0xe0] sm:$0xff] %v420
          %490 = vst [vmem:[%s460 + $0xe8] sm:$0xff] %v421
          %491 = vst [vmem:[%s460 + $0xf0] sm:$0xff] %v422
          %492 = vst [vmem:[%s460 + $0xf8] sm:$0xff] %v423
          %v493 = vld [vmem:[%s1] sm:$0xff]
          %v494 = vld [vmem:[%s1 + $0x8] sm:$0xff]
          %v495 = vld [vmem:[%s1 + $0x10] sm:$0xff]
          %v496 = vld [vmem:[%s1 + $0x18] sm:$0xff]
          %v497 = vld [vmem:[%s1 + $0x20] sm:$0xff]
          %v498 = vld [vmem:[%s1 + $0x28] sm:$0xff]
          %v499 = vld [vmem:[%s1 + $0x30] sm:$0xff]
          %v500 = vld [vmem:[%s1 + $0x38] sm:$0xff]
          %v501 = vld [vmem:[%s1 + $0x40] sm:$0xff]
          %v502 = vld [vmem:[%s1 + $0x48] sm:$0xff]
          %v503 = vld [vmem:[%s1 + $0x50] sm:$0xff]
          %v504 = vld [vmem:[%s1 + $0x58] sm:$0xff]
          %v505 = vld [vmem:[%s1 + $0x60] sm:$0xff]
          %v506 = vld [vmem:[%s1 + $0x68] sm:$0xff]
          %v507 = vld [vmem:[%s1 + $0x70] sm:$0xff]
          %v508 = vld [vmem:[%s1 + $0x78] sm:$0xff]
          %v509 = vld [vmem:[%s1 + $0x80] sm:$0xff]
          %v510 = vld [vmem:[%s1 + $0x88] sm:$0xff]
          %v511 = vld [vmem:[%s1 + $0x90] sm:$0xff]
          %v512 = vld [vmem:[%s1 + $0x98] sm:$0xff]
          %v513 = vld [vmem:[%s1 + $0xa0] sm:$0xff]
          %v514 = vld [vmem:[%s1 + $0xa8] sm:$0xff]
          %v515 = vld [vmem:[%s1 + $0xb0] sm:$0xff]
          %v516 = vld [vmem:[%s1 + $0xb8] sm:$0xff]
          %v517 = vld [vmem:[%s1 + $0xc0] sm:$0xff]
          %v518 = vld [vmem:[%s1 + $0xc8] sm:$0xff]
          %v519 = vld [vmem:[%s1 + $0xd0] sm:$0xff]
          %v520 = vld [vmem:[%s1 + $0xd8] sm:$0xff]
          %v521 = vld [vmem:[%s1 + $0xe0] sm:$0xff]
          %v522 = vld [vmem:[%s1 + $0xe8] sm:$0xff]
          %v523 = vld [vmem:[%s1 + $0xf0] sm:$0xff]
          %v524 = vld [vmem:[%s1 + $0xf8] sm:$0xff]
          %v525 = vld [vmem:[%s2] sm:$0x3]
          %v527 = vlaneseq
          %v528 = vshrl.u32 %v527, 7
          %v529 = vsub.s32 0, %v528
          %v530 = vrot.slane %v525, %v529
          %v531 = vlaneseq
          %v532 = vshrl.u32 %v531, 7
          %v533 = vsub.s32 1, %v532
          %v534 = vrot.slane %v525, %v533
          %v569 = vunpack.c.l.b16 %v493
          %v570 = vunpack.c.h.b16 %v493
          %v571 = vunpack.c.l.b16 %v494
          %v572 = vunpack.c.h.b16 %v494
          %v573 = vunpack.c.l.b16 %v495
          %v574 = vunpack.c.h.b16 %v495
          %v575 = vunpack.c.l.b16 %v496
          %v576 = vunpack.c.h.b16 %v496
          %v577 = vunpack.c.l.b16 %v497
          %v578 = vunpack.c.h.b16 %v497
          %v579 = vunpack.c.l.b16 %v498
          %v580 = vunpack.c.h.b16 %v498
          %v581 = vunpack.c.l.b16 %v499
          %v582 = vunpack.c.h.b16 %v499
          %v583 = vunpack.c.l.b16 %v500
          %v584 = vunpack.c.h.b16 %v500
          %v585 = vunpack.c.l.b16 %v501
          %v586 = vunpack.c.h.b16 %v501
          %v587 = vunpack.c.l.b16 %v502
          %v588 = vunpack.c.h.b16 %v502
          %v589 = vunpack.c.l.b16 %v503
          %v590 = vunpack.c.h.b16 %v503
          %v591 = vunpack.c.l.b16 %v504
          %v592 = vunpack.c.h.b16 %v504
          %v593 = vunpack.c.l.b16 %v505
          %v594 = vunpack.c.h.b16 %v505
          %v595 = vunpack.c.l.b16 %v506
          %v596 = vunpack.c.h.b16 %v506
          %v597 = vunpack.c.l.b16 %v507
          %v598 = vunpack.c.h.b16 %v507
          %v599 = vunpack.c.l.b16 %v508
          %v600 = vunpack.c.h.b16 %v508
          %v601 = vunpack.c.l.b16 %v509
          %v602 = vunpack.c.h.b16 %v509
          %v603 = vunpack.c.l.b16 %v510
          %v604 = vunpack.c.h.b16 %v510
          %v605 = vunpack.c.l.b16 %v511
          %v606 = vunpack.c.h.b16 %v511
          %v607 = vunpack.c.l.b16 %v512
          %v608 = vunpack.c.h.b16 %v512
          %v609 = vunpack.c.l.b16 %v513
          %v610 = vunpack.c.h.b16 %v513
          %v611 = vunpack.c.l.b16 %v514
          %v612 = vunpack.c.h.b16 %v514
          %v613 = vunpack.c.l.b16 %v515
          %v614 = vunpack.c.h.b16 %v515
          %v615 = vunpack.c.l.b16 %v516
          %v616 = vunpack.c.h.b16 %v516
          %v617 = vunpack.c.l.b16 %v517
          %v618 = vunpack.c.h.b16 %v517
          %v619 = vunpack.c.l.b16 %v518
          %v620 = vunpack.c.h.b16 %v518
          %v621 = vunpack.c.l.b16 %v519
          %v622 = vunpack.c.h.b16 %v519
          %v623 = vunpack.c.l.b16 %v520
          %v624 = vunpack.c.h.b16 %v520
          %v625 = vunpack.c.l.b16 %v521
          %v626 = vunpack.c.h.b16 %v521
          %v627 = vunpack.c.l.b16 %v522
          %v628 = vunpack.c.h.b16 %v522
          %v629 = vunpack.c.l.b16 %v523
          %v630 = vunpack.c.h.b16 %v523
          %v631 = vunpack.c.l.b16 %v524
          %v632 = vunpack.c.h.b16 %v524
          %v633 = vpack.c.b16 %v571, %v569
          %v634 = vpack.c.b16 %v572, %v570
          %v635 = vpack.c.b16 %v575, %v573
          %v636 = vpack.c.b16 %v576, %v574
          %v637 = vpack.c.b16 %v579, %v577
          %v638 = vpack.c.b16 %v580, %v578
          %v639 = vpack.c.b16 %v583, %v581
          %v640 = vpack.c.b16 %v584, %v582
          %v641 = vpack.c.b16 %v587, %v585
          %v642 = vpack.c.b16 %v588, %v586
          %v643 = vpack.c.b16 %v591, %v589
          %v644 = vpack.c.b16 %v592, %v590
          %v645 = vpack.c.b16 %v595, %v593
          %v646 = vpack.c.b16 %v596, %v594
          %v647 = vpack.c.b16 %v599, %v597
          %v648 = vpack.c.b16 %v600, %v598
          %v649 = vpack.c.b16 %v603, %v601
          %v650 = vpack.c.b16 %v604, %v602
          %v651 = vpack.c.b16 %v607, %v605
          %v652 = vpack.c.b16 %v608, %v606
          %v653 = vpack.c.b16 %v611, %v609
          %v654 = vpack.c.b16 %v612, %v610
          %v655 = vpack.c.b16 %v615, %v613
          %v656 = vpack.c.b16 %v616, %v614
          %v657 = vpack.c.b16 %v619, %v617
          %v658 = vpack.c.b16 %v620, %v618
          %v659 = vpack.c.b16 %v623, %v621
          %v660 = vpack.c.b16 %v624, %v622
          %v661 = vpack.c.b16 %v627, %v625
          %v662 = vpack.c.b16 %v628, %v626
          %v663 = vpack.c.b16 %v631, %v629
          %v664 = vpack.c.b16 %v632, %v630
          %697 = vmatprep.subr.bf16.mxu0 %v634
          %698 = vmatpush1.bf16.msra.mxu0 %v633
          %699 = vmatprep.subr.bf16.mxu0 %v636
          %700 = vmatpush1.bf16.msra.mxu0 %v635
          %701 = vmatprep.subr.bf16.mxu0 %v638
          %702 = vmatpush1.bf16.msra.mxu0 %v637
          %703 = vmatprep.subr.bf16.mxu0 %v640
          %704 = vmatpush1.bf16.msra.mxu0 %v639
          %705 = vmatprep.subr.bf16.mxu0 %v642
          %706 = vmatpush1.bf16.msra.mxu0 %v641
          %707 = vmatprep.subr.bf16.mxu0 %v644
          %708 = vmatpush1.bf16.msra.mxu0 %v643
          %709 = vmatprep.subr.bf16.mxu0 %v646
          %710 = vmatpush1.bf16.msra.mxu0 %v645
          %711 = vmatprep.subr.bf16.mxu0 %v648
          %712 = vmatpush1.bf16.msra.mxu0 %v647
          %713 = vmatprep.subr.bf16.mxu0 %v650
          %714 = vmatpush1.bf16.msra.mxu0 %v649
          %715 = vmatprep.subr.bf16.mxu0 %v652
          %716 = vmatpush1.bf16.msra.mxu0 %v651
          %717 = vmatprep.subr.bf16.mxu0 %v654
          %718 = vmatpush1.bf16.msra.mxu0 %v653
          %719 = vmatprep.subr.bf16.mxu0 %v656
          %720 = vmatpush1.bf16.msra.mxu0 %v655
          %721 = vmatprep.subr.bf16.mxu0 %v658
          %722 = vmatpush1.bf16.msra.mxu0 %v657
          %723 = vmatprep.subr.bf16.mxu0 %v660
          %724 = vmatpush1.bf16.msra.mxu0 %v659
          %725 = vmatprep.subr.bf16.mxu0 %v662
          %726 = vmatpush1.bf16.msra.mxu0 %v661
          %727 = vmatprep.subr.bf16.mxu0 %v664
          %728 = vmatpush1.bf16.msra.mxu0 %v663
          %729 = vmatprep.mubr.bf16.mxu0 %v393
          %730 = vmatmul.mubr.bf16.gmra.mrb[0].mxu0 %v392
          %v731 = vpop.f32.mrb[0].mxu0
          %v732 = vadd.f32 %v530, %v731
          %v733 = vpop.f32.mrb[0].mxu0
          %v734 = vadd.f32 %v534, %v733
          %v735 = vpop.f32.mrb[0].mxu0
          %v736 = vadd.f32 %v530, %v735
          %v737 = vpop.f32.mrb[0].mxu0
          %v738 = vadd.f32 %v534, %v737
          %739 = vmatprep.mubr.bf16.mxu0 %v395
          %740 = vmatmul.mubr.bf16.gmra.mrb[0].mxu0 %v394
          %v741 = vpop.f32.mrb[0].mxu0
          %v742 = vadd.f32 %v530, %v741
          %v743 = vpop.f32.mrb[0].mxu0
          %v744 = vadd.f32 %v534, %v743
          %v745 = vpop.f32.mrb[0].mxu0
          %v746 = vadd.f32 %v530, %v745
          %v747 = vpop.f32.mrb[0].mxu0
          %v748 = vadd.f32 %v534, %v747
          %749 = vmatprep.mubr.bf16.mxu0 %v397
          %750 = vmatmul.mubr.bf16.gmra.mrb[0].mxu0 %v396
          %v751 = vpop.f32.mrb[0].mxu0
          %v752 = vadd.f32 %v530, %v751
          %v753 = vpop.f32.mrb[0].mxu0
          %v754 = vadd.f32 %v534, %v753
          %v755 = vpop.f32.mrb[0].mxu0
          %v756 = vadd.f32 %v530, %v755
          %v757 = vpop.f32.mrb[0].mxu0
          %v758 = vadd.f32 %v534, %v757
          %759 = vmatprep.mubr.bf16.mxu0 %v399
          %760 = vmatmul.mubr.bf16.gmra.mrb[0].mxu0 %v398
          %v761 = vpop.f32.mrb[0].mxu0
          %v762 = vadd.f32 %v530, %v761
          %v763 = vpop.f32.mrb[0].mxu0
          %v764 = vadd.f32 %v534, %v763
          %v765 = vpop.f32.mrb[0].mxu0
          %v766 = vadd.f32 %v530, %v765
          %v767 = vpop.f32.mrb[0].mxu0
          %v768 = vadd.f32 %v534, %v767
          %769 = vmatprep.mubr.bf16.mxu0 %v401
          %770 = vmatmul.mubr.bf16.gmra.mrb[0].mxu0 %v400
          %v771 = vpop.f32.mrb[0].mxu0
          %v772 = vadd.f32 %v530, %v771
          %v773 = vpop.f32.mrb[0].mxu0
          %v774 = vadd.f32 %v534, %v773
          %v775 = vpop.f32.mrb[0].mxu0
          %v776 = vadd.f32 %v530, %v775
          %v777 = vpop.f32.mrb[0].mxu0
          %v778 = vadd.f32 %v534, %v777
          %779 = vmatprep.mubr.bf16.mxu0 %v403
          %780 = vmatmul.mubr.bf16.gmra.mrb[0].mxu0 %v402
          %v781 = vpop.f32.mrb[0].mxu0
          %v782 = vadd.f32 %v530, %v781
          %v783 = vpop.f32.mrb[0].mxu0
          %v784 = vadd.f32 %v534, %v783
          %v785 = vpop.f32.mrb[0].mxu0
          %v786 = vadd.f32 %v530, %v785
          %v787 = vpop.f32.mrb[0].mxu0
          %v788 = vadd.f32 %v534, %v787
          %789 = vmatprep.mubr.bf16.mxu0 %v405
          %790 = vmatmul.mubr.bf16.gmra.mrb[0].mxu0 %v404
          %v791 = vpop.f32.mrb[0].mxu0
          %v792 = vadd.f32 %v530, %v791
          %v793 = vpop.f32.mrb[0].mxu0
          %v794 = vadd.f32 %v534, %v793
          %v795 = vpop.f32.mrb[0].mxu0
          %v796 = vadd.f32 %v530, %v795
          %v797 = vpop.f32.mrb[0].mxu0
          %v798 = vadd.f32 %v534, %v797
          %799 = vmatprep.mubr.bf16.mxu0 %v407
          %800 = vmatmul.mubr.bf16.gmra.mrb[0].mxu0 %v406
          %v801 = vpop.f32.mrb[0].mxu0
          %v802 = vadd.f32 %v530, %v801
          %v803 = vpop.f32.mrb[0].mxu0
          %v804 = vadd.f32 %v534, %v803
          %v805 = vpop.f32.mrb[0].mxu0
          %v806 = vadd.f32 %v530, %v805
          %v807 = vpop.f32.mrb[0].mxu0
          %v808 = vadd.f32 %v534, %v807
          %809 = vmatprep.mubr.bf16.mxu0 %v409
          %810 = vmatmul.mubr.bf16.gmra.mrb[0].mxu0 %v408
          %v811 = vpop.f32.mrb[0].mxu0
          %v812 = vadd.f32 %v530, %v811
          %v813 = vpop.f32.mrb[0].mxu0
          %v814 = vadd.f32 %v534, %v813
          %v815 = vpop.f32.mrb[0].mxu0
          %v816 = vadd.f32 %v530, %v815
          %v817 = vpop.f32.mrb[0].mxu0
          %v818 = vadd.f32 %v534, %v817
          %819 = vmatprep.mubr.bf16.mxu0 %v411
          %820 = vmatmul.mubr.bf16.gmra.mrb[0].mxu0 %v410
          %v821 = vpop.f32.mrb[0].mxu0
          %v822 = vadd.f32 %v530, %v821
          %v823 = vpop.f32.mrb[0].mxu0
          %v824 = vadd.f32 %v534, %v823
          %v825 = vpop.f32.mrb[0].mxu0
          %v826 = vadd.f32 %v530, %v825
          %v827 = vpop.f32.mrb[0].mxu0
          %v828 = vadd.f32 %v534, %v827
          %829 = vmatprep.mubr.bf16.mxu0 %v413
          %830 = vmatmul.mubr.bf16.gmra.mrb[0].mxu0 %v412
          %v831 = vpop.f32.mrb[0].mxu0
          %v832 = vadd.f32 %v530, %v831
          %v833 = vpop.f32.mrb[0].mxu0
          %v834 = vadd.f32 %v534, %v833
          %v835 = vpop.f32.mrb[0].mxu0
          %v836 = vadd.f32 %v530, %v835
          %v837 = vpop.f32.mrb[0].mxu0
          %v838 = vadd.f32 %v534, %v837
          %839 = vmatprep.mubr.bf16.mxu0 %v415
          %840 = vmatmul.mubr.bf16.gmra.mrb[0].mxu0 %v414
          %v841 = vpop.f32.mrb[0].mxu0
          %v842 = vadd.f32 %v530, %v841
          %v843 = vpop.f32.mrb[0].mxu0
          %v844 = vadd.f32 %v534, %v843
          %v845 = vpop.f32.mrb[0].mxu0
          %v846 = vadd.f32 %v530, %v845
          %v847 = vpop.f32.mrb[0].mxu0
          %v848 = vadd.f32 %v534, %v847
          %849 = vmatprep.mubr.bf16.mxu0 %v417
          %850 = vmatmul.mubr.bf16.gmra.mrb[0].mxu0 %v416
          %v851 = vpop.f32.mrb[0].mxu0
          %v852 = vadd.f32 %v530, %v851
          %v853 = vpop.f32.mrb[0].mxu0
          %v854 = vadd.f32 %v534, %v853
          %v855 = vpop.f32.mrb[0].mxu0
          %v856 = vadd.f32 %v530, %v855
          %v857 = vpop.f32.mrb[0].mxu0
          %v858 = vadd.f32 %v534, %v857
          %859 = vmatprep.mubr.bf16.mxu0 %v419
          %860 = vmatmul.mubr.bf16.gmra.mrb[0].mxu0 %v418
          %v861 = vpop.f32.mrb[0].mxu0
          %v862 = vadd.f32 %v530, %v861
          %v863 = vpop.f32.mrb[0].mxu0
          %v864 = vadd.f32 %v534, %v863
          %v865 = vpop.f32.mrb[0].mxu0
          %v866 = vadd.f32 %v530, %v865
          %v867 = vpop.f32.mrb[0].mxu0
          %v868 = vadd.f32 %v534, %v867
          %869 = vmatprep.mubr.bf16.mxu0 %v421
          %870 = vmatmul.mubr.bf16.gmra.mrb[0].mxu0 %v420
          %v871 = vpop.f32.mrb[0].mxu0
          %v872 = vadd.f32 %v530, %v871
          %v873 = vpop.f32.mrb[0].mxu0
          %v874 = vadd.f32 %v534, %v873
          %v875 = vpop.f32.mrb[0].mxu0
          %v876 = vadd.f32 %v530, %v875
          %v877 = vpop.f32.mrb[0].mxu0
          %v878 = vadd.f32 %v534, %v877
          %879 = vmatprep.mubr.bf16.mxu0 %v423
          %880 = vmatmul.mubr.bf16.gmra.mrb[0].mxu0 %v422
          %v881 = vpop.f32.mrb[0].mxu0
          %v882 = vadd.f32 %v530, %v881
          %v883 = vpop.f32.mrb[0].mxu0
          %v884 = vadd.f32 %v534, %v883
          %v885 = vpop.f32.mrb[0].mxu0
          %v886 = vadd.f32 %v530, %v885
          %v887 = vpop.f32.mrb[0].mxu0
          %v888 = vadd.f32 %v534, %v887
          %889 = vdwg.mxu0
          %v890 = vmax.f32 %v732, 0.0
          %v891 = vmax.f32 %v734, 0.0
          %v892 = vmax.f32 %v736, 0.0
          %v893 = vmax.f32 %v738, 0.0
          %v894 = vmax.f32 %v742, 0.0
          %v895 = vmax.f32 %v744, 0.0
          %v896 = vmax.f32 %v746, 0.0
          %v897 = vmax.f32 %v748, 0.0
          %v898 = vmax.f32 %v752, 0.0
          %v899 = vmax.f32 %v754, 0.0
          %v900 = vmax.f32 %v756, 0.0
          %v901 = vmax.f32 %v758, 0.0
          %v902 = vmax.f32 %v762, 0.0
          %v903 = vmax.f32 %v764, 0.0
          %v904 = vmax.f32 %v766, 0.0
          %v905 = vmax.f32 %v768, 0.0
          %v906 = vmax.f32 %v772, 0.0
          %v907 = vmax.f32 %v774, 0.0
          %v908 = vmax.f32 %v776, 0.0
          %v909 = vmax.f32 %v778, 0.0
          %v910 = vmax.f32 %v782, 0.0
          %v911 = vmax.f32 %v784, 0.0
          %v912 = vmax.f32 %v786, 0.0
          %v913 = vmax.f32 %v788, 0.0
          %v914 = vmax.f32 %v792, 0.0
          %v915 = vmax.f32 %v794, 0.0
          %v916 = vmax.f32 %v796, 0.0
          %v917 = vmax.f32 %v798, 0.0
          %v918 = vmax.f32 %v802, 0.0
          %v919 = vmax.f32 %v804, 0.0
          %v920 = vmax.f32 %v806, 0.0
          %v921 = vmax.f32 %v808, 0.0
          %v922 = vmax.f32 %v812, 0.0
          %v923 = vmax.f32 %v814, 0.0
          %v924 = vmax.f32 %v816, 0.0
          %v925 = vmax.f32 %v818, 0.0
          %v926 = vmax.f32 %v822, 0.0
          %v927 = vmax.f32 %v824, 0.0
          %v928 = vmax.f32 %v826, 0.0
          %v929 = vmax.f32 %v828, 0.0
          %v930 = vmax.f32 %v832, 0.0
          %v931 = vmax.f32 %v834, 0.0
          %v932 = vmax.f32 %v836, 0.0
          %v933 = vmax.f32 %v838, 0.0
          %v934 = vmax.f32 %v842, 0.0
          %v935 = vmax.f32 %v844, 0.0
          %v936 = vmax.f32 %v846, 0.0
          %v937 = vmax.f32 %v848, 0.0
          %v938 = vmax.f32 %v852, 0.0
          %v939 = vmax.f32 %v854, 0.0
          %v940 = vmax.f32 %v856, 0.0
          %v941 = vmax.f32 %v858, 0.0
          %v942 = vmax.f32 %v862, 0.0
          %v943 = vmax.f32 %v864, 0.0
          %v944 = vmax.f32 %v866, 0.0
          %v945 = vmax.f32 %v868, 0.0
          %v946 = vmax.f32 %v872, 0.0
          %v947 = vmax.f32 %v874, 0.0
          %v948 = vmax.f32 %v876, 0.0
          %v949 = vmax.f32 %v878, 0.0
          %v950 = vmax.f32 %v882, 0.0
          %v951 = vmax.f32 %v884, 0.0
          %v952 = vmax.f32 %v886, 0.0
          %v953 = vmax.f32 %v888, 0.0
          %v954 = vpack.c.bf16 %v892, %v890
          %v955 = vpack.c.bf16 %v893, %v891
          %v956 = vpack.c.bf16 %v896, %v894
          %v957 = vpack.c.bf16 %v897, %v895
          %v958 = vpack.c.bf16 %v900, %v898
          %v959 = vpack.c.bf16 %v901, %v899
          %v960 = vpack.c.bf16 %v904, %v902
          %v961 = vpack.c.bf16 %v905, %v903
          %v962 = vpack.c.bf16 %v908, %v906
          %v963 = vpack.c.bf16 %v909, %v907
          %v964 = vpack.c.bf16 %v912, %v910
          %v965 = vpack.c.bf16 %v913, %v911
          %v966 = vpack.c.bf16 %v916, %v914
          %v967 = vpack.c.bf16 %v917, %v915
          %v968 = vpack.c.bf16 %v920, %v918
          %v969 = vpack.c.bf16 %v921, %v919
          %v970 = vpack.c.bf16 %v924, %v922
          %v971 = vpack.c.bf16 %v925, %v923
          %v972 = vpack.c.bf16 %v928, %v926
          %v973 = vpack.c.bf16 %v929, %v927
          %v974 = vpack.c.bf16 %v932, %v930
          %v975 = vpack.c.bf16 %v933, %v931
          %v976 = vpack.c.bf16 %v936, %v934
          %v977 = vpack.c.bf16 %v937, %v935
          %v978 = vpack.c.bf16 %v940, %v938
          %v979 = vpack.c.bf16 %v941, %v939
          %v980 = vpack.c.bf16 %v944, %v942
          %v981 = vpack.c.bf16 %v945, %v943
          %v982 = vpack.c.bf16 %v948, %v946
          %v983 = vpack.c.bf16 %v949, %v947
          %v984 = vpack.c.bf16 %v952, %v950
          %v985 = vpack.c.bf16 %v953, %v951
          %v986 = vld [vmem:[%s3] sm:$0xf]
          %v987 = vld [vmem:[%s3 + $0x4] sm:$0xf]
          %v988 = vld [vmem:[%s3 + $0x8] sm:$0xf]
          %v989 = vld [vmem:[%s3 + $0xc] sm:$0xf]
          %v990 = vld [vmem:[%s3 + $0x10] sm:$0xf]
          %v991 = vld [vmem:[%s3 + $0x14] sm:$0xf]
          %v992 = vld [vmem:[%s3 + $0x18] sm:$0xf]
          %v993 = vld [vmem:[%s3 + $0x1c] sm:$0xf]
          %v994 = vld [vmem:[%s3 + $0x20] sm:$0xf]
          %v995 = vld [vmem:[%s3 + $0x24] sm:$0xf]
          %v996 = vld [vmem:[%s3 + $0x28] sm:$0xf]
          %v997 = vld [vmem:[%s3 + $0x2c] sm:$0xf]
          %v998 = vld [vmem:[%s3 + $0x30] sm:$0xf]
          %v999 = vld [vmem:[%s3 + $0x34] sm:$0xf]
          %v1000 = vld [vmem:[%s3 + $0x38] sm:$0xf]
          %v1001 = vld [vmem:[%s3 + $0x3c] sm:$0xf]
          %v1002 = vld [vmem:[%s3 + $0x40] sm:$0xf]
          %v1003 = vld [vmem:[%s3 + $0x44] sm:$0xf]
          %v1004 = vld [vmem:[%s3 + $0x48] sm:$0xf]
          %v1005 = vld [vmem:[%s3 + $0x4c] sm:$0xf]
          %v1006 = vld [vmem:[%s3 + $0x50] sm:$0xf]
          %v1007 = vld [vmem:[%s3 + $0x54] sm:$0xf]
          %v1008 = vld [vmem:[%s3 + $0x58] sm:$0xf]
          %v1009 = vld [vmem:[%s3 + $0x5c] sm:$0xf]
          %v1010 = vld [vmem:[%s3 + $0x60] sm:$0xf]
          %v1011 = vld [vmem:[%s3 + $0x64] sm:$0xf]
          %v1012 = vld [vmem:[%s3 + $0x68] sm:$0xf]
          %v1013 = vld [vmem:[%s3 + $0x6c] sm:$0xf]
          %v1014 = vld [vmem:[%s3 + $0x70] sm:$0xf]
          %v1015 = vld [vmem:[%s3 + $0x74] sm:$0xf]
          %v1016 = vld [vmem:[%s3 + $0x78] sm:$0xf]
          %v1017 = vld [vmem:[%s3 + $0x7c] sm:$0xf]
          %v1050 = vunpack.c.l.b16 %v986
          %v1051 = vunpack.c.l.b16 %v987
          %v1052 = vunpack.c.l.b16 %v988
          %v1053 = vunpack.c.l.b16 %v989
          %v1054 = vunpack.c.l.b16 %v990
          %v1055 = vunpack.c.l.b16 %v991
          %v1056 = vunpack.c.l.b16 %v992
          %v1057 = vunpack.c.l.b16 %v993
          %v1058 = vunpack.c.l.b16 %v994
          %v1059 = vunpack.c.l.b16 %v995
          %v1060 = vunpack.c.l.b16 %v996
          %v1061 = vunpack.c.l.b16 %v997
          %v1062 = vunpack.c.l.b16 %v998
          %v1063 = vunpack.c.l.b16 %v999
          %v1064 = vunpack.c.l.b16 %v1000
          %v1065 = vunpack.c.l.b16 %v1001
          %v1066 = vunpack.c.l.b16 %v1002
          %v1067 = vunpack.c.l.b16 %v1003
          %v1068 = vunpack.c.l.b16 %v1004
          %v1069 = vunpack.c.l.b16 %v1005
          %v1070 = vunpack.c.l.b16 %v1006
          %v1071 = vunpack.c.l.b16 %v1007
          %v1072 = vunpack.c.l.b16 %v1008
          %v1073 = vunpack.c.l.b16 %v1009
          %v1074 = vunpack.c.l.b16 %v1010
          %v1075 = vunpack.c.l.b16 %v1011
          %v1076 = vunpack.c.l.b16 %v1012
          %v1077 = vunpack.c.l.b16 %v1013
          %v1078 = vunpack.c.l.b16 %v1014
          %v1079 = vunpack.c.l.b16 %v1015
          %v1080 = vunpack.c.l.b16 %v1016
          %v1081 = vunpack.c.l.b16 %v1017
          %v1082 = vpack.c.b16 %v1051, %v1050
          %v1083 = vpack.c.b16 %v1053, %v1052
          %v1084 = vpack.c.b16 %v1055, %v1054
          %v1085 = vpack.c.b16 %v1057, %v1056
          %v1086 = vpack.c.b16 %v1059, %v1058
          %v1087 = vpack.c.b16 %v1061, %v1060
          %v1088 = vpack.c.b16 %v1063, %v1062
          %v1089 = vpack.c.b16 %v1065, %v1064
          %v1090 = vpack.c.b16 %v1067, %v1066
          %v1091 = vpack.c.b16 %v1069, %v1068
          %v1092 = vpack.c.b16 %v1071, %v1070
          %v1093 = vpack.c.b16 %v1073, %v1072
          %v1094 = vpack.c.b16 %v1075, %v1074
          %v1095 = vpack.c.b16 %v1077, %v1076
          %v1096 = vpack.c.b16 %v1079, %v1078
          %v1097 = vpack.c.b16 %v1081, %v1080
          %1114 = vmatprep.subr.bf16.mxu0 0
          %1115 = vmatpush1.bf16.msra.mxu0 %v1082
          %1116 = vmatprep.subr.bf16.mxu0 0
          %1117 = vmatpush1.bf16.msra.mxu0 %v1083
          %1118 = vmatprep.subr.bf16.mxu0 0
          %1119 = vmatpush1.bf16.msra.mxu0 %v1084
          %1120 = vmatprep.subr.bf16.mxu0 0
          %1121 = vmatpush1.bf16.msra.mxu0 %v1085
          %1122 = vmatprep.subr.bf16.mxu0 0
          %1123 = vmatpush1.bf16.msra.mxu0 %v1086
          %1124 = vmatprep.subr.bf16.mxu0 0
          %1125 = vmatpush1.bf16.msra.mxu0 %v1087
          %1126 = vmatprep.subr.bf16.mxu0 0
          %1127 = vmatpush1.bf16.msra.mxu0 %v1088
          %1128 = vmatprep.subr.bf16.mxu0 0
          %1129 = vmatpush1.bf16.msra.mxu0 %v1089
          %1130 = vmatprep.subr.bf16.mxu0 0
          %1131 = vmatpush1.bf16.msra.mxu0 %v1090
          %1132 = vmatprep.subr.bf16.mxu0 0
          %1133 = vmatpush1.bf16.msra.mxu0 %v1091
          %1134 = vmatprep.subr.bf16.mxu0 0
          %1135 = vmatpush1.bf16.msra.mxu0 %v1092
          %1136 = vmatprep.subr.bf16.mxu0 0
          %1137 = vmatpush1.bf16.msra.mxu0 %v1093
          %1138 = vmatprep.subr.bf16.mxu0 0
          %1139 = vmatpush1.bf16.msra.mxu0 %v1094
          %1140 = vmatprep.subr.bf16.mxu0 0
          %1141 = vmatpush1.bf16.msra.mxu0 %v1095
          %1142 = vmatprep.subr.bf16.mxu0 0
          %1143 = vmatpush1.bf16.msra.mxu0 %v1096
          %1144 = vmatprep.subr.bf16.mxu0 0
          %1145 = vmatpush1.bf16.msra.mxu0 %v1097
          %1146 = vmatprep.mubr.bf16.mxu0 %v955
          %1147 = vmatmul.mubr.bf16.gmra.mrb[0].mxu0 %v954
          %v1148 = vpop.f32.mrb[0].mxu0
          %v1149 = vadd.f32 0.0, %v1148
          %v1150 = vpop.f32.mrb[0].mxu0
          %v1151 = vpop.f32.mrb[0].mxu0
          %v1152 = vadd.f32 0.0, %v1151
          %v1153 = vpop.f32.mrb[0].mxu0
          %1154 = vmatprep.mubr.bf16.mxu0 %v957
          %1155 = vmatmul.mubr.bf16.gmra.mrb[0].mxu0 %v956
          %v1156 = vpop.f32.mrb[0].mxu0
          %v1157 = vadd.f32 0.0, %v1156
          %v1158 = vpop.f32.mrb[0].mxu0
          %v1159 = vpop.f32.mrb[0].mxu0
          %v1160 = vadd.f32 0.0, %v1159
          %v1161 = vpop.f32.mrb[0].mxu0
          %1162 = vmatprep.mubr.bf16.mxu0 %v959
          %1163 = vmatmul.mubr.bf16.gmra.mrb[0].mxu0 %v958
          %v1164 = vpop.f32.mrb[0].mxu0
          %v1165 = vadd.f32 0.0, %v1164
          %v1166 = vpop.f32.mrb[0].mxu0
          %v1167 = vpop.f32.mrb[0].mxu0
          %v1168 = vadd.f32 0.0, %v1167
          %v1169 = vpop.f32.mrb[0].mxu0
          %1170 = vmatprep.mubr.bf16.mxu0 %v961
          %1171 = vmatmul.mubr.bf16.gmra.mrb[0].mxu0 %v960
          %v1172 = vpop.f32.mrb[0].mxu0
          %v1173 = vadd.f32 0.0, %v1172
          %v1174 = vpop.f32.mrb[0].mxu0
          %v1175 = vpop.f32.mrb[0].mxu0
          %v1176 = vadd.f32 0.0, %v1175
          %v1177 = vpop.f32.mrb[0].mxu0
          %1178 = vmatprep.mubr.bf16.mxu0 %v963
          %1179 = vmatmul.mubr.bf16.gmra.mrb[0].mxu0 %v962
          %v1180 = vpop.f32.mrb[0].mxu0
          %v1181 = vadd.f32 0.0, %v1180
          %v1182 = vpop.f32.mrb[0].mxu0
          %v1183 = vpop.f32.mrb[0].mxu0
          %v1184 = vadd.f32 0.0, %v1183
          %v1185 = vpop.f32.mrb[0].mxu0
          %1186 = vmatprep.mubr.bf16.mxu0 %v965
          %1187 = vmatmul.mubr.bf16.gmra.mrb[0].mxu0 %v964
          %v1188 = vpop.f32.mrb[0].mxu0
          %v1189 = vadd.f32 0.0, %v1188
          %v1190 = vpop.f32.mrb[0].mxu0
          %v1191 = vpop.f32.mrb[0].mxu0
          %v1192 = vadd.f32 0.0, %v1191
          %v1193 = vpop.f32.mrb[0].mxu0
          %1194 = vmatprep.mubr.bf16.mxu0 %v967
          %1195 = vmatmul.mubr.bf16.gmra.mrb[0].mxu0 %v966
          %v1196 = vpop.f32.mrb[0].mxu0
          %v1197 = vadd.f32 0.0, %v1196
          %v1198 = vpop.f32.mrb[0].mxu0
          %v1199 = vpop.f32.mrb[0].mxu0
          %v1200 = vadd.f32 0.0, %v1199
          %v1201 = vpop.f32.mrb[0].mxu0
          %1202 = vmatprep.mubr.bf16.mxu0 %v969
          %1203 = vmatmul.mubr.bf16.gmra.mrb[0].mxu0 %v968
          %v1204 = vpop.f32.mrb[0].mxu0
          %v1205 = vadd.f32 0.0, %v1204
          %v1206 = vpop.f32.mrb[0].mxu0
          %v1207 = vpop.f32.mrb[0].mxu0
          %v1208 = vadd.f32 0.0, %v1207
          %v1209 = vpop.f32.mrb[0].mxu0
          %1210 = vmatprep.mubr.bf16.mxu0 %v971
          %1211 = vmatmul.mubr.bf16.gmra.mrb[0].mxu0 %v970
          %v1212 = vpop.f32.mrb[0].mxu0
          %v1213 = vadd.f32 0.0, %v1212
          %v1214 = vpop.f32.mrb[0].mxu0
          %v1215 = vpop.f32.mrb[0].mxu0
          %v1216 = vadd.f32 0.0, %v1215
          %v1217 = vpop.f32.mrb[0].mxu0
          %1218 = vmatprep.mubr.bf16.mxu0 %v973
          %1219 = vmatmul.mubr.bf16.gmra.mrb[0].mxu0 %v972
          %v1220 = vpop.f32.mrb[0].mxu0
          %v1221 = vadd.f32 0.0, %v1220
          %v1222 = vpop.f32.mrb[0].mxu0
          %v1223 = vpop.f32.mrb[0].mxu0
          %v1224 = vadd.f32 0.0, %v1223
          %v1225 = vpop.f32.mrb[0].mxu0
          %1226 = vmatprep.mubr.bf16.mxu0 %v975
          %1227 = vmatmul.mubr.bf16.gmra.mrb[0].mxu0 %v974
          %v1228 = vpop.f32.mrb[0].mxu0
          %v1229 = vadd.f32 0.0, %v1228
          %v1230 = vpop.f32.mrb[0].mxu0
          %v1231 = vpop.f32.mrb[0].mxu0
          %v1232 = vadd.f32 0.0, %v1231
          %v1233 = vpop.f32.mrb[0].mxu0
          %1234 = vmatprep.mubr.bf16.mxu0 %v977
          %1235 = vmatmul.mubr.bf16.gmra.mrb[0].mxu0 %v976
          %v1236 = vpop.f32.mrb[0].mxu0
          %v1237 = vadd.f32 0.0, %v1236
          %v1238 = vpop.f32.mrb[0].mxu0
          %v1239 = vpop.f32.mrb[0].mxu0
          %v1240 = vadd.f32 0.0, %v1239
          %v1241 = vpop.f32.mrb[0].mxu0
          %1242 = vmatprep.mubr.bf16.mxu0 %v979
          %1243 = vmatmul.mubr.bf16.gmra.mrb[0].mxu0 %v978
          %v1244 = vpop.f32.mrb[0].mxu0
          %v1245 = vadd.f32 0.0, %v1244
          %v1246 = vpop.f32.mrb[0].mxu0
          %v1247 = vpop.f32.mrb[0].mxu0
          %v1248 = vadd.f32 0.0, %v1247
          %v1249 = vpop.f32.mrb[0].mxu0
          %1250 = vmatprep.mubr.bf16.mxu0 %v981
          %1251 = vmatmul.mubr.bf16.gmra.mrb[0].mxu0 %v980
          %v1252 = vpop.f32.mrb[0].mxu0
          %v1253 = vadd.f32 0.0, %v1252
          %v1254 = vpop.f32.mrb[0].mxu0
          %v1255 = vpop.f32.mrb[0].mxu0
          %v1256 = vadd.f32 0.0, %v1255
          %v1257 = vpop.f32.mrb[0].mxu0
          %1258 = vmatprep.mubr.bf16.mxu0 %v983
          %1259 = vmatmul.mubr.bf16.gmra.mrb[0].mxu0 %v982
          %v1260 = vpop.f32.mrb[0].mxu0
          %v1261 = vadd.f32 0.0, %v1260
          %v1262 = vpop.f32.mrb[0].mxu0
          %v1263 = vpop.f32.mrb[0].mxu0
          %v1264 = vadd.f32 0.0, %v1263
          %v1265 = vpop.f32.mrb[0].mxu0
          %1266 = vmatprep.mubr.bf16.mxu0 %v985
          %1267 = vmatmul.mubr.bf16.gmra.mrb[0].mxu0 %v984
          %v1268 = vpop.f32.mrb[0].mxu0
          %v1269 = vadd.f32 0.0, %v1268
          %v1270 = vpop.f32.mrb[0].mxu0
          %v1271 = vpop.f32.mrb[0].mxu0
          %v1272 = vadd.f32 0.0, %v1271
          %v1273 = vpop.f32.mrb[0].mxu0
          %1274 = vdwg.mxu0
          %v1275 = vpack.c.bf16 %v1152, %v1149
          %v1276 = vpack.c.bf16 %v1160, %v1157
          %v1277 = vpack.c.bf16 %v1168, %v1165
          %v1278 = vpack.c.bf16 %v1176, %v1173
          %v1279 = vpack.c.bf16 %v1184, %v1181
          %v1280 = vpack.c.bf16 %v1192, %v1189
          %v1281 = vpack.c.bf16 %v1200, %v1197
          %v1282 = vpack.c.bf16 %v1208, %v1205
          %v1283 = vpack.c.bf16 %v1216, %v1213
          %v1284 = vpack.c.bf16 %v1224, %v1221
          %v1285 = vpack.c.bf16 %v1232, %v1229
          %v1286 = vpack.c.bf16 %v1240, %v1237
          %v1287 = vpack.c.bf16 %v1248, %v1245
          %v1288 = vpack.c.bf16 %v1256, %v1253
          %v1289 = vpack.c.bf16 %v1264, %v1261
          %v1290 = vpack.c.bf16 %v1272, %v1269
          %s1291 = smul.addr %s456, 8
          %s1292 = scalar_lea.vmem [#allocation3], %s1291
          %1293 = vst [vmem:[%s1292] sm:$0xff] %v1275
          %1294 = vst [vmem:[%s1292 + $0x8] sm:$0xff] %v1276
          %1295 = vst [vmem:[%s1292 + $0x10] sm:$0xff] %v1277
          %1296 = vst [vmem:[%s1292 + $0x18] sm:$0xff] %v1278
          %1297 = vst [vmem:[%s1292 + $0x20] sm:$0xff] %v1279
          %1298 = vst [vmem:[%s1292 + $0x28] sm:$0xff] %v1280
          %1299 = vst [vmem:[%s1292 + $0x30] sm:$0xff] %v1281
          %1300 = vst [vmem:[%s1292 + $0x38] sm:$0xff] %v1282
          %1301 = vst [vmem:[%s1292 + $0x40] sm:$0xff] %v1283
          %1302 = vst [vmem:[%s1292 + $0x48] sm:$0xff] %v1284
          %1303 = vst [vmem:[%s1292 + $0x50] sm:$0xff] %v1285
          %1304 = vst [vmem:[%s1292 + $0x58] sm:$0xff] %v1286
          %1305 = vst [vmem:[%s1292 + $0x60] sm:$0xff] %v1287
          %1306 = vst [vmem:[%s1292 + $0x68] sm:$0xff] %v1288
          %1307 = vst [vmem:[%s1292 + $0x70] sm:$0xff] %v1289
          %1308 = vst [vmem:[%s1292 + $0x78] sm:$0xff] %v1290
        $region44: #{gcn_forward_padded.3} parent=39 // pred_fallthru
          _
        %p1309 = scmp.eq.s32.totalorder %s23, 1
        // Predicated region
        $region45: #{gcn_forward_padded.3} parent=39 // pred_check
          %p1310 = pneg %p1309
        $region46: #{gcn_forward_padded.3} parent=39 // pred_check_branch
          %1312 = sbr.rel (%p1310) target = $region48
        $region47: #{gcn_forward_padded.3} parent=39 // pred_region
          %s1313 = sshra.s32 %s259, 4
          %s1314 = sand.u32 %s259, 15
          %s1315 = smul.u32 %s1313, 2
          %s1316 = smul.addr %s1315, 8
          %s1317 = scalar_lea.vmem [#allocation2], %s1316
          %v1318 = vld [vmem:[%s1317] sm:$0xff]
          %v1319 = vld [vmem:[%s1317 + $0x8] sm:$0xff]
          %v1320 = vld [vmem:[%s1317 + $0x10] sm:$0xff]
          %v1321 = vld [vmem:[%s1317 + $0x18] sm:$0xff]
          %v1322 = vld [vmem:[%s1317 + $0x20] sm:$0xff]
          %v1323 = vld [vmem:[%s1317 + $0x28] sm:$0xff]
          %v1324 = vld [vmem:[%s1317 + $0x30] sm:$0xff]
          %v1325 = vld [vmem:[%s1317 + $0x38] sm:$0xff]
          %v1326 = vld [vmem:[%s1317 + $0x40] sm:$0xff]
          %v1327 = vld [vmem:[%s1317 + $0x48] sm:$0xff]
          %v1328 = vld [vmem:[%s1317 + $0x50] sm:$0xff]
          %v1329 = vld [vmem:[%s1317 + $0x58] sm:$0xff]
          %v1330 = vld [vmem:[%s1317 + $0x60] sm:$0xff]
          %v1331 = vld [vmem:[%s1317 + $0x68] sm:$0xff]
          %v1332 = vld [vmem:[%s1317 + $0x70] sm:$0xff]
          %v1333 = vld [vmem:[%s1317 + $0x78] sm:$0xff]
          %v1334 = vld [vmem:[%s1317 + $0x80] sm:$0xff]
          %v1335 = vld [vmem:[%s1317 + $0x88] sm:$0xff]
          %v1336 = vld [vmem:[%s1317 + $0x90] sm:$0xff]
          %v1337 = vld [vmem:[%s1317 + $0x98] sm:$0xff]
          %v1338 = vld [vmem:[%s1317 + $0xa0] sm:$0xff]
          %v1339 = vld [vmem:[%s1317 + $0xa8] sm:$0xff]
          %v1340 = vld [vmem:[%s1317 + $0xb0] sm:$0xff]
          %v1341 = vld [vmem:[%s1317 + $0xb8] sm:$0xff]
          %v1342 = vld [vmem:[%s1317 + $0xc0] sm:$0xff]
          %v1343 = vld [vmem:[%s1317 + $0xc8] sm:$0xff]
          %v1344 = vld [vmem:[%s1317 + $0xd0] sm:$0xff]
          %v1345 = vld [vmem:[%s1317 + $0xd8] sm:$0xff]
          %v1346 = vld [vmem:[%s1317 + $0xe0] sm:$0xff]
          %v1347 = vld [vmem:[%s1317 + $0xe8] sm:$0xff]
          %v1348 = vld [vmem:[%s1317 + $0xf0] sm:$0xff]
          %v1349 = vld [vmem:[%s1317 + $0xf8] sm:$0xff]
          %v1350 = vld [vmem:[#allocation3] sm:$0xff]
          %v1351 = vld [vmem:[#allocation3 + $0x8] sm:$0xff]
          %v1352 = vld [vmem:[#allocation3 + $0x10] sm:$0xff]
          %v1353 = vld [vmem:[#allocation3 + $0x18] sm:$0xff]
          %v1354 = vld [vmem:[#allocation3 + $0x20] sm:$0xff]
          %v1355 = vld [vmem:[#allocation3 + $0x28] sm:$0xff]
          %v1356 = vld [vmem:[#allocation3 + $0x30] sm:$0xff]
          %v1357 = vld [vmem:[#allocation3 + $0x38] sm:$0xff]
          %v1358 = vld [vmem:[#allocation3 + $0x40] sm:$0xff]
          %v1359 = vld [vmem:[#allocation3 + $0x48] sm:$0xff]
          %v1360 = vld [vmem:[#allocation3 + $0x50] sm:$0xff]
          %v1361 = vld [vmem:[#allocation3 + $0x58] sm:$0xff]
          %v1362 = vld [vmem:[#allocation3 + $0x60] sm:$0xff]
          %v1363 = vld [vmem:[#allocation3 + $0x68] sm:$0xff]
          %v1364 = vld [vmem:[#allocation3 + $0x70] sm:$0xff]
          %v1365 = vld [vmem:[#allocation3 + $0x78] sm:$0xff]
          %v1366 = vld [vmem:[%s4] sm:$0x1]
          %v1368 = vlaneseq
          %v1369 = vshrl.u32 %v1368, 7
          %v1370 = vsub.s32 0, %v1369
          %v1371 = vrot.slane %v1366, %v1370
          %1373 = vmatprep.subr.bf16.mxu0 0
          %1374 = vmatpush1.bf16.msra.mxu0 %v1350
          %1375 = vmatprep.subr.bf16.mxu0 0
          %1376 = vmatpush1.bf16.msra.mxu0 %v1351
          %1377 = vmatprep.subr.bf16.mxu0 0
          %1378 = vmatpush1.bf16.msra.mxu0 %v1352
          %1379 = vmatprep.subr.bf16.mxu0 0
          %1380 = vmatpush1.bf16.msra.mxu0 %v1353
          %1381 = vmatprep.subr.bf16.mxu0 0
          %1382 = vmatpush1.bf16.msra.mxu0 %v1354
          %1383 = vmatprep.subr.bf16.mxu0 0
          %1384 = vmatpush1.bf16.msra.mxu0 %v1355
          %1385 = vmatprep.subr.bf16.mxu0 0
          %1386 = vmatpush1.bf16.msra.mxu0 %v1356
          %1387 = vmatprep.subr.bf16.mxu0 0
          %1388 = vmatpush1.bf16.msra.mxu0 %v1357
          %1389 = vmatprep.subr.bf16.mxu0 0
          %1390 = vmatpush1.bf16.msra.mxu0 %v1358
          %1391 = vmatprep.subr.bf16.mxu0 0
          %1392 = vmatpush1.bf16.msra.mxu0 %v1359
          %1393 = vmatprep.subr.bf16.mxu0 0
          %1394 = vmatpush1.bf16.msra.mxu0 %v1360
          %1395 = vmatprep.subr.bf16.mxu0 0
          %1396 = vmatpush1.bf16.msra.mxu0 %v1361
          %1397 = vmatprep.subr.bf16.mxu0 0
          %1398 = vmatpush1.bf16.msra.mxu0 %v1362
          %1399 = vmatprep.subr.bf16.mxu0 0
          %1400 = vmatpush1.bf16.msra.mxu0 %v1363
          %1401 = vmatprep.subr.bf16.mxu0 0
          %1402 = vmatpush1.bf16.msra.mxu0 %v1364
          %1403 = vmatprep.subr.bf16.mxu0 0
          %1404 = vmatpush1.bf16.msra.mxu0 %v1365
          %1405 = vmatprep.mubr.bf16.mxu0 %v1319
          %1406 = vmatmul.mubr.bf16.gmra.mrb[0].mxu0 %v1318
          %v1407 = vpop.f32.mrb[0].mxu0
          %v1408 = vadd.f32 %v1371, %v1407
          %v1409 = vpop.f32.mrb[0].mxu0
          %v1410 = vpop.f32.mrb[0].mxu0
          %v1411 = vadd.f32 %v1371, %v1410
          %v1412 = vpop.f32.mrb[0].mxu0
          %1413 = vmatprep.mubr.bf16.mxu0 %v1321
          %1414 = vmatmul.mubr.bf16.gmra.mrb[0].mxu0 %v1320
          %v1415 = vpop.f32.mrb[0].mxu0
          %v1416 = vadd.f32 %v1371, %v1415
          %v1417 = vpop.f32.mrb[0].mxu0
          %v1418 = vpop.f32.mrb[0].mxu0
          %v1419 = vadd.f32 %v1371, %v1418
          %v1420 = vpop.f32.mrb[0].mxu0
          %1421 = vmatprep.mubr.bf16.mxu0 %v1323
          %1422 = vmatmul.mubr.bf16.gmra.mrb[0].mxu0 %v1322
          %v1423 = vpop.f32.mrb[0].mxu0
          %v1424 = vadd.f32 %v1371, %v1423
          %v1425 = vpop.f32.mrb[0].mxu0
          %v1426 = vpop.f32.mrb[0].mxu0
          %v1427 = vadd.f32 %v1371, %v1426
          %v1428 = vpop.f32.mrb[0].mxu0
          %1429 = vmatprep.mubr.bf16.mxu0 %v1325
          %1430 = vmatmul.mubr.bf16.gmra.mrb[0].mxu0 %v1324
          %v1431 = vpop.f32.mrb[0].mxu0
          %v1432 = vadd.f32 %v1371, %v1431
          %v1433 = vpop.f32.mrb[0].mxu0
          %v1434 = vpop.f32.mrb[0].mxu0
          %v1435 = vadd.f32 %v1371, %v1434
          %v1436 = vpop.f32.mrb[0].mxu0
          %1437 = vmatprep.mubr.bf16.mxu0 %v1327
          %1438 = vmatmul.mubr.bf16.gmra.mrb[0].mxu0 %v1326
          %v1439 = vpop.f32.mrb[0].mxu0
          %v1440 = vadd.f32 %v1371, %v1439
          %v1441 = vpop.f32.mrb[0].mxu0
          %v1442 = vpop.f32.mrb[0].mxu0
          %v1443 = vadd.f32 %v1371, %v1442
          %v1444 = vpop.f32.mrb[0].mxu0
          %1445 = vmatprep.mubr.bf16.mxu0 %v1329
          %1446 = vmatmul.mubr.bf16.gmra.mrb[0].mxu0 %v1328
          %v1447 = vpop.f32.mrb[0].mxu0
          %v1448 = vadd.f32 %v1371, %v1447
          %v1449 = vpop.f32.mrb[0].mxu0
          %v1450 = vpop.f32.mrb[0].mxu0
          %v1451 = vadd.f32 %v1371, %v1450
          %v1452 = vpop.f32.mrb[0].mxu0
          %1453 = vmatprep.mubr.bf16.mxu0 %v1331
          %1454 = vmatmul.mubr.bf16.gmra.mrb[0].mxu0 %v1330
          %v1455 = vpop.f32.mrb[0].mxu0
          %v1456 = vadd.f32 %v1371, %v1455
          %v1457 = vpop.f32.mrb[0].mxu0
          %v1458 = vpop.f32.mrb[0].mxu0
          %v1459 = vadd.f32 %v1371, %v1458
          %v1460 = vpop.f32.mrb[0].mxu0
          %1461 = vmatprep.mubr.bf16.mxu0 %v1333
          %1462 = vmatmul.mubr.bf16.gmra.mrb[0].mxu0 %v1332
          %v1463 = vpop.f32.mrb[0].mxu0
          %v1464 = vadd.f32 %v1371, %v1463
          %v1465 = vpop.f32.mrb[0].mxu0
          %v1466 = vpop.f32.mrb[0].mxu0
          %v1467 = vadd.f32 %v1371, %v1466
          %v1468 = vpop.f32.mrb[0].mxu0
          %1469 = vmatprep.mubr.bf16.mxu0 %v1335
          %1470 = vmatmul.mubr.bf16.gmra.mrb[0].mxu0 %v1334
          %v1471 = vpop.f32.mrb[0].mxu0
          %v1472 = vadd.f32 %v1371, %v1471
          %v1473 = vpop.f32.mrb[0].mxu0
          %v1474 = vpop.f32.mrb[0].mxu0
          %v1475 = vadd.f32 %v1371, %v1474
          %v1476 = vpop.f32.mrb[0].mxu0
          %1477 = vmatprep.mubr.bf16.mxu0 %v1337
          %1478 = vmatmul.mubr.bf16.gmra.mrb[0].mxu0 %v1336
          %v1479 = vpop.f32.mrb[0].mxu0
          %v1480 = vadd.f32 %v1371, %v1479
          %v1481 = vpop.f32.mrb[0].mxu0
          %v1482 = vpop.f32.mrb[0].mxu0
          %v1483 = vadd.f32 %v1371, %v1482
          %v1484 = vpop.f32.mrb[0].mxu0
          %1485 = vmatprep.mubr.bf16.mxu0 %v1339
          %1486 = vmatmul.mubr.bf16.gmra.mrb[0].mxu0 %v1338
          %v1487 = vpop.f32.mrb[0].mxu0
          %v1488 = vadd.f32 %v1371, %v1487
          %v1489 = vpop.f32.mrb[0].mxu0
          %v1490 = vpop.f32.mrb[0].mxu0
          %v1491 = vadd.f32 %v1371, %v1490
          %v1492 = vpop.f32.mrb[0].mxu0
          %1493 = vmatprep.mubr.bf16.mxu0 %v1341
          %1494 = vmatmul.mubr.bf16.gmra.mrb[0].mxu0 %v1340
          %v1495 = vpop.f32.mrb[0].mxu0
          %v1496 = vadd.f32 %v1371, %v1495
          %v1497 = vpop.f32.mrb[0].mxu0
          %v1498 = vpop.f32.mrb[0].mxu0
          %v1499 = vadd.f32 %v1371, %v1498
          %v1500 = vpop.f32.mrb[0].mxu0
          %1501 = vmatprep.mubr.bf16.mxu0 %v1343
          %1502 = vmatmul.mubr.bf16.gmra.mrb[0].mxu0 %v1342
          %v1503 = vpop.f32.mrb[0].mxu0
          %v1504 = vadd.f32 %v1371, %v1503
          %v1505 = vpop.f32.mrb[0].mxu0
          %v1506 = vpop.f32.mrb[0].mxu0
          %v1507 = vadd.f32 %v1371, %v1506
          %v1508 = vpop.f32.mrb[0].mxu0
          %1509 = vmatprep.mubr.bf16.mxu0 %v1345
          %1510 = vmatmul.mubr.bf16.gmra.mrb[0].mxu0 %v1344
          %v1511 = vpop.f32.mrb[0].mxu0
          %v1512 = vadd.f32 %v1371, %v1511
          %v1513 = vpop.f32.mrb[0].mxu0
          %v1514 = vpop.f32.mrb[0].mxu0
          %v1515 = vadd.f32 %v1371, %v1514
          %v1516 = vpop.f32.mrb[0].mxu0
          %1517 = vmatprep.mubr.bf16.mxu0 %v1347
          %1518 = vmatmul.mubr.bf16.gmra.mrb[0].mxu0 %v1346
          %v1519 = vpop.f32.mrb[0].mxu0
          %v1520 = vadd.f32 %v1371, %v1519
          %v1521 = vpop.f32.mrb[0].mxu0
          %v1522 = vpop.f32.mrb[0].mxu0
          %v1523 = vadd.f32 %v1371, %v1522
          %v1524 = vpop.f32.mrb[0].mxu0
          %1525 = vmatprep.mubr.bf16.mxu0 %v1349
          %1526 = vmatmul.mubr.bf16.gmra.mrb[0].mxu0 %v1348
          %v1527 = vpop.f32.mrb[0].mxu0
          %v1528 = vadd.f32 %v1371, %v1527
          %v1529 = vpop.f32.mrb[0].mxu0
          %v1530 = vpop.f32.mrb[0].mxu0
          %v1531 = vadd.f32 %v1371, %v1530
          %v1532 = vpop.f32.mrb[0].mxu0
          %1533 = vdwg.mxu0
          %1534 = vst [vmem:[%s244] sm:$0xff] %v1408
          %1535 = vst [vmem:[%s244 + $0x8] sm:$0xff] %v1411
          %1536 = vst [vmem:[%s244 + $0x10] sm:$0xff] %v1416
          %1537 = vst [vmem:[%s244 + $0x18] sm:$0xff] %v1419
          %1538 = vst [vmem:[%s244 + $0x20] sm:$0xff] %v1424
          %1539 = vst [vmem:[%s244 + $0x28] sm:$0xff] %v1427
          %1540 = vst [vmem:[%s244 + $0x30] sm:$0xff] %v1432
          %1541 = vst [vmem:[%s244 + $0x38] sm:$0xff] %v1435
          %1542 = vst [vmem:[%s244 + $0x40] sm:$0xff] %v1440
          %1543 = vst [vmem:[%s244 + $0x48] sm:$0xff] %v1443
          %1544 = vst [vmem:[%s244 + $0x50] sm:$0xff] %v1448
          %1545 = vst [vmem:[%s244 + $0x58] sm:$0xff] %v1451
          %1546 = vst [vmem:[%s244 + $0x60] sm:$0xff] %v1456
          %1547 = vst [vmem:[%s244 + $0x68] sm:$0xff] %v1459
          %1548 = vst [vmem:[%s244 + $0x70] sm:$0xff] %v1464
          %1549 = vst [vmem:[%s244 + $0x78] sm:$0xff] %v1467
          %1550 = vst [vmem:[%s244 + $0x80] sm:$0xff] %v1472
          %1551 = vst [vmem:[%s244 + $0x88] sm:$0xff] %v1475
          %1552 = vst [vmem:[%s244 + $0x90] sm:$0xff] %v1480
          %1553 = vst [vmem:[%s244 + $0x98] sm:$0xff] %v1483
          %1554 = vst [vmem:[%s244 + $0xa0] sm:$0xff] %v1488
          %1555 = vst [vmem:[%s244 + $0xa8] sm:$0xff] %v1491
          %1556 = vst [vmem:[%s244 + $0xb0] sm:$0xff] %v1496
          %1557 = vst [vmem:[%s244 + $0xb8] sm:$0xff] %v1499
          %1558 = vst [vmem:[%s244 + $0xc0] sm:$0xff] %v1504
          %1559 = vst [vmem:[%s244 + $0xc8] sm:$0xff] %v1507
          %1560 = vst [vmem:[%s244 + $0xd0] sm:$0xff] %v1512
          %1561 = vst [vmem:[%s244 + $0xd8] sm:$0xff] %v1515
          %1562 = vst [vmem:[%s244 + $0xe0] sm:$0xff] %v1520
          %1563 = vst [vmem:[%s244 + $0xe8] sm:$0xff] %v1523
          %1564 = vst [vmem:[%s244 + $0xf0] sm:$0xff] %v1528
          %1565 = vst [vmem:[%s244 + $0xf8] sm:$0xff] %v1531
        $region48: #{gcn_forward_padded.3} parent=39 // pred_fallthru
          _
        %s1566 = sand.u32 %s155, 1
        %s1567 = scalar_lea.sflag [#allocation5], %s1566
        %s1568 = sand.u32 %s155, 1
        %s1569 = smul.addr %s1568, 256
        %s1570 = scalar_lea.vmem [#allocation4], %s1569
        // Predicated region
        $region49: #{gcn_forward_padded.3} parent=39 // pred_check
          %p1571 = pneg %p165
        $region50: #{gcn_forward_padded.3} parent=39 // pred_check_branch
          %1573 = sbr.rel (%p1571) target = $region52
        $region51: #{gcn_forward_padded.3} parent=39 // pred_region
          %s1574 = smul.u32 %s24, %s23
          %s1575 = smul.u32 32, %s1574
          %s1577 = ssub.s32 4096, 4096
          %1578 = vsyncadd %s1567, %s1577
          %s1579 = smul.addr %s1575, 128
          %s1580 = scalar_lea.hbm %s5, %s1579
          %s1581 = sshll.u32 %s1570, 4
          %s1582 = int_to_ptr.vmem [resolvable:$true] %s1581
          %1587 = dma.vmem_to_hbm [thread:$0]  %s1582, 4096, %s1580, %s1567, 128, 128, 8
        $region52: #{gcn_forward_padded.3} parent=39 // pred_fallthru
          _
      $region40: #{gcn_forward_padded.3} parent=5 // pred_fallthru
        _
      %p1588 = scmp.le.s32.totalorder 2, %s14
      // Predicated region
      $region53: #{gcn_forward_padded.3} parent=5 // pred_check
        %p1589 = pneg %p1588
      $region54: #{gcn_forward_padded.3} parent=5 // pred_check_branch
        %1591 = sbr.rel (%p1589) target = $region56
      $region55: #{gcn_forward_padded.3} parent=5 // pred_region
        %s1592 = ssub.s32 %s14, 2
        // Predicated region
        $region57: #{gcn_forward_padded.3} parent=55 // pred_check
          %p1593 = pneg %p171
        $region58: #{gcn_forward_padded.3} parent=55 // pred_check_branch
          %1595 = sbr.rel (%p1593) target = $region60
        $region59: #{gcn_forward_padded.3} parent=55 // pred_region
          %s1596 = sand.u32 %s156, 1
          %s1597 = scalar_lea.sflag [#allocation5], %s1596
          %s1598 = sand.u32 %s156, 1
          %s1599 = smul.addr %s1598, 256
          %s1600 = scalar_lea.vmem [#allocation4], %s1599
          %1601 = dma.done %s1597, 4096
        $region60: #{gcn_forward_padded.3} parent=55 // pred_fallthru
          _
      $region56: #{gcn_forward_padded.3} parent=5 // pred_fallthru
        _
    $region6: #{gcn_forward_padded.3} parent=1 // loop_footer
      %s18 = sadd.s32 1, %s14
    $region7: #{gcn_forward_padded.3} parent=1 // loop_footer_branch
      %13 = sbr.rel target = $region3
    $region8: #{gcn_forward_padded.3} parent=1 // loop_exit
      _
    %1602 = vsyncpa [#allocation5], 1
    %s1603 = scalar_lea.sflag [#allocation5], 1
    %1604 = vsyncpa %s1603, 1

// kernel: gcn_forward_padded.2
$region0: #{gcn_forward_padded.2}
  #allocation0 [shape = 'u32[]', space=smem, size = 0x4, offset = 0x4, fixed_abs, tag = 'smem constant byte address 0x4 - core index']
  #allocation1 [shape = 'u32[144,128]{1,0:T(1,128)}', space=vmem, size = 0x12000, scoped, tag = 'internal scratch']
  %s0 = inlined_call_operand.hbm [shape: bf16[256,1536], index: 0, kind: input, shape index: {}]
  %s1 = inlined_call_operand.hbm [shape: bf16[1536,256], index: 1, kind: input, shape index: {}]
  %s2 = inlined_call_operand.vmem [shape: bf16[256,256], index: 2, kind: output, shape index: {}]
  %s3 = sld [smem:[#allocation0]]
  $region26: #{gcn_forward_padded.2} parent=0
    _
  %s5 = ssub.s32 1, %s3
  %s6 = scalar_select 0, %s5, %s3
  $region1: #{gcn_forward_padded.2} parent=0
    #allocation2 [shape = 'u8[786432]{0}', space=vmem, size = 0xc0000, scoped, tag = 'input window, operand 0, single buffered']
    #allocation3 [shape = 's32[1]{0}', space=sflag, size = 0x4, scoped, tag = 'scoped memory for gcn_forward_padded.2']
    #allocation4 [shape = 'u8[786432]{0}', space=vmem, size = 0xc0000, scoped, tag = 'input window, operand 1, single buffered']
    #allocation5 [shape = 's32[1]{0}', space=sflag, size = 0x4, scoped, tag = 'scoped memory for gcn_forward_padded.2']
    %7 = vsyncpa [#allocation3], 0
    %8 = vsyncpa [#allocation5], 0
    // Predicated region
    $region2: #{gcn_forward_padded.2} parent=1 // pred_check
      _
    $region3: #{gcn_forward_padded.2} parent=1 // pred_check_branch
      %10 = sbr.rel (0) target = $region5
    $region4: #{gcn_forward_padded.2} parent=1 // pred_region
      %s12 = ssub.s32 24576, 24576
      %13 = vsyncadd [#allocation3], %s12
      %s14 = sshll.u32 [#allocation2], 4
      %s15 = int_to_ptr.vmem [resolvable:$true] %s14
      %20 = dma.hbm_to_vmem [thread:$0]  %s0, 24576, %s15, [#allocation3], 768, 768, 48
    $region5: #{gcn_forward_padded.2} parent=1 // pred_fallthru
      _
    // Predicated region
    $region6: #{gcn_forward_padded.2} parent=1 // pred_check
      _
    $region7: #{gcn_forward_padded.2} parent=1 // pred_check_branch
      %22 = sbr.rel (0) target = $region9
    $region8: #{gcn_forward_padded.2} parent=1 // pred_region
      %s24 = ssub.s32 24576, 24576
      %25 = vsyncadd [#allocation5], %s24
      %s26 = sshll.u32 [#allocation4], 4
      %s27 = int_to_ptr.vmem [resolvable:$true] %s26
      %32 = dma.hbm_to_vmem [thread:$0]  %s1, 24576, %s27, [#allocation5], 128, 128, 8
    $region9: #{gcn_forward_padded.2} parent=1 // pred_fallthru
      _
    // Predicated region
    $region10: #{gcn_forward_padded.2} parent=1 // pred_check
      _
    $region11: #{gcn_forward_padded.2} parent=1 // pred_check_branch
      %34 = sbr.rel (0) target = $region13
    $region12: #{gcn_forward_padded.2} parent=1 // pred_region
      %35 = dma.done [#allocation3], 24576
    $region13: #{gcn_forward_padded.2} parent=1 // pred_fallthru
      _
    // Predicated region
    $region14: #{gcn_forward_padded.2} parent=1 // pred_check
      _
    $region15: #{gcn_forward_padded.2} parent=1 // pred_check_branch
      %37 = sbr.rel (0) target = $region17
    $region16: #{gcn_forward_padded.2} parent=1 // pred_region
      %38 = dma.done [#allocation5], 24576
    $region17: #{gcn_forward_padded.2} parent=1 // pred_fallthru
      _
    %v39 = vld [vmem:[#allocation2] sm:$0xff]
    %v40 = vld [vmem:[#allocation2 + $0x8] sm:$0xff]
    %v41 = vld [vmem:[#allocation2 + $0x10] sm:$0xff]
    %v42 = vld [vmem:[#allocation2 + $0x18] sm:$0xff]
    %v43 = vld [vmem:[#allocation2 + $0x20] sm:$0xff]
    %v44 = vld [vmem:[#allocation2 + $0x28] sm:$0xff]
    %v45 = vld [vmem:[#allocation2 + $0x30] sm:$0xff]
    %v46 = vld [vmem:[#allocation2 + $0x38] sm:$0xff]
    %v47 = vld [vmem:[#allocation2 + $0x40] sm:$0xff]
    %v48 = vld [vmem:[#allocation2 + $0x48] sm:$0xff]
    %v49 = vld [vmem:[#allocation2 + $0x50] sm:$0xff]
    %v50 = vld [vmem:[#allocation2 + $0x58] sm:$0xff]
    %v51 = vld [vmem:[#allocation2 + $0x60] sm:$0xff]
    %v52 = vld [vmem:[#allocation2 + $0x68] sm:$0xff]
    %v53 = vld [vmem:[#allocation2 + $0x70] sm:$0xff]
    %v54 = vld [vmem:[#allocation2 + $0x78] sm:$0xff]
    %v55 = vld [vmem:[#allocation2 + $0x80] sm:$0xff]
    %v56 = vld [vmem:[#allocation2 + $0x88] sm:$0xff]
    %v57 = vld [vmem:[#allocation2 + $0x90] sm:$0xff]
    %v58 = vld [vmem:[#allocation2 + $0x98] sm:$0xff]
    %v59 = vld [vmem:[#allocation2 + $0xa0] sm:$0xff]
    %v60 = vld [vmem:[#allocation2 + $0xa8] sm:$0xff]
    %v61 = vld [vmem:[#allocation2 + $0xb0] sm:$0xff]
    %v62 = vld [vmem:[#allocation2 + $0xb8] sm:$0xff]
    %v63 = vld [vmem:[#allocation2 + $0xc0] sm:$0xff]
    %v64 = vld [vmem:[#allocation2 + $0xc8] sm:$0xff]
    %v65 = vld [vmem:[#allocation2 + $0xd0] sm:$0xff]
    %v66 = vld [vmem:[#allocation2 + $0xd8] sm:$0xff]
    %v67 = vld [vmem:[#allocation2 + $0xe0] sm:$0xff]
    %v68 = vld [vmem:[#allocation2 + $0xe8] sm:$0xff]
    %v69 = vld [vmem:[#allocation2 + $0xf0] sm:$0xff]
    %v70 = vld [vmem:[#allocation2 + $0xf8] sm:$0xff]
    %v71 = vld [vmem:[#allocation2 + $0x100] sm:$0xff]
    %v72 = vld [vmem:[#allocation2 + $0x108] sm:$0xff]
    %v73 = vld [vmem:[#allocation2 + $0x110] sm:$0xff]
    %v74 = vld [vmem:[#allocation2 + $0x118] sm:$0xff]
    %v75 = vld [vmem:[#allocation2 + $0x120] sm:$0xff]
    %v76 = vld [vmem:[#allocation2 + $0x128] sm:$0xff]
    %v77 = vld [vmem:[#allocation2 + $0x130] sm:$0xff]
    %v78 = vld [vmem:[#allocation2 + $0x138] sm:$0xff]
    %v79 = vld [vmem:[#allocation2 + $0x140] sm:$0xff]
    %v80 = vld [vmem:[#allocation2 + $0x148] sm:$0xff]
    %v81 = vld [vmem:[#allocation2 + $0x150] sm:$0xff]
    %v82 = vld [vmem:[#allocation2 + $0x158] sm:$0xff]
    %v83 = vld [vmem:[#allocation2 + $0x160] sm:$0xff]
    %v84 = vld [vmem:[#allocation2 + $0x168] sm:$0xff]
    %v85 = vld [vmem:[#allocation2 + $0x170] sm:$0xff]
    %v86 = vld [vmem:[#allocation2 + $0x178] sm:$0xff]
    %v87 = vld [vmem:[#allocation2 + $0x180] sm:$0xff]
    %v88 = vld [vmem:[#allocation2 + $0x188] sm:$0xff]
    %v89 = vld [vmem:[#allocation2 + $0x190] sm:$0xff]
    %v90 = vld [vmem:[#allocation2 + $0x198] sm:$0xff]
    %v91 = vld [vmem:[#allocation2 + $0x1a0] sm:$0xff]
    %v92 = vld [vmem:[#allocation2 + $0x1a8] sm:$0xff]
    %v93 = vld [vmem:[#allocation2 + $0x1b0] sm:$0xff]
    %v94 = vld [vmem:[#allocation2 + $0x1b8] sm:$0xff]
    %v95 = vld [vmem:[#allocation2 + $0x1c0] sm:$0xff]
    %v96 = vld [vmem:[#allocation2 + $0x1c8] sm:$0xff]
    %v97 = vld [vmem:[#allocation2 + $0x1d0] sm:$0xff]
    %v98 = vld [vmem:[#allocation2 + $0x1d8] sm:$0xff]
    %v99 = vld [vmem:[#allocation2 + $0x1e0] sm:$0xff]
    %v100 = vld [vmem:[#allocation2 + $0x1e8] sm:$0xff]
    %v101 = vld [vmem:[#allocation2 + $0x1f0] sm:$0xff]
    %v102 = vld [vmem:[#allocation2 + $0x1f8] sm:$0xff]
    %v103 = vld [vmem:[#allocation2 + $0x200] sm:$0xff]
    %v104 = vld [vmem:[#allocation2 + $0x208] sm:$0xff]
    %v105 = vld [vmem:[#allocation2 + $0x210] sm:$0xff]
    %v106 = vld [vmem:[#allocation2 + $0x218] sm:$0xff]
    %v107 = vld [vmem:[#allocation2 + $0x220] sm:$0xff]
    %v108 = vld [vmem:[#allocation2 + $0x228] sm:$0xff]
    %v109 = vld [vmem:[#allocation2 + $0x230] sm:$0xff]
    %v110 = vld [vmem:[#allocation2 + $0x238] sm:$0xff]
    %v111 = vld [vmem:[#allocation2 + $0x240] sm:$0xff]
    %v112 = vld [vmem:[#allocation2 + $0x248] sm:$0xff]
    %v113 = vld [vmem:[#allocation2 + $0x250] sm:$0xff]
    %v114 = vld [vmem:[#allocation2 + $0x258] sm:$0xff]
    %v115 = vld [vmem:[#allocation2 + $0x260] sm:$0xff]
    %v116 = vld [vmem:[#allocation2 + $0x268] sm:$0xff]
    %v117 = vld [vmem:[#allocation2 + $0x270] sm:$0xff]
    %v118 = vld [vmem:[#allocation2 + $0x278] sm:$0xff]
    %v119 = vld [vmem:[#allocation2 + $0x280] sm:$0xff]
    %v120 = vld [vmem:[#allocation2 + $0x288] sm:$0xff]
    %v121 = vld [vmem:[#allocation2 + $0x290] sm:$0xff]
    %v122 = vld [vmem:[#allocation2 + $0x298] sm:$0xff]
    %v123 = vld [vmem:[#allocation2 + $0x2a0] sm:$0xff]
    %v124 = vld [vmem:[#allocation2 + $0x2a8] sm:$0xff]
    %v125 = vld [vmem:[#allocation2 + $0x2b0] sm:$0xff]
    %v126 = vld [vmem:[#allocation2 + $0x2b8] sm:$0xff]
    %v127 = vld [vmem:[#allocation2 + $0x2c0] sm:$0xff]
    %v128 = vld [vmem:[#allocation2 + $0x2c8] sm:$0xff]
    %v129 = vld [vmem:[#allocation2 + $0x2d0] sm:$0xff]
    %v130 = vld [vmem:[#allocation2 + $0x2d8] sm:$0xff]
    %v131 = vld [vmem:[#allocation2 + $0x2e0] sm:$0xff]
    %v132 = vld [vmem:[#allocation2 + $0x2e8] sm:$0xff]
    %v133 = vld [vmem:[#allocation2 + $0x2f0] sm:$0xff]
    %v134 = vld [vmem:[#allocation2 + $0x2f8] sm:$0xff]
    %v135 = vld [vmem:[#allocation2 + $0x300] sm:$0xff]
    %v136 = vld [vmem:[#allocation2 + $0x308] sm:$0xff]
    %v137 = vld [vmem:[#allocation2 + $0x310] sm:$0xff]
    %v138 = vld [vmem:[#allocation2 + $0x318] sm:$0xff]
    %v139 = vld [vmem:[#allocation2 + $0x320] sm:$0xff]
    %v140 = vld [vmem:[#allocation2 + $0x328] sm:$0xff]
    %v141 = vld [vmem:[#allocation2 + $0x330] sm:$0xff]
    %v142 = vld [vmem:[#allocation2 + $0x338] sm:$0xff]
    %v143 = vld [vmem:[#allocation2 + $0x340] sm:$0xff]
    %v144 = vld [vmem:[#allocation2 + $0x348] sm:$0xff]
    %v145 = vld [vmem:[#allocation2 + $0x350] sm:$0xff]
    %v146 = vld [vmem:[#allocation2 + $0x358] sm:$0xff]
    %v147 = vld [vmem:[#allocation2 + $0x360] sm:$0xff]
    %v148 = vld [vmem:[#allocation2 + $0x368] sm:$0xff]
    %v149 = vld [vmem:[#allocation2 + $0x370] sm:$0xff]
    %v150 = vld [vmem:[#allocation2 + $0x378] sm:$0xff]
    %v151 = vld [vmem:[#allocation2 + $0x380] sm:$0xff]
    %v152 = vld [vmem:[#allocation2 + $0x388] sm:$0xff]
    %v153 = vld [vmem:[#allocation2 + $0x390] sm:$0xff]
    %v154 = vld [vmem:[#allocation2 + $0x398] sm:$0xff]
    %v155 = vld [vmem:[#allocation2 + $0x3a0] sm:$0xff]
    %v156 = vld [vmem:[#allocation2 + $0x3a8] sm:$0xff]
    %v157 = vld [vmem:[#allocation2 + $0x3b0] sm:$0xff]
    %v158 = vld [vmem:[#allocation2 + $0x3b8] sm:$0xff]
    %v159 = vld [vmem:[#allocation2 + $0x3c0] sm:$0xff]
    %v160 = vld [vmem:[#allocation2 + $0x3c8] sm:$0xff]
    %v161 = vld [vmem:[#allocation2 + $0x3d0] sm:$0xff]
    %v162 = vld [vmem:[#allocation2 + $0x3d8] sm:$0xff]
    %v163 = vld [vmem:[#allocation2 + $0x3e0] sm:$0xff]
    %v164 = vld [vmem:[#allocation2 + $0x3e8] sm:$0xff]
    %v165 = vld [vmem:[#allocation2 + $0x3f0] sm:$0xff]
    %v166 = vld [vmem:[#allocation2 + $0x3f8] sm:$0xff]
    %v167 = vld [vmem:[#allocation2 + $0x400] sm:$0xff]
    %v168 = vld [vmem:[#allocation2 + $0x408] sm:$0xff]
    %v169 = vld [vmem:[#allocation2 + $0x410] sm:$0xff]
    %v170 = vld [vmem:[#allocation2 + $0x418] sm:$0xff]
    %v171 = vld [vmem:[#allocation2 + $0x420] sm:$0xff]
    %v172 = vld [vmem:[#allocation2 + $0x428] sm:$0xff]
    %v173 = vld [vmem:[#allocation2 + $0x430] sm:$0xff]
    %v174 = vld [vmem:[#allocation2 + $0x438] sm:$0xff]
    %v175 = vld [vmem:[#allocation2 + $0x440] sm:$0xff]
    %v176 = vld [vmem:[#allocation2 + $0x448] sm:$0xff]
    %v177 = vld [vmem:[#allocation2 + $0x450] sm:$0xff]
    %v178 = vld [vmem:[#allocation2 + $0x458] sm:$0xff]
    %v179 = vld [vmem:[#allocation2 + $0x460] sm:$0xff]
    %v180 = vld [vmem:[#allocation2 + $0x468] sm:$0xff]
    %v181 = vld [vmem:[#allocation2 + $0x470] sm:$0xff]
    %v182 = vld [vmem:[#allocation2 + $0x478] sm:$0xff]
    %v183 = vld [vmem:[#allocation2 + $0x480] sm:$0xff]
    %v184 = vld [vmem:[#allocation2 + $0x488] sm:$0xff]
    %v185 = vld [vmem:[#allocation2 + $0x490] sm:$0xff]
    %v186 = vld [vmem:[#allocation2 + $0x498] sm:$0xff]
    %v187 = vld [vmem:[#allocation2 + $0x4a0] sm:$0xff]
    %v188 = vld [vmem:[#allocation2 + $0x4a8] sm:$0xff]
    %v189 = vld [vmem:[#allocation2 + $0x4b0] sm:$0xff]
    %v190 = vld [vmem:[#allocation2 + $0x4b8] sm:$0xff]
    %v191 = vld [vmem:[#allocation2 + $0x4c0] sm:$0xff]
    %v192 = vld [vmem:[#allocation2 + $0x4c8] sm:$0xff]
    %v193 = vld [vmem:[#allocation2 + $0x4d0] sm:$0xff]
    %v194 = vld [vmem:[#allocation2 + $0x4d8] sm:$0xff]
    %v195 = vld [vmem:[#allocation2 + $0x4e0] sm:$0xff]
    %v196 = vld [vmem:[#allocation2 + $0x4e8] sm:$0xff]
    %v197 = vld [vmem:[#allocation2 + $0x4f0] sm:$0xff]
    %v198 = vld [vmem:[#allocation2 + $0x4f8] sm:$0xff]
    %v199 = vld [vmem:[#allocation2 + $0x500] sm:$0xff]
    %v200 = vld [vmem:[#allocation2 + $0x508] sm:$0xff]
    %v201 = vld [vmem:[#allocation2 + $0x510] sm:$0xff]
    %v202 = vld [vmem:[#allocation2 + $0x518] sm:$0xff]
    %v203 = vld [vmem:[#allocation2 + $0x520] sm:$0xff]
    %v204 = vld [vmem:[#allocation2 + $0x528] sm:$0xff]
    %v205 = vld [vmem:[#allocation2 + $0x530] sm:$0xff]
    %v206 = vld [vmem:[#allocation2 + $0x538] sm:$0xff]
    %v207 = vld [vmem:[#allocation2 + $0x540] sm:$0xff]
    %v208 = vld [vmem:[#allocation2 + $0x548] sm:$0xff]
    %v209 = vld [vmem:[#allocation2 + $0x550] sm:$0xff]
    %v210 = vld [vmem:[#allocation2 + $0x558] sm:$0xff]
    %v211 = vld [vmem:[#allocation2 + $0x560] sm:$0xff]
    %v212 = vld [vmem:[#allocation2 + $0x568] sm:$0xff]
    %v213 = vld [vmem:[#allocation2 + $0x570] sm:$0xff]
    %v214 = vld [vmem:[#allocation2 + $0x578] sm:$0xff]
    %v215 = vld [vmem:[#allocation2 + $0x580] sm:$0xff]
    %v216 = vld [vmem:[#allocation2 + $0x588] sm:$0xff]
    %v217 = vld [vmem:[#allocation2 + $0x590] sm:$0xff]
    %v218 = vld [vmem:[#allocation2 + $0x598] sm:$0xff]
    %v219 = vld [vmem:[#allocation2 + $0x5a0] sm:$0xff]
    %v220 = vld [vmem:[#allocation2 + $0x5a8] sm:$0xff]
    %v221 = vld [vmem:[#allocation2 + $0x5b0] sm:$0xff]
    %v222 = vld [vmem:[#allocation2 + $0x5b8] sm:$0xff]
    %v223 = vld [vmem:[#allocation2 + $0x5c0] sm:$0xff]
    %v224 = vld [vmem:[#allocation2 + $0x5c8] sm:$0xff]
    %v225 = vld [vmem:[#allocation2 + $0x5d0] sm:$0xff]
    %v226 = vld [vmem:[#allocation2 + $0x5d8] sm:$0xff]
    %v227 = vld [vmem:[#allocation2 + $0x5e0] sm:$0xff]
    %v228 = vld [vmem:[#allocation2 + $0x5e8] sm:$0xff]
    %v229 = vld [vmem:[#allocation2 + $0x5f0] sm:$0xff]
    %v230 = vld [vmem:[#allocation2 + $0x5f8] sm:$0xff]
    %v231 = vld [vmem:[#allocation4] sm:$0xff]
    %v232 = vld [vmem:[#allocation4 + $0x8] sm:$0xff]
    %v233 = vld [vmem:[#allocation4 + $0x10] sm:$0xff]
    %v234 = vld [vmem:[#allocation4 + $0x18] sm:$0xff]
    %v235 = vld [vmem:[#allocation4 + $0x20] sm:$0xff]
    %v236 = vld [vmem:[#allocation4 + $0x28] sm:$0xff]
    %v237 = vld [vmem:[#allocation4 + $0x30] sm:$0xff]
    %v238 = vld [vmem:[#allocation4 + $0x38] sm:$0xff]
    %v239 = vld [vmem:[#allocation4 + $0x40] sm:$0xff]
    %v240 = vld [vmem:[#allocation4 + $0x48] sm:$0xff]
    %v241 = vld [vmem:[#allocation4 + $0x50] sm:$0xff]
    %v242 = vld [vmem:[#allocation4 + $0x58] sm:$0xff]
    %v243 = vld [vmem:[#allocation4 + $0x60] sm:$0xff]
    %v244 = vld [vmem:[#allocation4 + $0x68] sm:$0xff]
    %v245 = vld [vmem:[#allocation4 + $0x70] sm:$0xff]
    %v246 = vld [vmem:[#allocation4 + $0x78] sm:$0xff]
    %v247 = vld [vmem:[#allocation4 + $0x80] sm:$0xff]
    %v248 = vld [vmem:[#allocation4 + $0x88] sm:$0xff]
    %v249 = vld [vmem:[#allocation4 + $0x90] sm:$0xff]
    %v250 = vld [vmem:[#allocation4 + $0x98] sm:$0xff]
    %v251 = vld [vmem:[#allocation4 + $0xa0] sm:$0xff]
    %v252 = vld [vmem:[#allocation4 + $0xa8] sm:$0xff]
    %v253 = vld [vmem:[#allocation4 + $0xb0] sm:$0xff]
    %v254 = vld [vmem:[#allocation4 + $0xb8] sm:$0xff]
    %v255 = vld [vmem:[#allocation4 + $0xc0] sm:$0xff]
    %v256 = vld [vmem:[#allocation4 + $0xc8] sm:$0xff]
    %v257 = vld [vmem:[#allocation4 + $0xd0] sm:$0xff]
    %v258 = vld [vmem:[#allocation4 + $0xd8] sm:$0xff]
    %v259 = vld [vmem:[#allocation4 + $0xe0] sm:$0xff]
    %v260 = vld [vmem:[#allocation4 + $0xe8] sm:$0xff]
    %v261 = vld [vmem:[#allocation4 + $0xf0] sm:$0xff]
    %v262 = vld [vmem:[#allocation4 + $0xf8] sm:$0xff]
    %v263 = vld [vmem:[#allocation4 + $0x100] sm:$0xff]
    %v264 = vld [vmem:[#allocation4 + $0x108] sm:$0xff]
    %v265 = vld [vmem:[#allocation4 + $0x110] sm:$0xff]
    %v266 = vld [vmem:[#allocation4 + $0x118] sm:$0xff]
    %v267 = vld [vmem:[#allocation4 + $0x120] sm:$0xff]
    %v268 = vld [vmem:[#allocation4 + $0x128] sm:$0xff]
    %v269 = vld [vmem:[#allocation4 + $0x130] sm:$0xff]
    %v270 = vld [vmem:[#allocation4 + $0x138] sm:$0xff]
    %v271 = vld [vmem:[#allocation4 + $0x140] sm:$0xff]
    %v272 = vld [vmem:[#allocation4 + $0x148] sm:$0xff]
    %v273 = vld [vmem:[#allocation4 + $0x150] sm:$0xff]
    %v274 = vld [vmem:[#allocation4 + $0x158] sm:$0xff]
    %v275 = vld [vmem:[#allocation4 + $0x160] sm:$0xff]
    %v276 = vld [vmem:[#allocation4 + $0x168] sm:$0xff]
    %v277 = vld [vmem:[#allocation4 + $0x170] sm:$0xff]
    %v278 = vld [vmem:[#allocation4 + $0x178] sm:$0xff]
    %v279 = vld [vmem:[#allocation4 + $0x180] sm:$0xff]
    %v280 = vld [vmem:[#allocation4 + $0x188] sm:$0xff]
    %v281 = vld [vmem:[#allocation4 + $0x190] sm:$0xff]
    %v282 = vld [vmem:[#allocation4 + $0x198] sm:$0xff]
    %v283 = vld [vmem:[#allocation4 + $0x1a0] sm:$0xff]
    %v284 = vld [vmem:[#allocation4 + $0x1a8] sm:$0xff]
    %v285 = vld [vmem:[#allocation4 + $0x1b0] sm:$0xff]
    %v286 = vld [vmem:[#allocation4 + $0x1b8] sm:$0xff]
    %v287 = vld [vmem:[#allocation4 + $0x1c0] sm:$0xff]
    %v288 = vld [vmem:[#allocation4 + $0x1c8] sm:$0xff]
    %v289 = vld [vmem:[#allocation4 + $0x1d0] sm:$0xff]
    %v290 = vld [vmem:[#allocation4 + $0x1d8] sm:$0xff]
    %v291 = vld [vmem:[#allocation4 + $0x1e0] sm:$0xff]
    %v292 = vld [vmem:[#allocation4 + $0x1e8] sm:$0xff]
    %v293 = vld [vmem:[#allocation4 + $0x1f0] sm:$0xff]
    %v294 = vld [vmem:[#allocation4 + $0x1f8] sm:$0xff]
    %v295 = vld [vmem:[#allocation4 + $0x200] sm:$0xff]
    %v296 = vld [vmem:[#allocation4 + $0x208] sm:$0xff]
    %v297 = vld [vmem:[#allocation4 + $0x210] sm:$0xff]
    %v298 = vld [vmem:[#allocation4 + $0x218] sm:$0xff]
    %v299 = vld [vmem:[#allocation4 + $0x220] sm:$0xff]
    %v300 = vld [vmem:[#allocation4 + $0x228] sm:$0xff]
    %v301 = vld [vmem:[#allocation4 + $0x230] sm:$0xff]
    %v302 = vld [vmem:[#allocation4 + $0x238] sm:$0xff]
    %v303 = vld [vmem:[#allocation4 + $0x240] sm:$0xff]
    %v304 = vld [vmem:[#allocation4 + $0x248] sm:$0xff]
    %v305 = vld [vmem:[#allocation4 + $0x250] sm:$0xff]
    %v306 = vld [vmem:[#allocation4 + $0x258] sm:$0xff]
    %v307 = vld [vmem:[#allocation4 + $0x260] sm:$0xff]
    %v308 = vld [vmem:[#allocation4 + $0x268] sm:$0xff]
    %v309 = vld [vmem:[#allocation4 + $0x270] sm:$0xff]
    %v310 = vld [vmem:[#allocation4 + $0x278] sm:$0xff]
    %v311 = vld [vmem:[#allocation4 + $0x280] sm:$0xff]
    %v312 = vld [vmem:[#allocation4 + $0x288] sm:$0xff]
    %v313 = vld [vmem:[#allocation4 + $0x290] sm:$0xff]
    %v314 = vld [vmem:[#allocation4 + $0x298] sm:$0xff]
    %v315 = vld [vmem:[#allocation4 + $0x2a0] sm:$0xff]
    %v316 = vld [vmem:[#allocation4 + $0x2a8] sm:$0xff]
    %v317 = vld [vmem:[#allocation4 + $0x2b0] sm:$0xff]
    %v318 = vld [vmem:[#allocation4 + $0x2b8] sm:$0xff]
    %v319 = vld [vmem:[#allocation4 + $0x2c0] sm:$0xff]
    %v320 = vld [vmem:[#allocation4 + $0x2c8] sm:$0xff]
    %v321 = vld [vmem:[#allocation4 + $0x2d0] sm:$0xff]
    %v322 = vld [vmem:[#allocation4 + $0x2d8] sm:$0xff]
    %v323 = vld [vmem:[#allocation4 + $0x2e0] sm:$0xff]
    %v324 = vld [vmem:[#allocation4 + $0x2e8] sm:$0xff]
    %v325 = vld [vmem:[#allocation4 + $0x2f0] sm:$0xff]
    %v326 = vld [vmem:[#allocation4 + $0x2f8] sm:$0xff]
    %v327 = vld [vmem:[#allocation4 + $0x300] sm:$0xff]
    %v328 = vld [vmem:[#allocation4 + $0x308] sm:$0xff]
    %v329 = vld [vmem:[#allocation4 + $0x310] sm:$0xff]
    %v330 = vld [vmem:[#allocation4 + $0x318] sm:$0xff]
    %v331 = vld [vmem:[#allocation4 + $0x320] sm:$0xff]
    %v332 = vld [vmem:[#allocation4 + $0x328] sm:$0xff]
    %v333 = vld [vmem:[#allocation4 + $0x330] sm:$0xff]
    %v334 = vld [vmem:[#allocation4 + $0x338] sm:$0xff]
    %v335 = vld [vmem:[#allocation4 + $0x340] sm:$0xff]
    %v336 = vld [vmem:[#allocation4 + $0x348] sm:$0xff]
    %v337 = vld [vmem:[#allocation4 + $0x350] sm:$0xff]
    %v338 = vld [vmem:[#allocation4 + $0x358] sm:$0xff]
    %v339 = vld [vmem:[#allocation4 + $0x360] sm:$0xff]
    %v340 = vld [vmem:[#allocation4 + $0x368] sm:$0xff]
    %v341 = vld [vmem:[#allocation4 + $0x370] sm:$0xff]
    %v342 = vld [vmem:[#allocation4 + $0x378] sm:$0xff]
    %v343 = vld [vmem:[#allocation4 + $0x380] sm:$0xff]
    %v344 = vld [vmem:[#allocation4 + $0x388] sm:$0xff]
    %v345 = vld [vmem:[#allocation4 + $0x390] sm:$0xff]
    %v346 = vld [vmem:[#allocation4 + $0x398] sm:$0xff]
    %v347 = vld [vmem:[#allocation4 + $0x3a0] sm:$0xff]
    %v348 = vld [vmem:[#allocation4 + $0x3a8] sm:$0xff]
    %v349 = vld [vmem:[#allocation4 + $0x3b0] sm:$0xff]
    %v350 = vld [vmem:[#allocation4 + $0x3b8] sm:$0xff]
    %v351 = vld [vmem:[#allocation4 + $0x3c0] sm:$0xff]
    %v352 = vld [vmem:[#allocation4 + $0x3c8] sm:$0xff]
    %v353 = vld [vmem:[#allocation4 + $0x3d0] sm:$0xff]
    %v354 = vld [vmem:[#allocation4 + $0x3d8] sm:$0xff]
    %v355 = vld [vmem:[#allocation4 + $0x3e0] sm:$0xff]
    %v356 = vld [vmem:[#allocation4 + $0x3e8] sm:$0xff]
    %v357 = vld [vmem:[#allocation4 + $0x3f0] sm:$0xff]
    %v358 = vld [vmem:[#allocation4 + $0x3f8] sm:$0xff]
    %v359 = vld [vmem:[#allocation4 + $0x400] sm:$0xff]
    %v360 = vld [vmem:[#allocation4 + $0x408] sm:$0xff]
    %v361 = vld [vmem:[#allocation4 + $0x410] sm:$0xff]
    %v362 = vld [vmem:[#allocation4 + $0x418] sm:$0xff]
    %v363 = vld [vmem:[#allocation4 + $0x420] sm:$0xff]
    %v364 = vld [vmem:[#allocation4 + $0x428] sm:$0xff]
    %v365 = vld [vmem:[#allocation4 + $0x430] sm:$0xff]
    %v366 = vld [vmem:[#allocation4 + $0x438] sm:$0xff]
    %v367 = vld [vmem:[#allocation4 + $0x440] sm:$0xff]
    %v368 = vld [vmem:[#allocation4 + $0x448] sm:$0xff]
    %v369 = vld [vmem:[#allocation4 + $0x450] sm:$0xff]
    %v370 = vld [vmem:[#allocation4 + $0x458] sm:$0xff]
    %v371 = vld [vmem:[#allocation4 + $0x460] sm:$0xff]
    %v372 = vld [vmem:[#allocation4 + $0x468] sm:$0xff]
    %v373 = vld [vmem:[#allocation4 + $0x470] sm:$0xff]
    %v374 = vld [vmem:[#allocation4 + $0x478] sm:$0xff]
    %v375 = vld [vmem:[#allocation4 + $0x480] sm:$0xff]
    %v376 = vld [vmem:[#allocation4 + $0x488] sm:$0xff]
    %v377 = vld [vmem:[#allocation4 + $0x490] sm:$0xff]
    %v378 = vld [vmem:[#allocation4 + $0x498] sm:$0xff]
    %v379 = vld [vmem:[#allocation4 + $0x4a0] sm:$0xff]
    %v380 = vld [vmem:[#allocation4 + $0x4a8] sm:$0xff]
    %v381 = vld [vmem:[#allocation4 + $0x4b0] sm:$0xff]
    %v382 = vld [vmem:[#allocation4 + $0x4b8] sm:$0xff]
    %v383 = vld [vmem:[#allocation4 + $0x4c0] sm:$0xff]
    %v384 = vld [vmem:[#allocation4 + $0x4c8] sm:$0xff]
    %v385 = vld [vmem:[#allocation4 + $0x4d0] sm:$0xff]
    %v386 = vld [vmem:[#allocation4 + $0x4d8] sm:$0xff]
    %v387 = vld [vmem:[#allocation4 + $0x4e0] sm:$0xff]
    %v388 = vld [vmem:[#allocation4 + $0x4e8] sm:$0xff]
    %v389 = vld [vmem:[#allocation4 + $0x4f0] sm:$0xff]
    %v390 = vld [vmem:[#allocation4 + $0x4f8] sm:$0xff]
    %v391 = vld [vmem:[#allocation4 + $0x500] sm:$0xff]
    %v392 = vld [vmem:[#allocation4 + $0x508] sm:$0xff]
    %v393 = vld [vmem:[#allocation4 + $0x510] sm:$0xff]
    %v394 = vld [vmem:[#allocation4 + $0x518] sm:$0xff]
    %v395 = vld [vmem:[#allocation4 + $0x520] sm:$0xff]
    %v396 = vld [vmem:[#allocation4 + $0x528] sm:$0xff]
    %v397 = vld [vmem:[#allocation4 + $0x530] sm:$0xff]
    %v398 = vld [vmem:[#allocation4 + $0x538] sm:$0xff]
    %v399 = vld [vmem:[#allocation4 + $0x540] sm:$0xff]
    %v400 = vld [vmem:[#allocation4 + $0x548] sm:$0xff]
    %v401 = vld [vmem:[#allocation4 + $0x550] sm:$0xff]
    %v402 = vld [vmem:[#allocation4 + $0x558] sm:$0xff]
    %v403 = vld [vmem:[#allocation4 + $0x560] sm:$0xff]
    %v404 = vld [vmem:[#allocation4 + $0x568] sm:$0xff]
    %v405 = vld [vmem:[#allocation4 + $0x570] sm:$0xff]
    %v406 = vld [vmem:[#allocation4 + $0x578] sm:$0xff]
    %v407 = vld [vmem:[#allocation4 + $0x580] sm:$0xff]
    %v408 = vld [vmem:[#allocation4 + $0x588] sm:$0xff]
    %v409 = vld [vmem:[#allocation4 + $0x590] sm:$0xff]
    %v410 = vld [vmem:[#allocation4 + $0x598] sm:$0xff]
    %v411 = vld [vmem:[#allocation4 + $0x5a0] sm:$0xff]
    %v412 = vld [vmem:[#allocation4 + $0x5a8] sm:$0xff]
    %v413 = vld [vmem:[#allocation4 + $0x5b0] sm:$0xff]
    %v414 = vld [vmem:[#allocation4 + $0x5b8] sm:$0xff]
    %v415 = vld [vmem:[#allocation4 + $0x5c0] sm:$0xff]
    %v416 = vld [vmem:[#allocation4 + $0x5c8] sm:$0xff]
    %v417 = vld [vmem:[#allocation4 + $0x5d0] sm:$0xff]
    %v418 = vld [vmem:[#allocation4 + $0x5d8] sm:$0xff]
    %v419 = vld [vmem:[#allocation4 + $0x5e0] sm:$0xff]
    %v420 = vld [vmem:[#allocation4 + $0x5e8] sm:$0xff]
    %v421 = vld [vmem:[#allocation4 + $0x5f0] sm:$0xff]
    %v422 = vld [vmem:[#allocation4 + $0x5f8] sm:$0xff]
    %v615 = vunpack.c.l.b16 %v39
    %v616 = vunpack.c.h.b16 %v39
    %v617 = vunpack.c.l.b16 %v40
    %v618 = vunpack.c.h.b16 %v40
    %v619 = vunpack.c.l.b16 %v41
    %v620 = vunpack.c.h.b16 %v41
    %v621 = vunpack.c.l.b16 %v42
    %v622 = vunpack.c.h.b16 %v42
    %v623 = vunpack.c.l.b16 %v43
    %v624 = vunpack.c.h.b16 %v43
    %v625 = vunpack.c.l.b16 %v44
    %v626 = vunpack.c.h.b16 %v44
    %v627 = vunpack.c.l.b16 %v45
    %v628 = vunpack.c.h.b16 %v45
    %v629 = vunpack.c.l.b16 %v46
    %v630 = vunpack.c.h.b16 %v46
    %v631 = vunpack.c.l.b16 %v47
    %v632 = vunpack.c.h.b16 %v47
    %v633 = vunpack.c.l.b16 %v48
    %v634 = vunpack.c.h.b16 %v48
    %v635 = vunpack.c.l.b16 %v49
    %v636 = vunpack.c.h.b16 %v49
    %v637 = vunpack.c.l.b16 %v50
    %v638 = vunpack.c.h.b16 %v50
    %v639 = vunpack.c.l.b16 %v51
    %v640 = vunpack.c.h.b16 %v51
    %v641 = vunpack.c.l.b16 %v52
    %v642 = vunpack.c.h.b16 %v52
    %v643 = vunpack.c.l.b16 %v53
    %v644 = vunpack.c.h.b16 %v53
    %v645 = vunpack.c.l.b16 %v54
    %v646 = vunpack.c.h.b16 %v54
    %v647 = vunpack.c.l.b16 %v55
    %v648 = vunpack.c.h.b16 %v55
    %v649 = vunpack.c.l.b16 %v56
    %v650 = vunpack.c.h.b16 %v56
    %v651 = vunpack.c.l.b16 %v57
    %v652 = vunpack.c.h.b16 %v57
    %v653 = vunpack.c.l.b16 %v58
    %v654 = vunpack.c.h.b16 %v58
    %v655 = vunpack.c.l.b16 %v59
    %v656 = vunpack.c.h.b16 %v59
    %v657 = vunpack.c.l.b16 %v60
    %v658 = vunpack.c.h.b16 %v60
    %v659 = vunpack.c.l.b16 %v61
    %v660 = vunpack.c.h.b16 %v61
    %v661 = vunpack.c.l.b16 %v62
    %v662 = vunpack.c.h.b16 %v62
    %v663 = vunpack.c.l.b16 %v63
    %v664 = vunpack.c.h.b16 %v63
    %v665 = vunpack.c.l.b16 %v64
    %v666 = vunpack.c.h.b16 %v64
    %v667 = vunpack.c.l.b16 %v65
    %v668 = vunpack.c.h.b16 %v65
    %v669 = vunpack.c.l.b16 %v66
    %v670 = vunpack.c.h.b16 %v66
    %v671 = vunpack.c.l.b16 %v67
    %v672 = vunpack.c.h.b16 %v67
    %v673 = vunpack.c.l.b16 %v68
    %v674 = vunpack.c.h.b16 %v68
    %v675 = vunpack.c.l.b16 %v69
    %v676 = vunpack.c.h.b16 %v69
    %v677 = vunpack.c.l.b16 %v70
    %v678 = vunpack.c.h.b16 %v70
    %v679 = vunpack.c.l.b16 %v71
    %v680 = vunpack.c.h.b16 %v71
    %v681 = vunpack.c.l.b16 %v72
    %v682 = vunpack.c.h.b16 %v72
    %v683 = vunpack.c.l.b16 %v73
    %v684 = vunpack.c.h.b16 %v73
    %v685 = vunpack.c.l.b16 %v74
    %v686 = vunpack.c.h.b16 %v74
    %v687 = vunpack.c.l.b16 %v75
    %v688 = vunpack.c.h.b16 %v75
    %v689 = vunpack.c.l.b16 %v76
    %v690 = vunpack.c.h.b16 %v76
    %v691 = vunpack.c.l.b16 %v77
    %v692 = vunpack.c.h.b16 %v77
    %v693 = vunpack.c.l.b16 %v78
    %v694 = vunpack.c.h.b16 %v78
    %v695 = vunpack.c.l.b16 %v79
    %v696 = vunpack.c.h.b16 %v79
    %v697 = vunpack.c.l.b16 %v80
    %v698 = vunpack.c.h.b16 %v80
    %v699 = vunpack.c.l.b16 %v81
    %v700 = vunpack.c.h.b16 %v81
    %v701 = vunpack.c.l.b16 %v82
    %v702 = vunpack.c.h.b16 %v82
    %v703 = vunpack.c.l.b16 %v83
    %v704 = vunpack.c.h.b16 %v83
    %v705 = vunpack.c.l.b16 %v84
    %v706 = vunpack.c.h.b16 %v84
    %v707 = vunpack.c.l.b16 %v85
    %v708 = vunpack.c.h.b16 %v85
    %v709 = vunpack.c.l.b16 %v86
    %v710 = vunpack.c.h.b16 %v86
    %v711 = vunpack.c.l.b16 %v87
    %v712 = vunpack.c.h.b16 %v87
    %v713 = vunpack.c.l.b16 %v88
    %v714 = vunpack.c.h.b16 %v88
    %v715 = vunpack.c.l.b16 %v89
    %v716 = vunpack.c.h.b16 %v89
    %v717 = vunpack.c.l.b16 %v90
    %v718 = vunpack.c.h.b16 %v90
    %v719 = vunpack.c.l.b16 %v91
    %v720 = vunpack.c.h.b16 %v91
    %v721 = vunpack.c.l.b16 %v92
    %v722 = vunpack.c.h.b16 %v92
    %v723 = vunpack.c.l.b16 %v93
    %v724 = vunpack.c.h.b16 %v93
    %v725 = vunpack.c.l.b16 %v94
    %v726 = vunpack.c.h.b16 %v94
    %v727 = vunpack.c.l.b16 %v95
    %v728 = vunpack.c.h.b16 %v95
    %v729 = vunpack.c.l.b16 %v96
    %v730 = vunpack.c.h.b16 %v96
    %v731 = vunpack.c.l.b16 %v97
    %v732 = vunpack.c.h.b16 %v97
    %v733 = vunpack.c.l.b16 %v98
    %v734 = vunpack.c.h.b16 %v98
    %v735 = vunpack.c.l.b16 %v99
    %v736 = vunpack.c.h.b16 %v99
    %v737 = vunpack.c.l.b16 %v100
    %v738 = vunpack.c.h.b16 %v100
    %v739 = vunpack.c.l.b16 %v101
    %v740 = vunpack.c.h.b16 %v101
    %v741 = vunpack.c.l.b16 %v102
    %v742 = vunpack.c.h.b16 %v102
    %v743 = vunpack.c.l.b16 %v103
    %v744 = vunpack.c.h.b16 %v103
    %v745 = vunpack.c.l.b16 %v104
    %v746 = vunpack.c.h.b16 %v104
    %v747 = vunpack.c.l.b16 %v105
    %v748 = vunpack.c.h.b16 %v105
    %v749 = vunpack.c.l.b16 %v106
    %v750 = vunpack.c.h.b16 %v106
    %v751 = vunpack.c.l.b16 %v107
    %v752 = vunpack.c.h.b16 %v107
    %v753 = vunpack.c.l.b16 %v108
    %v754 = vunpack.c.h.b16 %v108
    %v755 = vunpack.c.l.b16 %v109
    %v756 = vunpack.c.h.b16 %v109
    %v757 = vunpack.c.l.b16 %v110
    %v758 = vunpack.c.h.b16 %v110
    %v759 = vunpack.c.l.b16 %v111
    %v760 = vunpack.c.h.b16 %v111
    %v761 = vunpack.c.l.b16 %v112
    %v762 = vunpack.c.h.b16 %v112
    %v763 = vunpack.c.l.b16 %v113
    %v764 = vunpack.c.h.b16 %v113
    %v765 = vunpack.c.l.b16 %v114
    %v766 = vunpack.c.h.b16 %v114
    %v767 = vunpack.c.l.b16 %v115
    %v768 = vunpack.c.h.b16 %v115
    %v769 = vunpack.c.l.b16 %v116
    %v770 = vunpack.c.h.b16 %v116
    %v771 = vunpack.c.l.b16 %v117
    %v772 = vunpack.c.h.b16 %v117
    %v773 = vunpack.c.l.b16 %v118
    %v774 = vunpack.c.h.b16 %v118
    %v775 = vunpack.c.l.b16 %v119
    %v776 = vunpack.c.h.b16 %v119
    %v777 = vunpack.c.l.b16 %v120
    %v778 = vunpack.c.h.b16 %v120
    %v779 = vunpack.c.l.b16 %v121
    %v780 = vunpack.c.h.b16 %v121
    %v781 = vunpack.c.l.b16 %v122
    %v782 = vunpack.c.h.b16 %v122
    %v783 = vunpack.c.l.b16 %v123
    %v784 = vunpack.c.h.b16 %v123
    %v785 = vunpack.c.l.b16 %v124
    %v786 = vunpack.c.h.b16 %v124
    %v787 = vunpack.c.l.b16 %v125
    %v788 = vunpack.c.h.b16 %v125
    %v789 = vunpack.c.l.b16 %v126
    %v790 = vunpack.c.h.b16 %v126
    %v791 = vunpack.c.l.b16 %v127
    %v792 = vunpack.c.h.b16 %v127
    %v793 = vunpack.c.l.b16 %v128
    %v794 = vunpack.c.h.b16 %v128
    %v795 = vunpack.c.l.b16 %v129
    %v796 = vunpack.c.h.b16 %v129
    %v797 = vunpack.c.l.b16 %v130
    %v798 = vunpack.c.h.b16 %v130
    %v799 = vunpack.c.l.b16 %v131
    %v800 = vunpack.c.h.b16 %v131
    %v801 = vunpack.c.l.b16 %v132
    %v802 = vunpack.c.h.b16 %v132
    %v803 = vunpack.c.l.b16 %v133
    %v804 = vunpack.c.h.b16 %v133
    %v805 = vunpack.c.l.b16 %v134
    %v806 = vunpack.c.h.b16 %v134
    %v807 = vunpack.c.l.b16 %v135
    %v808 = vunpack.c.h.b16 %v135
    %v809 = vunpack.c.l.b16 %v136
    %v810 = vunpack.c.h.b16 %v136
    %v811 = vunpack.c.l.b16 %v137
    %v812 = vunpack.c.h.b16 %v137
    %v813 = vunpack.c.l.b16 %v138
    %v814 = vunpack.c.h.b16 %v138
    %v815 = vunpack.c.l.b16 %v139
    %v816 = vunpack.c.h.b16 %v139
    %v817 = vunpack.c.l.b16 %v140
    %v818 = vunpack.c.h.b16 %v140
    %v819 = vunpack.c.l.b16 %v141
    %v820 = vunpack.c.h.b16 %v141
    %v821 = vunpack.c.l.b16 %v142
    %v822 = vunpack.c.h.b16 %v142
    %v823 = vunpack.c.l.b16 %v143
    %v824 = vunpack.c.h.b16 %v143
    %v825 = vunpack.c.l.b16 %v144
    %v826 = vunpack.c.h.b16 %v144
    %v827 = vunpack.c.l.b16 %v145
    %v828 = vunpack.c.h.b16 %v145
    %v829 = vunpack.c.l.b16 %v146
    %v830 = vunpack.c.h.b16 %v146
    %v831 = vunpack.c.l.b16 %v147
    %v832 = vunpack.c.h.b16 %v147
    %v833 = vunpack.c.l.b16 %v148
    %v834 = vunpack.c.h.b16 %v148
    %v835 = vunpack.c.l.b16 %v149
    %v836 = vunpack.c.h.b16 %v149
    %v837 = vunpack.c.l.b16 %v150
    %v838 = vunpack.c.h.b16 %v150
    %v839 = vunpack.c.l.b16 %v151
    %v840 = vunpack.c.h.b16 %v151
    %v841 = vunpack.c.l.b16 %v152
    %v842 = vunpack.c.h.b16 %v152
    %v843 = vunpack.c.l.b16 %v153
    %v844 = vunpack.c.h.b16 %v153
    %v845 = vunpack.c.l.b16 %v154
    %v846 = vunpack.c.h.b16 %v154
    %v847 = vunpack.c.l.b16 %v155
    %v848 = vunpack.c.h.b16 %v155
    %v849 = vunpack.c.l.b16 %v156
    %v850 = vunpack.c.h.b16 %v156
    %v851 = vunpack.c.l.b16 %v157
    %v852 = vunpack.c.h.b16 %v157
    %v853 = vunpack.c.l.b16 %v158
    %v854 = vunpack.c.h.b16 %v158
    %v855 = vunpack.c.l.b16 %v159
    %v856 = vunpack.c.h.b16 %v159
    %v857 = vunpack.c.l.b16 %v160
    %v858 = vunpack.c.h.b16 %v160
    %v859 = vunpack.c.l.b16 %v161
    %v860 = vunpack.c.h.b16 %v161
    %v861 = vunpack.c.l.b16 %v162
    %v862 = vunpack.c.h.b16 %v162
    %v863 = vunpack.c.l.b16 %v163
    %v864 = vunpack.c.h.b16 %v163
    %v865 = vunpack.c.l.b16 %v164
    %v866 = vunpack.c.h.b16 %v164
    %v867 = vunpack.c.l.b16 %v165
    %v868 = vunpack.c.h.b16 %v165
    %v869 = vunpack.c.l.b16 %v166
    %v870 = vunpack.c.h.b16 %v166
    %v871 = vunpack.c.l.b16 %v167
    %v872 = vunpack.c.h.b16 %v167
    %v873 = vunpack.c.l.b16 %v168
    %v874 = vunpack.c.h.b16 %v168
    %v875 = vunpack.c.l.b16 %v169
    %v876 = vunpack.c.h.b16 %v169
    %v877 = vunpack.c.l.b16 %v170
    %v878 = vunpack.c.h.b16 %v170
    %v879 = vunpack.c.l.b16 %v171
    %v880 = vunpack.c.h.b16 %v171
    %v881 = vunpack.c.l.b16 %v172
    %v882 = vunpack.c.h.b16 %v172
    %v883 = vunpack.c.l.b16 %v173
    %v884 = vunpack.c.h.b16 %v173
    %v885 = vunpack.c.l.b16 %v174
    %v886 = vunpack.c.h.b16 %v174
    %v887 = vunpack.c.l.b16 %v175
    %v888 = vunpack.c.h.b16 %v175
    %v889 = vunpack.c.l.b16 %v176
    %v890 = vunpack.c.h.b16 %v176
    %v891 = vunpack.c.l.b16 %v177
    %v892 = vunpack.c.h.b16 %v177
    %v893 = vunpack.c.l.b16 %v178
    %v894 = vunpack.c.h.b16 %v178
    %v895 = vunpack.c.l.b16 %v179
    %v896 = vunpack.c.h.b16 %v179
    %v897 = vunpack.c.l.b16 %v180
    %v898 = vunpack.c.h.b16 %v180
    %v899 = vunpack.c.l.b16 %v181
    %v900 = vunpack.c.h.b16 %v181
    %v901 = vunpack.c.l.b16 %v182
    %v902 = vunpack.c.h.b16 %v182
    %v903 = vunpack.c.l.b16 %v183
    %v904 = vunpack.c.h.b16 %v183
    %v905 = vunpack.c.l.b16 %v184
    %v906 = vunpack.c.h.b16 %v184
    %v907 = vunpack.c.l.b16 %v185
    %v908 = vunpack.c.h.b16 %v185
    %v909 = vunpack.c.l.b16 %v186
    %v910 = vunpack.c.h.b16 %v186
    %v911 = vunpack.c.l.b16 %v187
    %v912 = vunpack.c.h.b16 %v187
    %v913 = vunpack.c.l.b16 %v188
    %v914 = vunpack.c.h.b16 %v188
    %v915 = vunpack.c.l.b16 %v189
    %v916 = vunpack.c.h.b16 %v189
    %v917 = vunpack.c.l.b16 %v190
    %v918 = vunpack.c.h.b16 %v190
    %v919 = vunpack.c.l.b16 %v191
    %v920 = vunpack.c.h.b16 %v191
    %v921 = vunpack.c.l.b16 %v192
    %v922 = vunpack.c.h.b16 %v192
    %v923 = vunpack.c.l.b16 %v193
    %v924 = vunpack.c.h.b16 %v193
    %v925 = vunpack.c.l.b16 %v194
    %v926 = vunpack.c.h.b16 %v194
    %v927 = vunpack.c.l.b16 %v195
    %v928 = vunpack.c.h.b16 %v195
    %v929 = vunpack.c.l.b16 %v196
    %v930 = vunpack.c.h.b16 %v196
    %v931 = vunpack.c.l.b16 %v197
    %v932 = vunpack.c.h.b16 %v197
    %v933 = vunpack.c.l.b16 %v198
    %v934 = vunpack.c.h.b16 %v198
    %v935 = vunpack.c.l.b16 %v199
    %v936 = vunpack.c.h.b16 %v199
    %v937 = vunpack.c.l.b16 %v200
    %v938 = vunpack.c.h.b16 %v200
    %v939 = vunpack.c.l.b16 %v201
    %v940 = vunpack.c.h.b16 %v201
    %v941 = vunpack.c.l.b16 %v202
    %v942 = vunpack.c.h.b16 %v202
    %v943 = vunpack.c.l.b16 %v203
    %v944 = vunpack.c.h.b16 %v203
    %v945 = vunpack.c.l.b16 %v204
    %v946 = vunpack.c.h.b16 %v204
    %v947 = vunpack.c.l.b16 %v205
    %v948 = vunpack.c.h.b16 %v205
    %v949 = vunpack.c.l.b16 %v206
    %v950 = vunpack.c.h.b16 %v206
    %v951 = vunpack.c.l.b16 %v207
    %v952 = vunpack.c.h.b16 %v207
    %v953 = vunpack.c.l.b16 %v208
    %v954 = vunpack.c.h.b16 %v208
    %v955 = vunpack.c.l.b16 %v209
    %v956 = vunpack.c.h.b16 %v209
    %v957 = vunpack.c.l.b16 %v210
    %v958 = vunpack.c.h.b16 %v210
    %v959 = vunpack.c.l.b16 %v211
    %v960 = vunpack.c.h.b16 %v211
    %v961 = vunpack.c.l.b16 %v212
    %v962 = vunpack.c.h.b16 %v212
    %v963 = vunpack.c.l.b16 %v213
    %v964 = vunpack.c.h.b16 %v213
    %v965 = vunpack.c.l.b16 %v214
    %v966 = vunpack.c.h.b16 %v214
    %v967 = vunpack.c.l.b16 %v215
    %v968 = vunpack.c.h.b16 %v215
    %v969 = vunpack.c.l.b16 %v216
    %v970 = vunpack.c.h.b16 %v216
    %v971 = vunpack.c.l.b16 %v217
    %v972 = vunpack.c.h.b16 %v217
    %v973 = vunpack.c.l.b16 %v218
    %v974 = vunpack.c.h.b16 %v218
    %v975 = vunpack.c.l.b16 %v219
    %v976 = vunpack.c.h.b16 %v219
    %v977 = vunpack.c.l.b16 %v220
    %v978 = vunpack.c.h.b16 %v220
    %v979 = vunpack.c.l.b16 %v221
    %v980 = vunpack.c.h.b16 %v221
    %v981 = vunpack.c.l.b16 %v222
    %v982 = vunpack.c.h.b16 %v222
    %v983 = vunpack.c.l.b16 %v223
    %v984 = vunpack.c.h.b16 %v223
    %v985 = vunpack.c.l.b16 %v224
    %v986 = vunpack.c.h.b16 %v224
    %v987 = vunpack.c.l.b16 %v225
    %v988 = vunpack.c.h.b16 %v225
    %v989 = vunpack.c.l.b16 %v226
    %v990 = vunpack.c.h.b16 %v226
    %v991 = vunpack.c.l.b16 %v227
    %v992 = vunpack.c.h.b16 %v227
    %v993 = vunpack.c.l.b16 %v228
    %v994 = vunpack.c.h.b16 %v228
    %v995 = vunpack.c.l.b16 %v229
    %v996 = vunpack.c.h.b16 %v229
    %v997 = vunpack.c.l.b16 %v230
    %v998 = vunpack.c.h.b16 %v230
    %v999 = vpack.c.b16 %v627, %v615
    %v1000 = vpack.c.b16 %v628, %v616
    %v1001 = vpack.c.b16 %v629, %v617
    %v1002 = vpack.c.b16 %v630, %v618
    %v1003 = vpack.c.b16 %v631, %v619
    %v1004 = vpack.c.b16 %v632, %v620
    %v1005 = vpack.c.b16 %v633, %v621
    %v1006 = vpack.c.b16 %v634, %v622
    %v1007 = vpack.c.b16 %v635, %v623
    %v1008 = vpack.c.b16 %v636, %v624
    %v1009 = vpack.c.b16 %v637, %v625
    %v1010 = vpack.c.b16 %v638, %v626
    %v1011 = vpack.c.b16 %v651, %v639
    %v1012 = vpack.c.b16 %v652, %v640
    %v1013 = vpack.c.b16 %v653, %v641
    %v1014 = vpack.c.b16 %v654, %v642
    %v1015 = vpack.c.b16 %v655, %v643
    %v1016 = vpack.c.b16 %v656, %v644
    %v1017 = vpack.c.b16 %v657, %v645
    %v1018 = vpack.c.b16 %v658, %v646
    %v1019 = vpack.c.b16 %v659, %v647
    %v1020 = vpack.c.b16 %v660, %v648
    %v1021 = vpack.c.b16 %v661, %v649
    %v1022 = vpack.c.b16 %v662, %v650
    %v1023 = vpack.c.b16 %v675, %v663
    %v1024 = vpack.c.b16 %v676, %v664
    %v1025 = vpack.c.b16 %v677, %v665
    %v1026 = vpack.c.b16 %v678, %v666
    %v1027 = vpack.c.b16 %v679, %v667
    %v1028 = vpack.c.b16 %v680, %v668
    %v1029 = vpack.c.b16 %v681, %v669
    %v1030 = vpack.c.b16 %v682, %v670
    %v1031 = vpack.c.b16 %v683, %v671
    %v1032 = vpack.c.b16 %v684, %v672
    %v1033 = vpack.c.b16 %v685, %v673
    %v1034 = vpack.c.b16 %v686, %v674
    %v1035 = vpack.c.b16 %v699, %v687
    %v1036 = vpack.c.b16 %v700, %v688
    %v1037 = vpack.c.b16 %v701, %v689
    %v1038 = vpack.c.b16 %v702, %v690
    %v1039 = vpack.c.b16 %v703, %v691
    %v1040 = vpack.c.b16 %v704, %v692
    %v1041 = vpack.c.b16 %v705, %v693
    %v1042 = vpack.c.b16 %v706, %v694
    %v1043 = vpack.c.b16 %v707, %v695
    %v1044 = vpack.c.b16 %v708, %v696
    %v1045 = vpack.c.b16 %v709, %v697
    %v1046 = vpack.c.b16 %v710, %v698
    %v1047 = vpack.c.b16 %v723, %v711
    %v1048 = vpack.c.b16 %v724, %v712
    %v1049 = vpack.c.b16 %v725, %v713
    %v1050 = vpack.c.b16 %v726, %v714
    %v1051 = vpack.c.b16 %v727, %v715
    %v1052 = vpack.c.b16 %v728, %v716
    %v1053 = vpack.c.b16 %v729, %v717
    %v1054 = vpack.c.b16 %v730, %v718
    %v1055 = vpack.c.b16 %v731, %v719
    %v1056 = vpack.c.b16 %v732, %v720
    %v1057 = vpack.c.b16 %v733, %v721
    %v1058 = vpack.c.b16 %v734, %v722
    %v1059 = vpack.c.b16 %v747, %v735
    %v1060 = vpack.c.b16 %v748, %v736
    %v1061 = vpack.c.b16 %v749, %v737
    %v1062 = vpack.c.b16 %v750, %v738
    %v1063 = vpack.c.b16 %v751, %v739
    %v1064 = vpack.c.b16 %v752, %v740
    %v1065 = vpack.c.b16 %v753, %v741
    %v1066 = vpack.c.b16 %v754, %v742
    %v1067 = vpack.c.b16 %v755, %v743
    %v1068 = vpack.c.b16 %v756, %v744
    %v1069 = vpack.c.b16 %v757, %v745
    %v1070 = vpack.c.b16 %v758, %v746
    %v1071 = vpack.c.b16 %v771, %v759
    %v1072 = vpack.c.b16 %v772, %v760
    %v1073 = vpack.c.b16 %v773, %v761
    %v1074 = vpack.c.b16 %v774, %v762
    %v1075 = vpack.c.b16 %v775, %v763
    %v1076 = vpack.c.b16 %v776, %v764
    %v1077 = vpack.c.b16 %v777, %v765
    %v1078 = vpack.c.b16 %v778, %v766
    %v1079 = vpack.c.b16 %v779, %v767
    %v1080 = vpack.c.b16 %v780, %v768
    %v1081 = vpack.c.b16 %v781, %v769
    %v1082 = vpack.c.b16 %v782, %v770
    %v1083 = vpack.c.b16 %v795, %v783
    %v1084 = vpack.c.b16 %v796, %v784
    %v1085 = vpack.c.b16 %v797, %v785
    %v1086 = vpack.c.b16 %v798, %v786
    %v1087 = vpack.c.b16 %v799, %v787
    %v1088 = vpack.c.b16 %v800, %v788
    %v1089 = vpack.c.b16 %v801, %v789
    %v1090 = vpack.c.b16 %v802, %v790
    %v1091 = vpack.c.b16 %v803, %v791
    %v1092 = vpack.c.b16 %v804, %v792
    %v1093 = vpack.c.b16 %v805, %v793
    %v1094 = vpack.c.b16 %v806, %v794
    %v1095 = vpack.c.b16 %v819, %v807
    %v1096 = vpack.c.b16 %v820, %v808
    %v1097 = vpack.c.b16 %v821, %v809
    %v1098 = vpack.c.b16 %v822, %v810
    %v1099 = vpack.c.b16 %v823, %v811
    %v1100 = vpack.c.b16 %v824, %v812
    %v1101 = vpack.c.b16 %v825, %v813
    %v1102 = vpack.c.b16 %v826, %v814
    %v1103 = vpack.c.b16 %v827, %v815
    %v1104 = vpack.c.b16 %v828, %v816
    %v1105 = vpack.c.b16 %v829, %v817
    %v1106 = vpack.c.b16 %v830, %v818
    %v1107 = vpack.c.b16 %v843, %v831
    %v1108 = vpack.c.b16 %v844, %v832
    %v1109 = vpack.c.b16 %v845, %v833
    %v1110 = vpack.c.b16 %v846, %v834
    %v1111 = vpack.c.b16 %v847, %v835
    %v1112 = vpack.c.b16 %v848, %v836
    %v1113 = vpack.c.b16 %v849, %v837
    %v1114 = vpack.c.b16 %v850, %v838
    %v1115 = vpack.c.b16 %v851, %v839
    %v1116 = vpack.c.b16 %v852, %v840
    %v1117 = vpack.c.b16 %v853, %v841
    %v1118 = vpack.c.b16 %v854, %v842
    %v1119 = vpack.c.b16 %v867, %v855
    %v1120 = vpack.c.b16 %v868, %v856
    %v1121 = vpack.c.b16 %v869, %v857
    %v1122 = vpack.c.b16 %v870, %v858
    %v1123 = vpack.c.b16 %v871, %v859
    %v1124 = vpack.c.b16 %v872, %v860
    %v1125 = vpack.c.b16 %v873, %v861
    %v1126 = vpack.c.b16 %v874, %v862
    %v1127 = vpack.c.b16 %v875, %v863
    %v1128 = vpack.c.b16 %v876, %v864
    %v1129 = vpack.c.b16 %v877, %v865
    %v1130 = vpack.c.b16 %v878, %v866
    %v1131 = vpack.c.b16 %v891, %v879
    %v1132 = vpack.c.b16 %v892, %v880
    %v1133 = vpack.c.b16 %v893, %v881
    %v1134 = vpack.c.b16 %v894, %v882
    %v1135 = vpack.c.b16 %v895, %v883
    %v1136 = vpack.c.b16 %v896, %v884
    %v1137 = vpack.c.b16 %v897, %v885
    %v1138 = vpack.c.b16 %v898, %v886
    %v1139 = vpack.c.b16 %v899, %v887
    %v1140 = vpack.c.b16 %v900, %v888
    %v1141 = vpack.c.b16 %v901, %v889
    %v1142 = vpack.c.b16 %v902, %v890
    %v1143 = vpack.c.b16 %v915, %v903
    %v1144 = vpack.c.b16 %v916, %v904
    %v1145 = vpack.c.b16 %v917, %v905
    %v1146 = vpack.c.b16 %v918, %v906
    %v1147 = vpack.c.b16 %v919, %v907
    %v1148 = vpack.c.b16 %v920, %v908
    %v1149 = vpack.c.b16 %v921, %v909
    %v1150 = vpack.c.b16 %v922, %v910
    %v1151 = vpack.c.b16 %v923, %v911
    %v1152 = vpack.c.b16 %v924, %v912
    %v1153 = vpack.c.b16 %v925, %v913
    %v1154 = vpack.c.b16 %v926, %v914
    %v1155 = vpack.c.b16 %v939, %v927
    %v1156 = vpack.c.b16 %v940, %v928
    %v1157 = vpack.c.b16 %v941, %v929
    %v1158 = vpack.c.b16 %v942, %v930
    %v1159 = vpack.c.b16 %v943, %v931
    %v1160 = vpack.c.b16 %v944, %v932
    %v1161 = vpack.c.b16 %v945, %v933
    %v1162 = vpack.c.b16 %v946, %v934
    %v1163 = vpack.c.b16 %v947, %v935
    %v1164 = vpack.c.b16 %v948, %v936
    %v1165 = vpack.c.b16 %v949, %v937
    %v1166 = vpack.c.b16 %v950, %v938
    %v1167 = vpack.c.b16 %v963, %v951
    %v1168 = vpack.c.b16 %v964, %v952
    %v1169 = vpack.c.b16 %v965, %v953
    %v1170 = vpack.c.b16 %v966, %v954
    %v1171 = vpack.c.b16 %v967, %v955
    %v1172 = vpack.c.b16 %v968, %v956
    %v1173 = vpack.c.b16 %v969, %v957
    %v1174 = vpack.c.b16 %v970, %v958
    %v1175 = vpack.c.b16 %v971, %v959
    %v1176 = vpack.c.b16 %v972, %v960
    %v1177 = vpack.c.b16 %v973, %v961
    %v1178 = vpack.c.b16 %v974, %v962
    %v1179 = vpack.c.b16 %v987, %v975
    %v1180 = vpack.c.b16 %v988, %v976
    %v1181 = vpack.c.b16 %v989, %v977
    %v1182 = vpack.c.b16 %v990, %v978
    %v1183 = vpack.c.b16 %v991, %v979
    %v1184 = vpack.c.b16 %v992, %v980
    %v1185 = vpack.c.b16 %v993, %v981
    %v1186 = vpack.c.b16 %v994, %v982
    %v1187 = vpack.c.b16 %v995, %v983
    %v1188 = vpack.c.b16 %v996, %v984
    %v1189 = vpack.c.b16 %v997, %v985
    %v1190 = vpack.c.b16 %v998, %v986
    %v1575 = vunpack.c.l.b16 %v231
    %v1576 = vunpack.c.h.b16 %v231
    %v1577 = vunpack.c.l.b16 %v232
    %v1578 = vunpack.c.h.b16 %v232
    %v1579 = vunpack.c.l.b16 %v233
    %v1580 = vunpack.c.h.b16 %v233
    %v1581 = vunpack.c.l.b16 %v234
    %v1582 = vunpack.c.h.b16 %v234
    %v1583 = vunpack.c.l.b16 %v235
    %v1584 = vunpack.c.h.b16 %v235
    %v1585 = vunpack.c.l.b16 %v236
    %v1586 = vunpack.c.h.b16 %v236
    %v1587 = vunpack.c.l.b16 %v237
    %v1588 = vunpack.c.h.b16 %v237
    %v1589 = vunpack.c.l.b16 %v238
    %v1590 = vunpack.c.h.b16 %v238
    %v1591 = vunpack.c.l.b16 %v239
    %v1592 = vunpack.c.h.b16 %v239
    %v1593 = vunpack.c.l.b16 %v240
    %v1594 = vunpack.c.h.b16 %v240
    %v1595 = vunpack.c.l.b16 %v241
    %v1596 = vunpack.c.h.b16 %v241
    %v1597 = vunpack.c.l.b16 %v242
    %v1598 = vunpack.c.h.b16 %v242
    %v1599 = vunpack.c.l.b16 %v243
    %v1600 = vunpack.c.h.b16 %v243
    %v1601 = vunpack.c.l.b16 %v244
    %v1602 = vunpack.c.h.b16 %v244
    %v1603 = vunpack.c.l.b16 %v245
    %v1604 = vunpack.c.h.b16 %v245
    %v1605 = vunpack.c.l.b16 %v246
    %v1606 = vunpack.c.h.b16 %v246
    %v1607 = vunpack.c.l.b16 %v247
    %v1608 = vunpack.c.h.b16 %v247
    %v1609 = vunpack.c.l.b16 %v248
    %v1610 = vunpack.c.h.b16 %v248
    %v1611 = vunpack.c.l.b16 %v249
    %v1612 = vunpack.c.h.b16 %v249
    %v1613 = vunpack.c.l.b16 %v250
    %v1614 = vunpack.c.h.b16 %v250
    %v1615 = vunpack.c.l.b16 %v251
    %v1616 = vunpack.c.h.b16 %v251
    %v1617 = vunpack.c.l.b16 %v252
    %v1618 = vunpack.c.h.b16 %v252
    %v1619 = vunpack.c.l.b16 %v253
    %v1620 = vunpack.c.h.b16 %v253
    %v1621 = vunpack.c.l.b16 %v254
    %v1622 = vunpack.c.h.b16 %v254
    %v1623 = vunpack.c.l.b16 %v255
    %v1624 = vunpack.c.h.b16 %v255
    %v1625 = vunpack.c.l.b16 %v256
    %v1626 = vunpack.c.h.b16 %v256
    %v1627 = vunpack.c.l.b16 %v257
    %v1628 = vunpack.c.h.b16 %v257
    %v1629 = vunpack.c.l.b16 %v258
    %v1630 = vunpack.c.h.b16 %v258
    %v1631 = vunpack.c.l.b16 %v259
    %v1632 = vunpack.c.h.b16 %v259
    %v1633 = vunpack.c.l.b16 %v260
    %v1634 = vunpack.c.h.b16 %v260
    %v1635 = vunpack.c.l.b16 %v261
    %v1636 = vunpack.c.h.b16 %v261
    %v1637 = vunpack.c.l.b16 %v262
    %v1638 = vunpack.c.h.b16 %v262
    %v1639 = vunpack.c.l.b16 %v263
    %v1640 = vunpack.c.h.b16 %v263
    %v1641 = vunpack.c.l.b16 %v264
    %v1642 = vunpack.c.h.b16 %v264
    %v1643 = vunpack.c.l.b16 %v265
    %v1644 = vunpack.c.h.b16 %v265
    %v1645 = vunpack.c.l.b16 %v266
    %v1646 = vunpack.c.h.b16 %v266
    %v1647 = vunpack.c.l.b16 %v267
    %v1648 = vunpack.c.h.b16 %v267
    %v1649 = vunpack.c.l.b16 %v268
    %v1650 = vunpack.c.h.b16 %v268
    %v1651 = vunpack.c.l.b16 %v269
    %v1652 = vunpack.c.h.b16 %v269
    %v1653 = vunpack.c.l.b16 %v270
    %v1654 = vunpack.c.h.b16 %v270
    %v1655 = vunpack.c.l.b16 %v271
    %v1656 = vunpack.c.h.b16 %v271
    %v1657 = vunpack.c.l.b16 %v272
    %v1658 = vunpack.c.h.b16 %v272
    %v1659 = vunpack.c.l.b16 %v273
    %v1660 = vunpack.c.h.b16 %v273
    %v1661 = vunpack.c.l.b16 %v274
    %v1662 = vunpack.c.h.b16 %v274
    %v1663 = vunpack.c.l.b16 %v275
    %v1664 = vunpack.c.h.b16 %v275
    %v1665 = vunpack.c.l.b16 %v276
    %v1666 = vunpack.c.h.b16 %v276
    %v1667 = vunpack.c.l.b16 %v277
    %v1668 = vunpack.c.h.b16 %v277
    %v1669 = vunpack.c.l.b16 %v278
    %v1670 = vunpack.c.h.b16 %v278
    %v1671 = vunpack.c.l.b16 %v279
    %v1672 = vunpack.c.h.b16 %v279
    %v1673 = vunpack.c.l.b16 %v280
    %v1674 = vunpack.c.h.b16 %v280
    %v1675 = vunpack.c.l.b16 %v281
    %v1676 = vunpack.c.h.b16 %v281
    %v1677 = vunpack.c.l.b16 %v282
    %v1678 = vunpack.c.h.b16 %v282
    %v1679 = vunpack.c.l.b16 %v283
    %v1680 = vunpack.c.h.b16 %v283
    %v1681 = vunpack.c.l.b16 %v284
    %v1682 = vunpack.c.h.b16 %v284
    %v1683 = vunpack.c.l.b16 %v285
    %v1684 = vunpack.c.h.b16 %v285
    %v1685 = vunpack.c.l.b16 %v286
    %v1686 = vunpack.c.h.b16 %v286
    %v1687 = vunpack.c.l.b16 %v287
    %v1688 = vunpack.c.h.b16 %v287
    %v1689 = vunpack.c.l.b16 %v288
    %v1690 = vunpack.c.h.b16 %v288
    %v1691 = vunpack.c.l.b16 %v289
    %v1692 = vunpack.c.h.b16 %v289
    %v1693 = vunpack.c.l.b16 %v290
    %v1694 = vunpack.c.h.b16 %v290
    %v1695 = vunpack.c.l.b16 %v291
    %v1696 = vunpack.c.h.b16 %v291
    %v1697 = vunpack.c.l.b16 %v292
    %v1698 = vunpack.c.h.b16 %v292
    %v1699 = vunpack.c.l.b16 %v293
    %v1700 = vunpack.c.h.b16 %v293
    %v1701 = vunpack.c.l.b16 %v294
    %v1702 = vunpack.c.h.b16 %v294
    %v1703 = vunpack.c.l.b16 %v295
    %v1704 = vunpack.c.h.b16 %v295
    %v1705 = vunpack.c.l.b16 %v296
    %v1706 = vunpack.c.h.b16 %v296
    %v1707 = vunpack.c.l.b16 %v297
    %v1708 = vunpack.c.h.b16 %v297
    %v1709 = vunpack.c.l.b16 %v298
    %v1710 = vunpack.c.h.b16 %v298
    %v1711 = vunpack.c.l.b16 %v299
    %v1712 = vunpack.c.h.b16 %v299
    %v1713 = vunpack.c.l.b16 %v300
    %v1714 = vunpack.c.h.b16 %v300
    %v1715 = vunpack.c.l.b16 %v301
    %v1716 = vunpack.c.h.b16 %v301
    %v1717 = vunpack.c.l.b16 %v302
    %v1718 = vunpack.c.h.b16 %v302
    %v1719 = vunpack.c.l.b16 %v303
    %v1720 = vunpack.c.h.b16 %v303
    %v1721 = vunpack.c.l.b16 %v304
    %v1722 = vunpack.c.h.b16 %v304
    %v1723 = vunpack.c.l.b16 %v305
    %v1724 = vunpack.c.h.b16 %v305
    %v1725 = vunpack.c.l.b16 %v306
    %v1726 = vunpack.c.h.b16 %v306
    %v1727 = vunpack.c.l.b16 %v307
    %v1728 = vunpack.c.h.b16 %v307
    %v1729 = vunpack.c.l.b16 %v308
    %v1730 = vunpack.c.h.b16 %v308
    %v1731 = vunpack.c.l.b16 %v309
    %v1732 = vunpack.c.h.b16 %v309
    %v1733 = vunpack.c.l.b16 %v310
    %v1734 = vunpack.c.h.b16 %v310
    %v1735 = vunpack.c.l.b16 %v311
    %v1736 = vunpack.c.h.b16 %v311
    %v1737 = vunpack.c.l.b16 %v312
    %v1738 = vunpack.c.h.b16 %v312
    %v1739 = vunpack.c.l.b16 %v313
    %v1740 = vunpack.c.h.b16 %v313
    %v1741 = vunpack.c.l.b16 %v314
    %v1742 = vunpack.c.h.b16 %v314
    %v1743 = vunpack.c.l.b16 %v315
    %v1744 = vunpack.c.h.b16 %v315
    %v1745 = vunpack.c.l.b16 %v316
    %v1746 = vunpack.c.h.b16 %v316
    %v1747 = vunpack.c.l.b16 %v317
    %v1748 = vunpack.c.h.b16 %v317
    %v1749 = vunpack.c.l.b16 %v318
    %v1750 = vunpack.c.h.b16 %v318
    %v1751 = vunpack.c.l.b16 %v319
    %v1752 = vunpack.c.h.b16 %v319
    %v1753 = vunpack.c.l.b16 %v320
    %v1754 = vunpack.c.h.b16 %v320
    %v1755 = vunpack.c.l.b16 %v321
    %v1756 = vunpack.c.h.b16 %v321
    %v1757 = vunpack.c.l.b16 %v322
    %v1758 = vunpack.c.h.b16 %v322
    %v1759 = vunpack.c.l.b16 %v323
    %v1760 = vunpack.c.h.b16 %v323
    %v1761 = vunpack.c.l.b16 %v324
    %v1762 = vunpack.c.h.b16 %v324
    %v1763 = vunpack.c.l.b16 %v325
    %v1764 = vunpack.c.h.b16 %v325
    %v1765 = vunpack.c.l.b16 %v326
    %v1766 = vunpack.c.h.b16 %v326
    %v1767 = vunpack.c.l.b16 %v327
    %v1768 = vunpack.c.h.b16 %v327
    %v1769 = vunpack.c.l.b16 %v328
    %v1770 = vunpack.c.h.b16 %v328
    %v1771 = vunpack.c.l.b16 %v329
    %v1772 = vunpack.c.h.b16 %v329
    %v1773 = vunpack.c.l.b16 %v330
    %v1774 = vunpack.c.h.b16 %v330
    %v1775 = vunpack.c.l.b16 %v331
    %v1776 = vunpack.c.h.b16 %v331
    %v1777 = vunpack.c.l.b16 %v332
    %v1778 = vunpack.c.h.b16 %v332
    %v1779 = vunpack.c.l.b16 %v333
    %v1780 = vunpack.c.h.b16 %v333
    %v1781 = vunpack.c.l.b16 %v334
    %v1782 = vunpack.c.h.b16 %v334
    %v1783 = vunpack.c.l.b16 %v335
    %v1784 = vunpack.c.h.b16 %v335
    %v1785 = vunpack.c.l.b16 %v336
    %v1786 = vunpack.c.h.b16 %v336
    %v1787 = vunpack.c.l.b16 %v337
    %v1788 = vunpack.c.h.b16 %v337
    %v1789 = vunpack.c.l.b16 %v338
    %v1790 = vunpack.c.h.b16 %v338
    %v1791 = vunpack.c.l.b16 %v339
    %v1792 = vunpack.c.h.b16 %v339
    %v1793 = vunpack.c.l.b16 %v340
    %v1794 = vunpack.c.h.b16 %v340
    %v1795 = vunpack.c.l.b16 %v341
    %v1796 = vunpack.c.h.b16 %v341
    %v1797 = vunpack.c.l.b16 %v342
    %v1798 = vunpack.c.h.b16 %v342
    %v1799 = vunpack.c.l.b16 %v343
    %v1800 = vunpack.c.h.b16 %v343
    %v1801 = vunpack.c.l.b16 %v344
    %v1802 = vunpack.c.h.b16 %v344
    %v1803 = vunpack.c.l.b16 %v345
    %v1804 = vunpack.c.h.b16 %v345
    %v1805 = vunpack.c.l.b16 %v346
    %v1806 = vunpack.c.h.b16 %v346
    %v1807 = vunpack.c.l.b16 %v347
    %v1808 = vunpack.c.h.b16 %v347
    %v1809 = vunpack.c.l.b16 %v348
    %v1810 = vunpack.c.h.b16 %v348
    %v1811 = vunpack.c.l.b16 %v349
    %v1812 = vunpack.c.h.b16 %v349
    %v1813 = vunpack.c.l.b16 %v350
    %v1814 = vunpack.c.h.b16 %v350
    %v1815 = vunpack.c.l.b16 %v351
    %v1816 = vunpack.c.h.b16 %v351
    %v1817 = vunpack.c.l.b16 %v352
    %v1818 = vunpack.c.h.b16 %v352
    %v1819 = vunpack.c.l.b16 %v353
    %v1820 = vunpack.c.h.b16 %v353
    %v1821 = vunpack.c.l.b16 %v354
    %v1822 = vunpack.c.h.b16 %v354
    %v1823 = vunpack.c.l.b16 %v355
    %v1824 = vunpack.c.h.b16 %v355
    %v1825 = vunpack.c.l.b16 %v356
    %v1826 = vunpack.c.h.b16 %v356
    %v1827 = vunpack.c.l.b16 %v357
    %v1828 = vunpack.c.h.b16 %v357
    %v1829 = vunpack.c.l.b16 %v358
    %v1830 = vunpack.c.h.b16 %v358
    %v1831 = vunpack.c.l.b16 %v359
    %v1832 = vunpack.c.h.b16 %v359
    %v1833 = vunpack.c.l.b16 %v360
    %v1834 = vunpack.c.h.b16 %v360
    %v1835 = vunpack.c.l.b16 %v361
    %v1836 = vunpack.c.h.b16 %v361
    %v1837 = vunpack.c.l.b16 %v362
    %v1838 = vunpack.c.h.b16 %v362
    %v1839 = vunpack.c.l.b16 %v363
    %v1840 = vunpack.c.h.b16 %v363
    %v1841 = vunpack.c.l.b16 %v364
    %v1842 = vunpack.c.h.b16 %v364
    %v1843 = vunpack.c.l.b16 %v365
    %v1844 = vunpack.c.h.b16 %v365
    %v1845 = vunpack.c.l.b16 %v366
    %v1846 = vunpack.c.h.b16 %v366
    %v1847 = vunpack.c.l.b16 %v367
    %v1848 = vunpack.c.h.b16 %v367
    %v1849 = vunpack.c.l.b16 %v368
    %v1850 = vunpack.c.h.b16 %v368
    %v1851 = vunpack.c.l.b16 %v369
    %v1852 = vunpack.c.h.b16 %v369
    %v1853 = vunpack.c.l.b16 %v370
    %v1854 = vunpack.c.h.b16 %v370
    %v1855 = vunpack.c.l.b16 %v371
    %v1856 = vunpack.c.h.b16 %v371
    %v1857 = vunpack.c.l.b16 %v372
    %v1858 = vunpack.c.h.b16 %v372
    %v1859 = vunpack.c.l.b16 %v373
    %v1860 = vunpack.c.h.b16 %v373
    %v1861 = vunpack.c.l.b16 %v374
    %v1862 = vunpack.c.h.b16 %v374
    %v1863 = vunpack.c.l.b16 %v375
    %v1864 = vunpack.c.h.b16 %v375
    %v1865 = vunpack.c.l.b16 %v376
    %v1866 = vunpack.c.h.b16 %v376
    %v1867 = vunpack.c.l.b16 %v377
    %v1868 = vunpack.c.h.b16 %v377
    %v1869 = vunpack.c.l.b16 %v378
    %v1870 = vunpack.c.h.b16 %v378
    %v1871 = vunpack.c.l.b16 %v379
    %v1872 = vunpack.c.h.b16 %v379
    %v1873 = vunpack.c.l.b16 %v380
    %v1874 = vunpack.c.h.b16 %v380
    %v1875 = vunpack.c.l.b16 %v381
    %v1876 = vunpack.c.h.b16 %v381
    %v1877 = vunpack.c.l.b16 %v382
    %v1878 = vunpack.c.h.b16 %v382
    %v1879 = vunpack.c.l.b16 %v383
    %v1880 = vunpack.c.h.b16 %v383
    %v1881 = vunpack.c.l.b16 %v384
    %v1882 = vunpack.c.h.b16 %v384
    %v1883 = vunpack.c.l.b16 %v385
    %v1884 = vunpack.c.h.b16 %v385
    %v1885 = vunpack.c.l.b16 %v386
    %v1886 = vunpack.c.h.b16 %v386
    %v1887 = vunpack.c.l.b16 %v387
    %v1888 = vunpack.c.h.b16 %v387
    %v1889 = vunpack.c.l.b16 %v388
    %v1890 = vunpack.c.h.b16 %v388
    %v1891 = vunpack.c.l.b16 %v389
    %v1892 = vunpack.c.h.b16 %v389
    %v1893 = vunpack.c.l.b16 %v390
    %v1894 = vunpack.c.h.b16 %v390
    %v1895 = vunpack.c.l.b16 %v391
    %v1896 = vunpack.c.h.b16 %v391
    %v1897 = vunpack.c.l.b16 %v392
    %v1898 = vunpack.c.h.b16 %v392
    %v1899 = vunpack.c.l.b16 %v393
    %v1900 = vunpack.c.h.b16 %v393
    %v1901 = vunpack.c.l.b16 %v394
    %v1902 = vunpack.c.h.b16 %v394
    %v1903 = vunpack.c.l.b16 %v395
    %v1904 = vunpack.c.h.b16 %v395
    %v1905 = vunpack.c.l.b16 %v396
    %v1906 = vunpack.c.h.b16 %v396
    %v1907 = vunpack.c.l.b16 %v397
    %v1908 = vunpack.c.h.b16 %v397
    %v1909 = vunpack.c.l.b16 %v398
    %v1910 = vunpack.c.h.b16 %v398
    %v1911 = vunpack.c.l.b16 %v399
    %v1912 = vunpack.c.h.b16 %v399
    %v1913 = vunpack.c.l.b16 %v400
    %v1914 = vunpack.c.h.b16 %v400
    %v1915 = vunpack.c.l.b16 %v401
    %v1916 = vunpack.c.h.b16 %v401
    %v1917 = vunpack.c.l.b16 %v402
    %v1918 = vunpack.c.h.b16 %v402
    %v1919 = vunpack.c.l.b16 %v403
    %v1920 = vunpack.c.h.b16 %v403
    %v1921 = vunpack.c.l.b16 %v404
    %v1922 = vunpack.c.h.b16 %v404
    %v1923 = vunpack.c.l.b16 %v405
    %v1924 = vunpack.c.h.b16 %v405
    %v1925 = vunpack.c.l.b16 %v406
    %v1926 = vunpack.c.h.b16 %v406
    %v1927 = vunpack.c.l.b16 %v407
    %v1928 = vunpack.c.h.b16 %v407
    %v1929 = vunpack.c.l.b16 %v408
    %v1930 = vunpack.c.h.b16 %v408
    %v1931 = vunpack.c.l.b16 %v409
    %v1932 = vunpack.c.h.b16 %v409
    %v1933 = vunpack.c.l.b16 %v410
    %v1934 = vunpack.c.h.b16 %v410
    %v1935 = vunpack.c.l.b16 %v411
    %v1936 = vunpack.c.h.b16 %v411
    %v1937 = vunpack.c.l.b16 %v412
    %v1938 = vunpack.c.h.b16 %v412
    %v1939 = vunpack.c.l.b16 %v413
    %v1940 = vunpack.c.h.b16 %v413
    %v1941 = vunpack.c.l.b16 %v414
    %v1942 = vunpack.c.h.b16 %v414
    %v1943 = vunpack.c.l.b16 %v415
    %v1944 = vunpack.c.h.b16 %v415
    %v1945 = vunpack.c.l.b16 %v416
    %v1946 = vunpack.c.h.b16 %v416
    %v1947 = vunpack.c.l.b16 %v417
    %v1948 = vunpack.c.h.b16 %v417
    %v1949 = vunpack.c.l.b16 %v418
    %v1950 = vunpack.c.h.b16 %v418
    %v1951 = vunpack.c.l.b16 %v419
    %v1952 = vunpack.c.h.b16 %v419
    %v1953 = vunpack.c.l.b16 %v420
    %v1954 = vunpack.c.h.b16 %v420
    %v1955 = vunpack.c.l.b16 %v421
    %v1956 = vunpack.c.h.b16 %v421
    %v1957 = vunpack.c.l.b16 %v422
    %v1958 = vunpack.c.h.b16 %v422
    %v1959 = vpack.c.b16 %v1577, %v1575
    %v1960 = vpack.c.b16 %v1578, %v1576
    %v1961 = vpack.c.b16 %v1581, %v1579
    %v1962 = vpack.c.b16 %v1582, %v1580
    %v1963 = vpack.c.b16 %v1585, %v1583
    %v1964 = vpack.c.b16 %v1586, %v1584
    %v1965 = vpack.c.b16 %v1589, %v1587
    %v1966 = vpack.c.b16 %v1590, %v1588
    %v1967 = vpack.c.b16 %v1593, %v1591
    %v1968 = vpack.c.b16 %v1594, %v1592
    %v1969 = vpack.c.b16 %v1597, %v1595
    %v1970 = vpack.c.b16 %v1598, %v1596
    %v1971 = vpack.c.b16 %v1601, %v1599
    %v1972 = vpack.c.b16 %v1602, %v1600
    %v1973 = vpack.c.b16 %v1605, %v1603
    %v1974 = vpack.c.b16 %v1606, %v1604
    %v1975 = vpack.c.b16 %v1609, %v1607
    %v1976 = vpack.c.b16 %v1610, %v1608
    %v1977 = vpack.c.b16 %v1613, %v1611
    %v1978 = vpack.c.b16 %v1614, %v1612
    %v1979 = vpack.c.b16 %v1617, %v1615
    %v1980 = vpack.c.b16 %v1618, %v1616
    %v1981 = vpack.c.b16 %v1621, %v1619
    %v1982 = vpack.c.b16 %v1622, %v1620
    %v1983 = vpack.c.b16 %v1625, %v1623
    %v1984 = vpack.c.b16 %v1626, %v1624
    %v1985 = vpack.c.b16 %v1629, %v1627
    %v1986 = vpack.c.b16 %v1630, %v1628
    %v1987 = vpack.c.b16 %v1633, %v1631
    %v1988 = vpack.c.b16 %v1634, %v1632
    %v1989 = vpack.c.b16 %v1637, %v1635
    %v1990 = vpack.c.b16 %v1638, %v1636
    %v1991 = vpack.c.b16 %v1641, %v1639
    %v1992 = vpack.c.b16 %v1642, %v1640
    %v1993 = vpack.c.b16 %v1645, %v1643
    %v1994 = vpack.c.b16 %v1646, %v1644
    %v1995 = vpack.c.b16 %v1649, %v1647
    %v1996 = vpack.c.b16 %v1650, %v1648
    %v1997 = vpack.c.b16 %v1653, %v1651
    %v1998 = vpack.c.b16 %v1654, %v1652
    %v1999 = vpack.c.b16 %v1657, %v1655
    %v2000 = vpack.c.b16 %v1658, %v1656
    %v2001 = vpack.c.b16 %v1661, %v1659
    %v2002 = vpack.c.b16 %v1662, %v1660
    %v2003 = vpack.c.b16 %v1665, %v1663
    %v2004 = vpack.c.b16 %v1666, %v1664
    %v2005 = vpack.c.b16 %v1669, %v1667
    %v2006 = vpack.c.b16 %v1670, %v1668
    %v2007 = vpack.c.b16 %v1673, %v1671
    %v2008 = vpack.c.b16 %v1674, %v1672
    %v2009 = vpack.c.b16 %v1677, %v1675
    %v2010 = vpack.c.b16 %v1678, %v1676
    %v2011 = vpack.c.b16 %v1681, %v1679
    %v2012 = vpack.c.b16 %v1682, %v1680
    %v2013 = vpack.c.b16 %v1685, %v1683
    %v2014 = vpack.c.b16 %v1686, %v1684
    %v2015 = vpack.c.b16 %v1689, %v1687
    %v2016 = vpack.c.b16 %v1690, %v1688
    %v2017 = vpack.c.b16 %v1693, %v1691
    %v2018 = vpack.c.b16 %v1694, %v1692
    %v2019 = vpack.c.b16 %v1697, %v1695
    %v2020 = vpack.c.b16 %v1698, %v1696
    %v2021 = vpack.c.b16 %v1701, %v1699
    %v2022 = vpack.c.b16 %v1702, %v1700
    %v2023 = vpack.c.b16 %v1705, %v1703
    %v2024 = vpack.c.b16 %v1706, %v1704
    %v2025 = vpack.c.b16 %v1709, %v1707
    %v2026 = vpack.c.b16 %v1710, %v1708
    %v2027 = vpack.c.b16 %v1713, %v1711
    %v2028 = vpack.c.b16 %v1714, %v1712
    %v2029 = vpack.c.b16 %v1717, %v1715
    %v2030 = vpack.c.b16 %v1718, %v1716
    %v2031 = vpack.c.b16 %v1721, %v1719
    %v2032 = vpack.c.b16 %v1722, %v1720
    %v2033 = vpack.c.b16 %v1725, %v1723
    %v2034 = vpack.c.b16 %v1726, %v1724
    %v2035 = vpack.c.b16 %v1729, %v1727
    %v2036 = vpack.c.b16 %v1730, %v1728
    %v2037 = vpack.c.b16 %v1733, %v1731
    %v2038 = vpack.c.b16 %v1734, %v1732
    %v2039 = vpack.c.b16 %v1737, %v1735
    %v2040 = vpack.c.b16 %v1738, %v1736
    %v2041 = vpack.c.b16 %v1741, %v1739
    %v2042 = vpack.c.b16 %v1742, %v1740
    %v2043 = vpack.c.b16 %v1745, %v1743
    %v2044 = vpack.c.b16 %v1746, %v1744
    %v2045 = vpack.c.b16 %v1749, %v1747
    %v2046 = vpack.c.b16 %v1750, %v1748
    %v2047 = vpack.c.b16 %v1753, %v1751
    %v2048 = vpack.c.b16 %v1754, %v1752
    %v2049 = vpack.c.b16 %v1757, %v1755
    %v2050 = vpack.c.b16 %v1758, %v1756
    %v2051 = vpack.c.b16 %v1761, %v1759
    %v2052 = vpack.c.b16 %v1762, %v1760
    %v2053 = vpack.c.b16 %v1765, %v1763
    %v2054 = vpack.c.b16 %v1766, %v1764
    %v2055 = vpack.c.b16 %v1769, %v1767
    %v2056 = vpack.c.b16 %v1770, %v1768
    %v2057 = vpack.c.b16 %v1773, %v1771
    %v2058 = vpack.c.b16 %v1774, %v1772
    %v2059 = vpack.c.b16 %v1777, %v1775
    %v2060 = vpack.c.b16 %v1778, %v1776
    %v2061 = vpack.c.b16 %v1781, %v1779
    %v2062 = vpack.c.b16 %v1782, %v1780
    %v2063 = vpack.c.b16 %v1785, %v1783
    %v2064 = vpack.c.b16 %v1786, %v1784
    %v2065 = vpack.c.b16 %v1789, %v1787
    %v2066 = vpack.c.b16 %v1790, %v1788
    %v2067 = vpack.c.b16 %v1793, %v1791
    %v2068 = vpack.c.b16 %v1794, %v1792
    %v2069 = vpack.c.b16 %v1797, %v1795
    %v2070 = vpack.c.b16 %v1798, %v1796
    %v2071 = vpack.c.b16 %v1801, %v1799
    %v2072 = vpack.c.b16 %v1802, %v1800
    %v2073 = vpack.c.b16 %v1805, %v1803
    %v2074 = vpack.c.b16 %v1806, %v1804
    %v2075 = vpack.c.b16 %v1809, %v1807
    %v2076 = vpack.c.b16 %v1810, %v1808
    %v2077 = vpack.c.b16 %v1813, %v1811
    %v2078 = vpack.c.b16 %v1814, %v1812
    %v2079 = vpack.c.b16 %v1817, %v1815
    %v2080 = vpack.c.b16 %v1818, %v1816
    %v2081 = vpack.c.b16 %v1821, %v1819
    %v2082 = vpack.c.b16 %v1822, %v1820
    %v2083 = vpack.c.b16 %v1825, %v1823
    %v2084 = vpack.c.b16 %v1826, %v1824
    %v2085 = vpack.c.b16 %v1829, %v1827
    %v2086 = vpack.c.b16 %v1830, %v1828
    %v2087 = vpack.c.b16 %v1833, %v1831
    %v2088 = vpack.c.b16 %v1834, %v1832
    %v2089 = vpack.c.b16 %v1837, %v1835
    %v2090 = vpack.c.b16 %v1838, %v1836
    %v2091 = vpack.c.b16 %v1841, %v1839
    %v2092 = vpack.c.b16 %v1842, %v1840
    %v2093 = vpack.c.b16 %v1845, %v1843
    %v2094 = vpack.c.b16 %v1846, %v1844
    %v2095 = vpack.c.b16 %v1849, %v1847
    %v2096 = vpack.c.b16 %v1850, %v1848
    %v2097 = vpack.c.b16 %v1853, %v1851
    %v2098 = vpack.c.b16 %v1854, %v1852
    %v2099 = vpack.c.b16 %v1857, %v1855
    %v2100 = vpack.c.b16 %v1858, %v1856
    %v2101 = vpack.c.b16 %v1861, %v1859
    %v2102 = vpack.c.b16 %v1862, %v1860
    %v2103 = vpack.c.b16 %v1865, %v1863
    %v2104 = vpack.c.b16 %v1866, %v1864
    %v2105 = vpack.c.b16 %v1869, %v1867
    %v2106 = vpack.c.b16 %v1870, %v1868
    %v2107 = vpack.c.b16 %v1873, %v1871
    %v2108 = vpack.c.b16 %v1874, %v1872
    %v2109 = vpack.c.b16 %v1877, %v1875
    %v2110 = vpack.c.b16 %v1878, %v1876
    %v2111 = vpack.c.b16 %v1881, %v1879
    %v2112 = vpack.c.b16 %v1882, %v1880
    %v2113 = vpack.c.b16 %v1885, %v1883
    %v2114 = vpack.c.b16 %v1886, %v1884
    %v2115 = vpack.c.b16 %v1889, %v1887
    %v2116 = vpack.c.b16 %v1890, %v1888
    %v2117 = vpack.c.b16 %v1893, %v1891
    %v2118 = vpack.c.b16 %v1894, %v1892
    %v2119 = vpack.c.b16 %v1897, %v1895
    %v2120 = vpack.c.b16 %v1898, %v1896
    %v2121 = vpack.c.b16 %v1901, %v1899
    %v2122 = vpack.c.b16 %v1902, %v1900
    %v2123 = vpack.c.b16 %v1905, %v1903
    %v2124 = vpack.c.b16 %v1906, %v1904
    %v2125 = vpack.c.b16 %v1909, %v1907
    %v2126 = vpack.c.b16 %v1910, %v1908
    %v2127 = vpack.c.b16 %v1913, %v1911
    %v2128 = vpack.c.b16 %v1914, %v1912
    %v2129 = vpack.c.b16 %v1917, %v1915
    %v2130 = vpack.c.b16 %v1918, %v1916
    %v2131 = vpack.c.b16 %v1921, %v1919
    %v2132 = vpack.c.b16 %v1922, %v1920
    %v2133 = vpack.c.b16 %v1925, %v1923
    %v2134 = vpack.c.b16 %v1926, %v1924
    %v2135 = vpack.c.b16 %v1929, %v1927
    %v2136 = vpack.c.b16 %v1930, %v1928
    %v2137 = vpack.c.b16 %v1933, %v1931
    %v2138 = vpack.c.b16 %v1934, %v1932
    %v2139 = vpack.c.b16 %v1937, %v1935
    %v2140 = vpack.c.b16 %v1938, %v1936
    %v2141 = vpack.c.b16 %v1941, %v1939
    %v2142 = vpack.c.b16 %v1942, %v1940
    %v2143 = vpack.c.b16 %v1945, %v1943
    %v2144 = vpack.c.b16 %v1946, %v1944
    %v2145 = vpack.c.b16 %v1949, %v1947
    %v2146 = vpack.c.b16 %v1950, %v1948
    %v2147 = vpack.c.b16 %v1953, %v1951
    %v2148 = vpack.c.b16 %v1954, %v1952
    %v2149 = vpack.c.b16 %v1957, %v1955
    %v2150 = vpack.c.b16 %v1958, %v1956
    %2343 = vmatprep.subr.bf16.mxu0 %v1960
    %2344 = vmatpush1.bf16.msra.mxu0 %v1959
    %2345 = vmatprep.subr.bf16.mxu0 %v1962
    %2346 = vmatpush1.bf16.msra.mxu0 %v1961
    %2347 = vmatprep.subr.bf16.mxu0 %v1964
    %2348 = vmatpush1.bf16.msra.mxu0 %v1963
    %2349 = vmatprep.subr.bf16.mxu0 %v1966
    %2350 = vmatpush1.bf16.msra.mxu0 %v1965
    %2351 = vmatprep.subr.bf16.mxu0 %v1968
    %2352 = vmatpush1.bf16.msra.mxu0 %v1967
    %2353 = vmatprep.subr.bf16.mxu0 %v1970
    %2354 = vmatpush1.bf16.msra.mxu0 %v1969
    %2355 = vmatprep.subr.bf16.mxu0 %v1972
    %2356 = vmatpush1.bf16.msra.mxu0 %v1971
    %2357 = vmatprep.subr.bf16.mxu0 %v1974
    %2358 = vmatpush1.bf16.msra.mxu0 %v1973
    %2359 = vmatprep.subr.bf16.mxu0 %v1976
    %2360 = vmatpush1.bf16.msra.mxu0 %v1975
    %2361 = vmatprep.subr.bf16.mxu0 %v1978
    %2362 = vmatpush1.bf16.msra.mxu0 %v1977
    %2363 = vmatprep.subr.bf16.mxu0 %v1980
    %2364 = vmatpush1.bf16.msra.mxu0 %v1979
    %2365 = vmatprep.subr.bf16.mxu0 %v1982
    %2366 = vmatpush1.bf16.msra.mxu0 %v1981
    %2367 = vmatprep.subr.bf16.mxu0 %v1984
    %2368 = vmatpush1.bf16.msra.mxu0 %v1983
    %2369 = vmatprep.subr.bf16.mxu0 %v1986
    %2370 = vmatpush1.bf16.msra.mxu0 %v1985
    %2371 = vmatprep.subr.bf16.mxu0 %v1988
    %2372 = vmatpush1.bf16.msra.mxu0 %v1987
    %2373 = vmatprep.subr.bf16.mxu0 %v1990
    %2374 = vmatpush1.bf16.msra.mxu0 %v1989
    %2375 = vmatprep.mubr.bf16.mxu0 %v1000
    %2376 = vmatmul.mubr.bf16.gmra.mrb[0].mxu0 %v999
    %v2377 = vpop.f32.mrb[0].mxu0
    %v2378 = vadd.f32 0.0, %v2377
    %v2379 = vpop.f32.mrb[0].mxu0
    %v2380 = vadd.f32 0.0, %v2379
    %v2381 = vpop.f32.mrb[0].mxu0
    %v2382 = vadd.f32 0.0, %v2381
    %v2383 = vpop.f32.mrb[0].mxu0
    %v2384 = vadd.f32 0.0, %v2383
    %2385 = vmatprep.mubr.bf16.mxu0 %v1012
    %2386 = vmatmul.mubr.bf16.gmra.mrb[0].mxu0 %v1011
    %v2387 = vpop.f32.mrb[0].mxu0
    %v2388 = vadd.f32 0.0, %v2387
    %v2389 = vpop.f32.mrb[0].mxu0
    %v2390 = vadd.f32 0.0, %v2389
    %v2391 = vpop.f32.mrb[0].mxu0
    %v2392 = vadd.f32 0.0, %v2391
    %v2393 = vpop.f32.mrb[0].mxu0
    %v2394 = vadd.f32 0.0, %v2393
    %2395 = vmatprep.mubr.bf16.mxu0 %v1024
    %2396 = vmatmul.mubr.bf16.gmra.mrb[0].mxu0 %v1023
    %v2397 = vpop.f32.mrb[0].mxu0
    %v2398 = vadd.f32 0.0, %v2397
    %v2399 = vpop.f32.mrb[0].mxu0
    %v2400 = vadd.f32 0.0, %v2399
    %v2401 = vpop.f32.mrb[0].mxu0
    %v2402 = vadd.f32 0.0, %v2401
    %v2403 = vpop.f32.mrb[0].mxu0
    %v2404 = vadd.f32 0.0, %v2403
    %2405 = vmatprep.mubr.bf16.mxu0 %v1036
    %2406 = vmatmul.mubr.bf16.gmra.mrb[0].mxu0 %v1035
    %v2407 = vpop.f32.mrb[0].mxu0
    %v2408 = vadd.f32 0.0, %v2407
    %v2409 = vpop.f32.mrb[0].mxu0
    %v2410 = vadd.f32 0.0, %v2409
    %v2411 = vpop.f32.mrb[0].mxu0
    %v2412 = vadd.f32 0.0, %v2411
    %v2413 = vpop.f32.mrb[0].mxu0
    %v2414 = vadd.f32 0.0, %v2413
    %2415 = vmatprep.mubr.bf16.mxu0 %v1048
    %2416 = vmatmul.mubr.bf16.gmra.mrb[0].mxu0 %v1047
    %v2417 = vpop.f32.mrb[0].mxu0
    %v2418 = vadd.f32 0.0, %v2417
    %v2419 = vpop.f32.mrb[0].mxu0
    %v2420 = vadd.f32 0.0, %v2419
    %v2421 = vpop.f32.mrb[0].mxu0
    %v2422 = vadd.f32 0.0, %v2421
    %v2423 = vpop.f32.mrb[0].mxu0
    %v2424 = vadd.f32 0.0, %v2423
    %2425 = vmatprep.mubr.bf16.mxu0 %v1060
    %2426 = vmatmul.mubr.bf16.gmra.mrb[0].mxu0 %v1059
    %v2427 = vpop.f32.mrb[0].mxu0
    %v2428 = vadd.f32 0.0, %v2427
    %v2429 = vpop.f32.mrb[0].mxu0
    %v2430 = vadd.f32 0.0, %v2429
    %v2431 = vpop.f32.mrb[0].mxu0
    %v2432 = vadd.f32 0.0, %v2431
    %v2433 = vpop.f32.mrb[0].mxu0
    %v2434 = vadd.f32 0.0, %v2433
    %2435 = vmatprep.mubr.bf16.mxu0 %v1072
    %2436 = vmatmul.mubr.bf16.gmra.mrb[0].mxu0 %v1071
    %v2437 = vpop.f32.mrb[0].mxu0
    %v2438 = vadd.f32 0.0, %v2437
    %v2439 = vpop.f32.mrb[0].mxu0
    %v2440 = vadd.f32 0.0, %v2439
    %v2441 = vpop.f32.mrb[0].mxu0
    %v2442 = vadd.f32 0.0, %v2441
    %v2443 = vpop.f32.mrb[0].mxu0
    %v2444 = vadd.f32 0.0, %v2443
    %2445 = vmatprep.mubr.bf16.mxu0 %v1084
    %2446 = vmatmul.mubr.bf16.gmra.mrb[0].mxu0 %v1083
    %v2447 = vpop.f32.mrb[0].mxu0
    %v2448 = vadd.f32 0.0, %v2447
    %v2449 = vpop.f32.mrb[0].mxu0
    %v2450 = vadd.f32 0.0, %v2449
    %v2451 = vpop.f32.mrb[0].mxu0
    %v2452 = vadd.f32 0.0, %v2451
    %v2453 = vpop.f32.mrb[0].mxu0
    %v2454 = vadd.f32 0.0, %v2453
    %2455 = vmatprep.mubr.bf16.mxu0 %v1096
    %2456 = vmatmul.mubr.bf16.gmra.mrb[0].mxu0 %v1095
    %v2457 = vpop.f32.mrb[0].mxu0
    %v2458 = vadd.f32 0.0, %v2457
    %v2459 = vpop.f32.mrb[0].mxu0
    %v2460 = vadd.f32 0.0, %v2459
    %v2461 = vpop.f32.mrb[0].mxu0
    %v2462 = vadd.f32 0.0, %v2461
    %v2463 = vpop.f32.mrb[0].mxu0
    %v2464 = vadd.f32 0.0, %v2463
    %2465 = vmatprep.mubr.bf16.mxu0 %v1108
    %2466 = vmatmul.mubr.bf16.gmra.mrb[0].mxu0 %v1107
    %v2467 = vpop.f32.mrb[0].mxu0
    %v2468 = vadd.f32 0.0, %v2467
    %v2469 = vpop.f32.mrb[0].mxu0
    %v2470 = vadd.f32 0.0, %v2469
    %v2471 = vpop.f32.mrb[0].mxu0
    %v2472 = vadd.f32 0.0, %v2471
    %v2473 = vpop.f32.mrb[0].mxu0
    %v2474 = vadd.f32 0.0, %v2473
    %2475 = vmatprep.mubr.bf16.mxu0 %v1120
    %2476 = vmatmul.mubr.bf16.gmra.mrb[0].mxu0 %v1119
    %v2477 = vpop.f32.mrb[0].mxu0
    %v2478 = vadd.f32 0.0, %v2477
    %v2479 = vpop.f32.mrb[0].mxu0
    %v2480 = vadd.f32 0.0, %v2479
    %v2481 = vpop.f32.mrb[0].mxu0
    %v2482 = vadd.f32 0.0, %v2481
    %v2483 = vpop.f32.mrb[0].mxu0
    %v2484 = vadd.f32 0.0, %v2483
    %2485 = vmatprep.mubr.bf16.mxu0 %v1132
    %2486 = vmatmul.mubr.bf16.gmra.mrb[0].mxu0 %v1131
    %v2487 = vpop.f32.mrb[0].mxu0
    %v2488 = vadd.f32 0.0, %v2487
    %v2489 = vpop.f32.mrb[0].mxu0
    %v2490 = vadd.f32 0.0, %v2489
    %v2491 = vpop.f32.mrb[0].mxu0
    %v2492 = vadd.f32 0.0, %v2491
    %v2493 = vpop.f32.mrb[0].mxu0
    %v2494 = vadd.f32 0.0, %v2493
    %2495 = vmatprep.mubr.bf16.mxu0 %v1144
    %2496 = vmatmul.mubr.bf16.gmra.mrb[0].mxu0 %v1143
    %v2497 = vpop.f32.mrb[0].mxu0
    %v2498 = vadd.f32 0.0, %v2497
    %v2499 = vpop.f32.mrb[0].mxu0
    %v2500 = vadd.f32 0.0, %v2499
    %v2501 = vpop.f32.mrb[0].mxu0
    %v2502 = vadd.f32 0.0, %v2501
    %v2503 = vpop.f32.mrb[0].mxu0
    %v2504 = vadd.f32 0.0, %v2503
    %2505 = vmatprep.mubr.bf16.mxu0 %v1156
    %2506 = vmatmul.mubr.bf16.gmra.mrb[0].mxu0 %v1155
    %v2507 = vpop.f32.mrb[0].mxu0
    %v2508 = vadd.f32 0.0, %v2507
    %v2509 = vpop.f32.mrb[0].mxu0
    %v2510 = vadd.f32 0.0, %v2509
    %v2511 = vpop.f32.mrb[0].mxu0
    %v2512 = vadd.f32 0.0, %v2511
    %v2513 = vpop.f32.mrb[0].mxu0
    %v2514 = vadd.f32 0.0, %v2513
    %2515 = vmatprep.mubr.bf16.mxu0 %v1168
    %2516 = vmatmul.mubr.bf16.gmra.mrb[0].mxu0 %v1167
    %v2517 = vpop.f32.mrb[0].mxu0
    %v2518 = vadd.f32 0.0, %v2517
    %v2519 = vpop.f32.mrb[0].mxu0
    %v2520 = vadd.f32 0.0, %v2519
    %v2521 = vpop.f32.mrb[0].mxu0
    %v2522 = vadd.f32 0.0, %v2521
    %v2523 = vpop.f32.mrb[0].mxu0
    %v2524 = vadd.f32 0.0, %v2523
    %2525 = vmatprep.mubr.bf16.mxu0 %v1180
    %2526 = vmatmul.mubr.bf16.gmra.mrb[0].mxu0 %v1179
    %v2527 = vpop.f32.mrb[0].mxu0
    %v2528 = vadd.f32 0.0, %v2527
    %v2529 = vpop.f32.mrb[0].mxu0
    %v2530 = vadd.f32 0.0, %v2529
    %v2531 = vpop.f32.mrb[0].mxu0
    %v2532 = vadd.f32 0.0, %v2531
    %v2533 = vpop.f32.mrb[0].mxu0
    %v2534 = vadd.f32 0.0, %v2533
    %2535 = vdwg.mxu0
    %2536 = vmatprep.subr.bf16.mxu0 %v1992
    %2537 = vmatpush1.bf16.msra.mxu0 %v1991
    %2538 = vmatprep.subr.bf16.mxu0 %v1994
    %2539 = vmatpush1.bf16.msra.mxu0 %v1993
    %2540 = vmatprep.subr.bf16.mxu0 %v1996
    %2541 = vmatpush1.bf16.msra.mxu0 %v1995
    %2542 = vmatprep.subr.bf16.mxu0 %v1998
    %2543 = vmatpush1.bf16.msra.mxu0 %v1997
    %2544 = vmatprep.subr.bf16.mxu0 %v2000
    %2545 = vmatpush1.bf16.msra.mxu0 %v1999
    %2546 = vmatprep.subr.bf16.mxu0 %v2002
    %2547 = vmatpush1.bf16.msra.mxu0 %v2001
    %2548 = vmatprep.subr.bf16.mxu0 %v2004
    %2549 = vmatpush1.bf16.msra.mxu0 %v2003
    %2550 = vmatprep.subr.bf16.mxu0 %v2006
    %2551 = vmatpush1.bf16.msra.mxu0 %v2005
    %2552 = vmatprep.subr.bf16.mxu0 %v2008
    %2553 = vmatpush1.bf16.msra.mxu0 %v2007
    %2554 = vmatprep.subr.bf16.mxu0 %v2010
    %2555 = vmatpush1.bf16.msra.mxu0 %v2009
    %2556 = vmatprep.subr.bf16.mxu0 %v2012
    %2557 = vmatpush1.bf16.msra.mxu0 %v2011
    %2558 = vmatprep.subr.bf16.mxu0 %v2014
    %2559 = vmatpush1.bf16.msra.mxu0 %v2013
    %2560 = vmatprep.subr.bf16.mxu0 %v2016
    %2561 = vmatpush1.bf16.msra.mxu0 %v2015
    %2562 = vmatprep.subr.bf16.mxu0 %v2018
    %2563 = vmatpush1.bf16.msra.mxu0 %v2017
    %2564 = vmatprep.subr.bf16.mxu0 %v2020
    %2565 = vmatpush1.bf16.msra.mxu0 %v2019
    %2566 = vmatprep.subr.bf16.mxu0 %v2022
    %2567 = vmatpush1.bf16.msra.mxu0 %v2021
    %2568 = vmatprep.mubr.bf16.mxu0 %v1002
    %2569 = vmatmul.mubr.bf16.gmra.mrb[0].mxu0 %v1001
    %v2570 = vpop.f32.mrb[0].mxu0
    %v2571 = vadd.f32 %v2378, %v2570
    %v2572 = vpop.f32.mrb[0].mxu0
    %v2573 = vadd.f32 %v2380, %v2572
    %v2574 = vpop.f32.mrb[0].mxu0
    %v2575 = vadd.f32 %v2382, %v2574
    %v2576 = vpop.f32.mrb[0].mxu0
    %v2577 = vadd.f32 %v2384, %v2576
    %2578 = vmatprep.mubr.bf16.mxu0 %v1014
    %2579 = vmatmul.mubr.bf16.gmra.mrb[0].mxu0 %v1013
    %v2580 = vpop.f32.mrb[0].mxu0
    %v2581 = vadd.f32 %v2388, %v2580
    %v2582 = vpop.f32.mrb[0].mxu0
    %v2583 = vadd.f32 %v2390, %v2582
    %v2584 = vpop.f32.mrb[0].mxu0
    %v2585 = vadd.f32 %v2392, %v2584
    %v2586 = vpop.f32.mrb[0].mxu0
    %v2587 = vadd.f32 %v2394, %v2586
    %2588 = vmatprep.mubr.bf16.mxu0 %v1026
    %2589 = vmatmul.mubr.bf16.gmra.mrb[0].mxu0 %v1025
    %v2590 = vpop.f32.mrb[0].mxu0
    %v2591 = vadd.f32 %v2398, %v2590
    %v2592 = vpop.f32.mrb[0].mxu0
    %v2593 = vadd.f32 %v2400, %v2592
    %v2594 = vpop.f32.mrb[0].mxu0
    %v2595 = vadd.f32 %v2402, %v2594
    %v2596 = vpop.f32.mrb[0].mxu0
    %v2597 = vadd.f32 %v2404, %v2596
    %2598 = vmatprep.mubr.bf16.mxu0 %v1038
    %2599 = vmatmul.mubr.bf16.gmra.mrb[0].mxu0 %v1037
    %v2600 = vpop.f32.mrb[0].mxu0
    %v2601 = vadd.f32 %v2408, %v2600
    %v2602 = vpop.f32.mrb[0].mxu0
    %v2603 = vadd.f32 %v2410, %v2602
    %v2604 = vpop.f32.mrb[0].mxu0
    %v2605 = vadd.f32 %v2412, %v2604
    %v2606 = vpop.f32.mrb[0].mxu0
    %v2607 = vadd.f32 %v2414, %v2606
    %2608 = vmatprep.mubr.bf16.mxu0 %v1050
    %2609 = vmatmul.mubr.bf16.gmra.mrb[0].mxu0 %v1049
    %v2610 = vpop.f32.mrb[0].mxu0
    %v2611 = vadd.f32 %v2418, %v2610
    %v2612 = vpop.f32.mrb[0].mxu0
    %v2613 = vadd.f32 %v2420, %v2612
    %v2614 = vpop.f32.mrb[0].mxu0
    %v2615 = vadd.f32 %v2422, %v2614
    %v2616 = vpop.f32.mrb[0].mxu0
    %v2617 = vadd.f32 %v2424, %v2616
    %2618 = vmatprep.mubr.bf16.mxu0 %v1062
    %2619 = vmatmul.mubr.bf16.gmra.mrb[0].mxu0 %v1061
    %v2620 = vpop.f32.mrb[0].mxu0
    %v2621 = vadd.f32 %v2428, %v2620
    %v2622 = vpop.f32.mrb[0].mxu0
    %v2623 = vadd.f32 %v2430, %v2622
    %v2624 = vpop.f32.mrb[0].mxu0
    %v2625 = vadd.f32 %v2432, %v2624
    %v2626 = vpop.f32.mrb[0].mxu0
    %v2627 = vadd.f32 %v2434, %v2626
    %2628 = vmatprep.mubr.bf16.mxu0 %v1074
    %2629 = vmatmul.mubr.bf16.gmra.mrb[0].mxu0 %v1073
    %v2630 = vpop.f32.mrb[0].mxu0
    %v2631 = vadd.f32 %v2438, %v2630
    %v2632 = vpop.f32.mrb[0].mxu0
    %v2633 = vadd.f32 %v2440, %v2632
    %v2634 = vpop.f32.mrb[0].mxu0
    %v2635 = vadd.f32 %v2442, %v2634
    %v2636 = vpop.f32.mrb[0].mxu0
    %v2637 = vadd.f32 %v2444, %v2636
    %2638 = vmatprep.mubr.bf16.mxu0 %v1086
    %2639 = vmatmul.mubr.bf16.gmra.mrb[0].mxu0 %v1085
    %v2640 = vpop.f32.mrb[0].mxu0
    %v2641 = vadd.f32 %v2448, %v2640
    %v2642 = vpop.f32.mrb[0].mxu0
    %v2643 = vadd.f32 %v2450, %v2642
    %v2644 = vpop.f32.mrb[0].mxu0
    %v2645 = vadd.f32 %v2452, %v2644
    %v2646 = vpop.f32.mrb[0].mxu0
    %v2647 = vadd.f32 %v2454, %v2646
    %2648 = vmatprep.mubr.bf16.mxu0 %v1098
    %2649 = vmatmul.mubr.bf16.gmra.mrb[0].mxu0 %v1097
    %v2650 = vpop.f32.mrb[0].mxu0
    %v2651 = vadd.f32 %v2458, %v2650
    %v2652 = vpop.f32.mrb[0].mxu0
    %v2653 = vadd.f32 %v2460, %v2652
    %v2654 = vpop.f32.mrb[0].mxu0
    %v2655 = vadd.f32 %v2462, %v2654
    %v2656 = vpop.f32.mrb[0].mxu0
    %v2657 = vadd.f32 %v2464, %v2656
    %2658 = vmatprep.mubr.bf16.mxu0 %v1110
    %2659 = vmatmul.mubr.bf16.gmra.mrb[0].mxu0 %v1109
    %v2660 = vpop.f32.mrb[0].mxu0
    %v2661 = vadd.f32 %v2468, %v2660
    %v2662 = vpop.f32.mrb[0].mxu0
    %v2663 = vadd.f32 %v2470, %v2662
    %v2664 = vpop.f32.mrb[0].mxu0
    %v2665 = vadd.f32 %v2472, %v2664
    %v2666 = vpop.f32.mrb[0].mxu0
    %v2667 = vadd.f32 %v2474, %v2666
    %2668 = vmatprep.mubr.bf16.mxu0 %v1122
    %2669 = vmatmul.mubr.bf16.gmra.mrb[0].mxu0 %v1121
    %v2670 = vpop.f32.mrb[0].mxu0
    %v2671 = vadd.f32 %v2478, %v2670
    %v2672 = vpop.f32.mrb[0].mxu0
    %v2673 = vadd.f32 %v2480, %v2672
    %v2674 = vpop.f32.mrb[0].mxu0
    %v2675 = vadd.f32 %v2482, %v2674
    %v2676 = vpop.f32.mrb[0].mxu0
    %v2677 = vadd.f32 %v2484, %v2676
    %2678 = vmatprep.mubr.bf16.mxu0 %v1134
    %2679 = vmatmul.mubr.bf16.gmra.mrb[0].mxu0 %v1133
    %v2680 = vpop.f32.mrb[0].mxu0
    %v2681 = vadd.f32 %v2488, %v2680
    %v2682 = vpop.f32.mrb[0].mxu0
    %v2683 = vadd.f32 %v2490, %v2682
    %v2684 = vpop.f32.mrb[0].mxu0
    %v2685 = vadd.f32 %v2492, %v2684
    %v2686 = vpop.f32.mrb[0].mxu0
    %v2687 = vadd.f32 %v2494, %v2686
    %2688 = vmatprep.mubr.bf16.mxu0 %v1146
    %2689 = vmatmul.mubr.bf16.gmra.mrb[0].mxu0 %v1145
    %v2690 = vpop.f32.mrb[0].mxu0
    %v2691 = vadd.f32 %v2498, %v2690
    %v2692 = vpop.f32.mrb[0].mxu0
    %v2693 = vadd.f32 %v2500, %v2692
    %v2694 = vpop.f32.mrb[0].mxu0
    %v2695 = vadd.f32 %v2502, %v2694
    %v2696 = vpop.f32.mrb[0].mxu0
    %v2697 = vadd.f32 %v2504, %v2696
    %2698 = vmatprep.mubr.bf16.mxu0 %v1158
    %2699 = vmatmul.mubr.bf16.gmra.mrb[0].mxu0 %v1157
    %v2700 = vpop.f32.mrb[0].mxu0
    %v2701 = vadd.f32 %v2508, %v2700
    %v2702 = vpop.f32.mrb[0].mxu0
    %v2703 = vadd.f32 %v2510, %v2702
    %v2704 = vpop.f32.mrb[0].mxu0
    %v2705 = vadd.f32 %v2512, %v2704
    %v2706 = vpop.f32.mrb[0].mxu0
    %v2707 = vadd.f32 %v2514, %v2706
    %2708 = vmatprep.mubr.bf16.mxu0 %v1170
    %2709 = vmatmul.mubr.bf16.gmra.mrb[0].mxu0 %v1169
    %v2710 = vpop.f32.mrb[0].mxu0
    %v2711 = vadd.f32 %v2518, %v2710
    %v2712 = vpop.f32.mrb[0].mxu0
    %v2713 = vadd.f32 %v2520, %v2712
    %v2714 = vpop.f32.mrb[0].mxu0
    %v2715 = vadd.f32 %v2522, %v2714
    %v2716 = vpop.f32.mrb[0].mxu0
    %v2717 = vadd.f32 %v2524, %v2716
    %2718 = vmatprep.mubr.bf16.mxu0 %v1182
    %2719 = vmatmul.mubr.bf16.gmra.mrb[0].mxu0 %v1181
    %v2720 = vpop.f32.mrb[0].mxu0
    %v2721 = vadd.f32 %v2528, %v2720
    %v2722 = vpop.f32.mrb[0].mxu0
    %v2723 = vadd.f32 %v2530, %v2722
    %v2724 = vpop.f32.mrb[0].mxu0
    %v2725 = vadd.f32 %v2532, %v2724
    %v2726 = vpop.f32.mrb[0].mxu0
    %v2727 = vadd.f32 %v2534, %v2726
    %2728 = vdwg.mxu0
    %2729 = vmatprep.subr.bf16.mxu0 %v2024
    %2730 = vmatpush1.bf16.msra.mxu0 %v2023
    %2731 = vmatprep.subr.bf16.mxu0 %v2026
    %2732 = vmatpush1.bf16.msra.mxu0 %v2025
    %2733 = vmatprep.subr.bf16.mxu0 %v2028
    %2734 = vmatpush1.bf16.msra.mxu0 %v2027
    %2735 = vmatprep.subr.bf16.mxu0 %v2030
    %2736 = vmatpush1.bf16.msra.mxu0 %v2029
    %2737 = vmatprep.subr.bf16.mxu0 %v2032
    %2738 = vmatpush1.bf16.msra.mxu0 %v2031
    %2739 = vmatprep.subr.bf16.mxu0 %v2034
    %2740 = vmatpush1.bf16.msra.mxu0 %v2033
    %2741 = vmatprep.subr.bf16.mxu0 %v2036
    %2742 = vmatpush1.bf16.msra.mxu0 %v2035
    %2743 = vmatprep.subr.bf16.mxu0 %v2038
    %2744 = vmatpush1.bf16.msra.mxu0 %v2037
    %2745 = vmatprep.subr.bf16.mxu0 %v2040
    %2746 = vmatpush1.bf16.msra.mxu0 %v2039
    %2747 = vmatprep.subr.bf16.mxu0 %v2042
    %2748 = vmatpush1.bf16.msra.mxu0 %v2041
    %2749 = vmatprep.subr.bf16.mxu0 %v2044
    %2750 = vmatpush1.bf16.msra.mxu0 %v2043
    %2751 = vmatprep.subr.bf16.mxu0 %v2046
    %2752 = vmatpush1.bf16.msra.mxu0 %v2045
    %2753 = vmatprep.subr.bf16.mxu0 %v2048
    %2754 = vmatpush1.bf16.msra.mxu0 %v2047
    %2755 = vmatprep.subr.bf16.mxu0 %v2050
    %2756 = vmatpush1.bf16.msra.mxu0 %v2049
    %2757 = vmatprep.subr.bf16.mxu0 %v2052
    %2758 = vmatpush1.bf16.msra.mxu0 %v2051
    %2759 = vmatprep.subr.bf16.mxu0 %v2054
    %2760 = vmatpush1.bf16.msra.mxu0 %v2053
    %2761 = vmatprep.mubr.bf16.mxu0 %v1004
    %2762 = vmatmul.mubr.bf16.gmra.mrb[0].mxu0 %v1003
    %v2763 = vpop.f32.mrb[0].mxu0
    %v2764 = vadd.f32 %v2571, %v2763
    %v2765 = vpop.f32.mrb[0].mxu0
    %v2766 = vadd.f32 %v2573, %v2765
    %v2767 = vpop.f32.mrb[0].mxu0
    %v2768 = vadd.f32 %v2575, %v2767
    %v2769 = vpop.f32.mrb[0].mxu0
    %v2770 = vadd.f32 %v2577, %v2769
    %2771 = vmatprep.mubr.bf16.mxu0 %v1016
    %2772 = vmatmul.mubr.bf16.gmra.mrb[0].mxu0 %v1015
    %v2773 = vpop.f32.mrb[0].mxu0
    %v2774 = vadd.f32 %v2581, %v2773
    %v2775 = vpop.f32.mrb[0].mxu0
    %v2776 = vadd.f32 %v2583, %v2775
    %v2777 = vpop.f32.mrb[0].mxu0
    %v2778 = vadd.f32 %v2585, %v2777
    %v2779 = vpop.f32.mrb[0].mxu0
    %v2780 = vadd.f32 %v2587, %v2779
    %2781 = vmatprep.mubr.bf16.mxu0 %v1028
    %2782 = vmatmul.mubr.bf16.gmra.mrb[0].mxu0 %v1027
    %v2783 = vpop.f32.mrb[0].mxu0
    %v2784 = vadd.f32 %v2591, %v2783
    %v2785 = vpop.f32.mrb[0].mxu0
    %v2786 = vadd.f32 %v2593, %v2785
    %v2787 = vpop.f32.mrb[0].mxu0
    %v2788 = vadd.f32 %v2595, %v2787
    %v2789 = vpop.f32.mrb[0].mxu0
    %v2790 = vadd.f32 %v2597, %v2789
    %2791 = vmatprep.mubr.bf16.mxu0 %v1040
    %2792 = vmatmul.mubr.bf16.gmra.mrb[0].mxu0 %v1039
    %v2793 = vpop.f32.mrb[0].mxu0
    %v2794 = vadd.f32 %v2601, %v2793
    %v2795 = vpop.f32.mrb[0].mxu0
    %v2796 = vadd.f32 %v2603, %v2795
    %v2797 = vpop.f32.mrb[0].mxu0
    %v2798 = vadd.f32 %v2605, %v2797
    %v2799 = vpop.f32.mrb[0].mxu0
    %v2800 = vadd.f32 %v2607, %v2799
    %2801 = vmatprep.mubr.bf16.mxu0 %v1052
    %2802 = vmatmul.mubr.bf16.gmra.mrb[0].mxu0 %v1051
    %v2803 = vpop.f32.mrb[0].mxu0
    %v2804 = vadd.f32 %v2611, %v2803
    %v2805 = vpop.f32.mrb[0].mxu0
    %v2806 = vadd.f32 %v2613, %v2805
    %v2807 = vpop.f32.mrb[0].mxu0
    %v2808 = vadd.f32 %v2615, %v2807
    %v2809 = vpop.f32.mrb[0].mxu0
    %v2810 = vadd.f32 %v2617, %v2809
    %2811 = vmatprep.mubr.bf16.mxu0 %v1064
    %2812 = vmatmul.mubr.bf16.gmra.mrb[0].mxu0 %v1063
    %v2813 = vpop.f32.mrb[0].mxu0
    %v2814 = vadd.f32 %v2621, %v2813
    %v2815 = vpop.f32.mrb[0].mxu0
    %v2816 = vadd.f32 %v2623, %v2815
    %v2817 = vpop.f32.mrb[0].mxu0
    %v2818 = vadd.f32 %v2625, %v2817
    %v2819 = vpop.f32.mrb[0].mxu0
    %v2820 = vadd.f32 %v2627, %v2819
    %2821 = vmatprep.mubr.bf16.mxu0 %v1076
    %2822 = vmatmul.mubr.bf16.gmra.mrb[0].mxu0 %v1075
    %v2823 = vpop.f32.mrb[0].mxu0
    %v2824 = vadd.f32 %v2631, %v2823
    %v2825 = vpop.f32.mrb[0].mxu0
    %v2826 = vadd.f32 %v2633, %v2825
    %v2827 = vpop.f32.mrb[0].mxu0
    %v2828 = vadd.f32 %v2635, %v2827
    %v2829 = vpop.f32.mrb[0].mxu0
    %v2830 = vadd.f32 %v2637, %v2829
    %2831 = vmatprep.mubr.bf16.mxu0 %v1088
    %2832 = vmatmul.mubr.bf16.gmra.mrb[0].mxu0 %v1087
    %v2833 = vpop.f32.mrb[0].mxu0
    %v2834 = vadd.f32 %v2641, %v2833
    %v2835 = vpop.f32.mrb[0].mxu0
    %v2836 = vadd.f32 %v2643, %v2835
    %v2837 = vpop.f32.mrb[0].mxu0
    %v2838 = vadd.f32 %v2645, %v2837
    %v2839 = vpop.f32.mrb[0].mxu0
    %v2840 = vadd.f32 %v2647, %v2839
    %2841 = vmatprep.mubr.bf16.mxu0 %v1100
    %2842 = vmatmul.mubr.bf16.gmra.mrb[0].mxu0 %v1099
    %v2843 = vpop.f32.mrb[0].mxu0
    %v2844 = vadd.f32 %v2651, %v2843
    %v2845 = vpop.f32.mrb[0].mxu0
    %v2846 = vadd.f32 %v2653, %v2845
    %v2847 = vpop.f32.mrb[0].mxu0
    %v2848 = vadd.f32 %v2655, %v2847
    %v2849 = vpop.f32.mrb[0].mxu0
    %v2850 = vadd.f32 %v2657, %v2849
    %2851 = vmatprep.mubr.bf16.mxu0 %v1112
    %2852 = vmatmul.mubr.bf16.gmra.mrb[0].mxu0 %v1111
    %v2853 = vpop.f32.mrb[0].mxu0
    %v2854 = vadd.f32 %v2661, %v2853
    %v2855 = vpop.f32.mrb[0].mxu0
    %v2856 = vadd.f32 %v2663, %v2855
    %v2857 = vpop.f32.mrb[0].mxu0
    %v2858 = vadd.f32 %v2665, %v2857
    %v2859 = vpop.f32.mrb[0].mxu0
    %v2860 = vadd.f32 %v2667, %v2859
    %2861 = vmatprep.mubr.bf16.mxu0 %v1124
    %2862 = vmatmul.mubr.bf16.gmra.mrb[0].mxu0 %v1123
    %v2863 = vpop.f32.mrb[0].mxu0
    %v2864 = vadd.f32 %v2671, %v2863
    %v2865 = vpop.f32.mrb[0].mxu0
    %v2866 = vadd.f32 %v2673, %v2865
    %v2867 = vpop.f32.mrb[0].mxu0
    %v2868 = vadd.f32 %v2675, %v2867
    %v2869 = vpop.f32.mrb[0].mxu0
    %v2870 = vadd.f32 %v2677, %v2869
    %2871 = vmatprep.mubr.bf16.mxu0 %v1136
    %2872 = vmatmul.mubr.bf16.gmra.mrb[0].mxu0 %v1135
    %v2873 = vpop.f32.mrb[0].mxu0
    %v2874 = vadd.f32 %v2681, %v2873
    %v2875 = vpop.f32.mrb[0].mxu0
    %v2876 = vadd.f32 %v2683, %v2875
    %v2877 = vpop.f32.mrb[0].mxu0
    %v2878 = vadd.f32 %v2685, %v2877
    %v2879 = vpop.f32.mrb[0].mxu0
    %v2880 = vadd.f32 %v2687, %v2879
    %2881 = vmatprep.mubr.bf16.mxu0 %v1148
    %2882 = vmatmul.mubr.bf16.gmra.mrb[0].mxu0 %v1147
    %v2883 = vpop.f32.mrb[0].mxu0
    %v2884 = vadd.f32 %v2691, %v2883
    %v2885 = vpop.f32.mrb[0].mxu0
    %v2886 = vadd.f32 %v2693, %v2885
    %v2887 = vpop.f32.mrb[0].mxu0
    %v2888 = vadd.f32 %v2695, %v2887
    %v2889 = vpop.f32.mrb[0].mxu0
    %v2890 = vadd.f32 %v2697, %v2889
    %2891 = vmatprep.mubr.bf16.mxu0 %v1160
    %2892 = vmatmul.mubr.bf16.gmra.mrb[0].mxu0 %v1159
    %v2893 = vpop.f32.mrb[0].mxu0
    %v2894 = vadd.f32 %v2701, %v2893
    %v2895 = vpop.f32.mrb[0].mxu0
    %v2896 = vadd.f32 %v2703, %v2895
    %v2897 = vpop.f32.mrb[0].mxu0
    %v2898 = vadd.f32 %v2705, %v2897
    %v2899 = vpop.f32.mrb[0].mxu0
    %v2900 = vadd.f32 %v2707, %v2899
    %2901 = vmatprep.mubr.bf16.mxu0 %v1172
    %2902 = vmatmul.mubr.bf16.gmra.mrb[0].mxu0 %v1171
    %v2903 = vpop.f32.mrb[0].mxu0
    %v2904 = vadd.f32 %v2711, %v2903
    %v2905 = vpop.f32.mrb[0].mxu0
    %v2906 = vadd.f32 %v2713, %v2905
    %v2907 = vpop.f32.mrb[0].mxu0
    %v2908 = vadd.f32 %v2715, %v2907
    %v2909 = vpop.f32.mrb[0].mxu0
    %v2910 = vadd.f32 %v2717, %v2909
    %2911 = vmatprep.mubr.bf16.mxu0 %v1184
    %2912 = vmatmul.mubr.bf16.gmra.mrb[0].mxu0 %v1183
    %v2913 = vpop.f32.mrb[0].mxu0
    %v2914 = vadd.f32 %v2721, %v2913
    %v2915 = vpop.f32.mrb[0].mxu0
    %v2916 = vadd.f32 %v2723, %v2915
    %v2917 = vpop.f32.mrb[0].mxu0
    %v2918 = vadd.f32 %v2725, %v2917
    %v2919 = vpop.f32.mrb[0].mxu0
    %v2920 = vadd.f32 %v2727, %v2919
    %2921 = vdwg.mxu0
    %2922 = vmatprep.subr.bf16.mxu0 %v2056
    %2923 = vmatpush1.bf16.msra.mxu0 %v2055
    %2924 = vmatprep.subr.bf16.mxu0 %v2058
    %2925 = vmatpush1.bf16.msra.mxu0 %v2057
    %2926 = vmatprep.subr.bf16.mxu0 %v2060
    %2927 = vmatpush1.bf16.msra.mxu0 %v2059
    %2928 = vmatprep.subr.bf16.mxu0 %v2062
    %2929 = vmatpush1.bf16.msra.mxu0 %v2061
    %2930 = vmatprep.subr.bf16.mxu0 %v2064
    %2931 = vmatpush1.bf16.msra.mxu0 %v2063
    %2932 = vmatprep.subr.bf16.mxu0 %v2066
    %2933 = vmatpush1.bf16.msra.mxu0 %v2065
    %2934 = vmatprep.subr.bf16.mxu0 %v2068
    %2935 = vmatpush1.bf16.msra.mxu0 %v2067
    %2936 = vmatprep.subr.bf16.mxu0 %v2070
    %2937 = vmatpush1.bf16.msra.mxu0 %v2069
    %2938 = vmatprep.subr.bf16.mxu0 %v2072
    %2939 = vmatpush1.bf16.msra.mxu0 %v2071
    %2940 = vmatprep.subr.bf16.mxu0 %v2074
    %2941 = vmatpush1.bf16.msra.mxu0 %v2073
    %2942 = vmatprep.subr.bf16.mxu0 %v2076
    %2943 = vmatpush1.bf16.msra.mxu0 %v2075
    %2944 = vmatprep.subr.bf16.mxu0 %v2078
    %2945 = vmatpush1.bf16.msra.mxu0 %v2077
    %2946 = vmatprep.subr.bf16.mxu0 %v2080
    %2947 = vmatpush1.bf16.msra.mxu0 %v2079
    %2948 = vmatprep.subr.bf16.mxu0 %v2082
    %2949 = vmatpush1.bf16.msra.mxu0 %v2081
    %2950 = vmatprep.subr.bf16.mxu0 %v2084
    %2951 = vmatpush1.bf16.msra.mxu0 %v2083
    %2952 = vmatprep.subr.bf16.mxu0 %v2086
    %2953 = vmatpush1.bf16.msra.mxu0 %v2085
    %2954 = vmatprep.mubr.bf16.mxu0 %v1006
    %2955 = vmatmul.mubr.bf16.gmra.mrb[0].mxu0 %v1005
    %v2956 = vpop.f32.mrb[0].mxu0
    %v2957 = vadd.f32 %v2764, %v2956
    %v2958 = vpop.f32.mrb[0].mxu0
    %v2959 = vadd.f32 %v2766, %v2958
    %v2960 = vpop.f32.mrb[0].mxu0
    %v2961 = vadd.f32 %v2768, %v2960
    %v2962 = vpop.f32.mrb[0].mxu0
    %v2963 = vadd.f32 %v2770, %v2962
    %2964 = vmatprep.mubr.bf16.mxu0 %v1018
    %2965 = vmatmul.mubr.bf16.gmra.mrb[0].mxu0 %v1017
    %v2966 = vpop.f32.mrb[0].mxu0
    %v2967 = vadd.f32 %v2774, %v2966
    %v2968 = vpop.f32.mrb[0].mxu0
    %v2969 = vadd.f32 %v2776, %v2968
    %v2970 = vpop.f32.mrb[0].mxu0
    %v2971 = vadd.f32 %v2778, %v2970
    %v2972 = vpop.f32.mrb[0].mxu0
    %v2973 = vadd.f32 %v2780, %v2972
    %2974 = vmatprep.mubr.bf16.mxu0 %v1030
    %2975 = vmatmul.mubr.bf16.gmra.mrb[0].mxu0 %v1029
    %v2976 = vpop.f32.mrb[0].mxu0
    %v2977 = vadd.f32 %v2784, %v2976
    %v2978 = vpop.f32.mrb[0].mxu0
    %v2979 = vadd.f32 %v2786, %v2978
    %v2980 = vpop.f32.mrb[0].mxu0
    %v2981 = vadd.f32 %v2788, %v2980
    %v2982 = vpop.f32.mrb[0].mxu0
    %v2983 = vadd.f32 %v2790, %v2982
    %2984 = vmatprep.mubr.bf16.mxu0 %v1042
    %2985 = vmatmul.mubr.bf16.gmra.mrb[0].mxu0 %v1041
    %v2986 = vpop.f32.mrb[0].mxu0
    %v2987 = vadd.f32 %v2794, %v2986
    %v2988 = vpop.f32.mrb[0].mxu0
    %v2989 = vadd.f32 %v2796, %v2988
    %v2990 = vpop.f32.mrb[0].mxu0
    %v2991 = vadd.f32 %v2798, %v2990
    %v2992 = vpop.f32.mrb[0].mxu0
    %v2993 = vadd.f32 %v2800, %v2992
    %2994 = vmatprep.mubr.bf16.mxu0 %v1054
    %2995 = vmatmul.mubr.bf16.gmra.mrb[0].mxu0 %v1053
    %v2996 = vpop.f32.mrb[0].mxu0
    %v2997 = vadd.f32 %v2804, %v2996
    %v2998 = vpop.f32.mrb[0].mxu0
    %v2999 = vadd.f32 %v2806, %v2998
    %v3000 = vpop.f32.mrb[0].mxu0
    %v3001 = vadd.f32 %v2808, %v3000
    %v3002 = vpop.f32.mrb[0].mxu0
    %v3003 = vadd.f32 %v2810, %v3002
    %3004 = vmatprep.mubr.bf16.mxu0 %v1066
    %3005 = vmatmul.mubr.bf16.gmra.mrb[0].mxu0 %v1065
    %v3006 = vpop.f32.mrb[0].mxu0
    %v3007 = vadd.f32 %v2814, %v3006
    %v3008 = vpop.f32.mrb[0].mxu0
    %v3009 = vadd.f32 %v2816, %v3008
    %v3010 = vpop.f32.mrb[0].mxu0
    %v3011 = vadd.f32 %v2818, %v3010
    %v3012 = vpop.f32.mrb[0].mxu0
    %v3013 = vadd.f32 %v2820, %v3012
    %3014 = vmatprep.mubr.bf16.mxu0 %v1078
    %3015 = vmatmul.mubr.bf16.gmra.mrb[0].mxu0 %v1077
    %v3016 = vpop.f32.mrb[0].mxu0
    %v3017 = vadd.f32 %v2824, %v3016
    %v3018 = vpop.f32.mrb[0].mxu0
    %v3019 = vadd.f32 %v2826, %v3018
    %v3020 = vpop.f32.mrb[0].mxu0
    %v3021 = vadd.f32 %v2828, %v3020
    %v3022 = vpop.f32.mrb[0].mxu0
    %v3023 = vadd.f32 %v2830, %v3022
    %3024 = vmatprep.mubr.bf16.mxu0 %v1090
    %3025 = vmatmul.mubr.bf16.gmra.mrb[0].mxu0 %v1089
    %v3026 = vpop.f32.mrb[0].mxu0
    %v3027 = vadd.f32 %v2834, %v3026
    %v3028 = vpop.f32.mrb[0].mxu0
    %v3029 = vadd.f32 %v2836, %v3028
    %v3030 = vpop.f32.mrb[0].mxu0
    %v3031 = vadd.f32 %v2838, %v3030
    %v3032 = vpop.f32.mrb[0].mxu0
    %v3033 = vadd.f32 %v2840, %v3032
    %3034 = vmatprep.mubr.bf16.mxu0 %v1102
    %3035 = vmatmul.mubr.bf16.gmra.mrb[0].mxu0 %v1101
    %v3036 = vpop.f32.mrb[0].mxu0
    %v3037 = vadd.f32 %v2844, %v3036
    %v3038 = vpop.f32.mrb[0].mxu0
    %v3039 = vadd.f32 %v2846, %v3038
    %v3040 = vpop.f32.mrb[0].mxu0
    %v3041 = vadd.f32 %v2848, %v3040
    %v3042 = vpop.f32.mrb[0].mxu0
    %v3043 = vadd.f32 %v2850, %v3042
    %3044 = vmatprep.mubr.bf16.mxu0 %v1114
    %3045 = vmatmul.mubr.bf16.gmra.mrb[0].mxu0 %v1113
    %v3046 = vpop.f32.mrb[0].mxu0
    %v3047 = vadd.f32 %v2854, %v3046
    %v3048 = vpop.f32.mrb[0].mxu0
    %v3049 = vadd.f32 %v2856, %v3048
    %v3050 = vpop.f32.mrb[0].mxu0
    %v3051 = vadd.f32 %v2858, %v3050
    %v3052 = vpop.f32.mrb[0].mxu0
    %v3053 = vadd.f32 %v2860, %v3052
    %3054 = vmatprep.mubr.bf16.mxu0 %v1126
    %3055 = vmatmul.mubr.bf16.gmra.mrb[0].mxu0 %v1125
    %v3056 = vpop.f32.mrb[0].mxu0
    %v3057 = vadd.f32 %v2864, %v3056
    %v3058 = vpop.f32.mrb[0].mxu0
    %v3059 = vadd.f32 %v2866, %v3058
    %v3060 = vpop.f32.mrb[0].mxu0
    %v3061 = vadd.f32 %v2868, %v3060
    %v3062 = vpop.f32.mrb[0].mxu0
    %v3063 = vadd.f32 %v2870, %v3062
    %3064 = vmatprep.mubr.bf16.mxu0 %v1138
    %3065 = vmatmul.mubr.bf16.gmra.mrb[0].mxu0 %v1137
    %v3066 = vpop.f32.mrb[0].mxu0
    %v3067 = vadd.f32 %v2874, %v3066
    %v3068 = vpop.f32.mrb[0].mxu0
    %v3069 = vadd.f32 %v2876, %v3068
    %v3070 = vpop.f32.mrb[0].mxu0
    %v3071 = vadd.f32 %v2878, %v3070
    %v3072 = vpop.f32.mrb[0].mxu0
    %v3073 = vadd.f32 %v2880, %v3072
    %3074 = vmatprep.mubr.bf16.mxu0 %v1150
    %3075 = vmatmul.mubr.bf16.gmra.mrb[0].mxu0 %v1149
    %v3076 = vpop.f32.mrb[0].mxu0
    %v3077 = vadd.f32 %v2884, %v3076
    %v3078 = vpop.f32.mrb[0].mxu0
    %v3079 = vadd.f32 %v2886, %v3078
    %v3080 = vpop.f32.mrb[0].mxu0
    %v3081 = vadd.f32 %v2888, %v3080
    %v3082 = vpop.f32.mrb[0].mxu0
    %v3083 = vadd.f32 %v2890, %v3082
    %3084 = vmatprep.mubr.bf16.mxu0 %v1162
    %3085 = vmatmul.mubr.bf16.gmra.mrb[0].mxu0 %v1161
    %v3086 = vpop.f32.mrb[0].mxu0
    %v3087 = vadd.f32 %v2894, %v3086
    %v3088 = vpop.f32.mrb[0].mxu0
    %v3089 = vadd.f32 %v2896, %v3088
    %v3090 = vpop.f32.mrb[0].mxu0
    %v3091 = vadd.f32 %v2898, %v3090
    %v3092 = vpop.f32.mrb[0].mxu0
    %v3093 = vadd.f32 %v2900, %v3092
    %3094 = vmatprep.mubr.bf16.mxu0 %v1174
    %3095 = vmatmul.mubr.bf16.gmra.mrb[0].mxu0 %v1173
    %v3096 = vpop.f32.mrb[0].mxu0
    %v3097 = vadd.f32 %v2904, %v3096
    %v3098 = vpop.f32.mrb[0].mxu0
    %v3099 = vadd.f32 %v2906, %v3098
    %v3100 = vpop.f32.mrb[0].mxu0
    %v3101 = vadd.f32 %v2908, %v3100
    %v3102 = vpop.f32.mrb[0].mxu0
    %v3103 = vadd.f32 %v2910, %v3102
    %3104 = vmatprep.mubr.bf16.mxu0 %v1186
    %3105 = vmatmul.mubr.bf16.gmra.mrb[0].mxu0 %v1185
    %v3106 = vpop.f32.mrb[0].mxu0
    %v3107 = vadd.f32 %v2914, %v3106
    %v3108 = vpop.f32.mrb[0].mxu0
    %v3109 = vadd.f32 %v2916, %v3108
    %v3110 = vpop.f32.mrb[0].mxu0
    %v3111 = vadd.f32 %v2918, %v3110
    %v3112 = vpop.f32.mrb[0].mxu0
    %v3113 = vadd.f32 %v2920, %v3112
    %3114 = vdwg.mxu0
    %3115 = vmatprep.subr.bf16.mxu0 %v2088
    %3116 = vmatpush1.bf16.msra.mxu0 %v2087
    %3117 = vmatprep.subr.bf16.mxu0 %v2090
    %3118 = vmatpush1.bf16.msra.mxu0 %v2089
    %3119 = vmatprep.subr.bf16.mxu0 %v2092
    %3120 = vmatpush1.bf16.msra.mxu0 %v2091
    %3121 = vmatprep.subr.bf16.mxu0 %v2094
    %3122 = vmatpush1.bf16.msra.mxu0 %v2093
    %3123 = vmatprep.subr.bf16.mxu0 %v2096
    %3124 = vmatpush1.bf16.msra.mxu0 %v2095
    %3125 = vmatprep.subr.bf16.mxu0 %v2098
    %3126 = vmatpush1.bf16.msra.mxu0 %v2097
    %3127 = vmatprep.subr.bf16.mxu0 %v2100
    %3128 = vmatpush1.bf16.msra.mxu0 %v2099
    %3129 = vmatprep.subr.bf16.mxu0 %v2102
    %3130 = vmatpush1.bf16.msra.mxu0 %v2101
    %3131 = vmatprep.subr.bf16.mxu0 %v2104
    %3132 = vmatpush1.bf16.msra.mxu0 %v2103
    %3133 = vmatprep.subr.bf16.mxu0 %v2106
    %3134 = vmatpush1.bf16.msra.mxu0 %v2105
    %3135 = vmatprep.subr.bf16.mxu0 %v2108
    %3136 = vmatpush1.bf16.msra.mxu0 %v2107
    %3137 = vmatprep.subr.bf16.mxu0 %v2110
    %3138 = vmatpush1.bf16.msra.mxu0 %v2109
    %3139 = vmatprep.subr.bf16.mxu0 %v2112
    %3140 = vmatpush1.bf16.msra.mxu0 %v2111
    %3141 = vmatprep.subr.bf16.mxu0 %v2114
    %3142 = vmatpush1.bf16.msra.mxu0 %v2113
    %3143 = vmatprep.subr.bf16.mxu0 %v2116
    %3144 = vmatpush1.bf16.msra.mxu0 %v2115
    %3145 = vmatprep.subr.bf16.mxu0 %v2118
    %3146 = vmatpush1.bf16.msra.mxu0 %v2117
    %3147 = vmatprep.mubr.bf16.mxu0 %v1008
    %3148 = vmatmul.mubr.bf16.gmra.mrb[0].mxu0 %v1007
    %v3149 = vpop.f32.mrb[0].mxu0
    %v3150 = vadd.f32 %v2957, %v3149
    %v3151 = vpop.f32.mrb[0].mxu0
    %v3152 = vadd.f32 %v2959, %v3151
    %v3153 = vpop.f32.mrb[0].mxu0
    %v3154 = vadd.f32 %v2961, %v3153
    %v3155 = vpop.f32.mrb[0].mxu0
    %v3156 = vadd.f32 %v2963, %v3155
    %3157 = vmatprep.mubr.bf16.mxu0 %v1020
    %3158 = vmatmul.mubr.bf16.gmra.mrb[0].mxu0 %v1019
    %v3159 = vpop.f32.mrb[0].mxu0
    %v3160 = vadd.f32 %v2967, %v3159
    %v3161 = vpop.f32.mrb[0].mxu0
    %v3162 = vadd.f32 %v2969, %v3161
    %v3163 = vpop.f32.mrb[0].mxu0
    %v3164 = vadd.f32 %v2971, %v3163
    %v3165 = vpop.f32.mrb[0].mxu0
    %v3166 = vadd.f32 %v2973, %v3165
    %3167 = vmatprep.mubr.bf16.mxu0 %v1032
    %3168 = vmatmul.mubr.bf16.gmra.mrb[0].mxu0 %v1031
    %v3169 = vpop.f32.mrb[0].mxu0
    %v3170 = vadd.f32 %v2977, %v3169
    %v3171 = vpop.f32.mrb[0].mxu0
    %v3172 = vadd.f32 %v2979, %v3171
    %v3173 = vpop.f32.mrb[0].mxu0
    %v3174 = vadd.f32 %v2981, %v3173
    %v3175 = vpop.f32.mrb[0].mxu0
    %v3176 = vadd.f32 %v2983, %v3175
    %3177 = vmatprep.mubr.bf16.mxu0 %v1044
    %3178 = vmatmul.mubr.bf16.gmra.mrb[0].mxu0 %v1043
    %v3179 = vpop.f32.mrb[0].mxu0
    %v3180 = vadd.f32 %v2987, %v3179
    %v3181 = vpop.f32.mrb[0].mxu0
    %v3182 = vadd.f32 %v2989, %v3181
    %v3183 = vpop.f32.mrb[0].mxu0
    %v3184 = vadd.f32 %v2991, %v3183
    %v3185 = vpop.f32.mrb[0].mxu0
    %v3186 = vadd.f32 %v2993, %v3185
    %3187 = vmatprep.mubr.bf16.mxu0 %v1056
    %3188 = vmatmul.mubr.bf16.gmra.mrb[0].mxu0 %v1055
    %v3189 = vpop.f32.mrb[0].mxu0
    %v3190 = vadd.f32 %v2997, %v3189
    %v3191 = vpop.f32.mrb[0].mxu0
    %v3192 = vadd.f32 %v2999, %v3191
    %v3193 = vpop.f32.mrb[0].mxu0
    %v3194 = vadd.f32 %v3001, %v3193
    %v3195 = vpop.f32.mrb[0].mxu0
    %v3196 = vadd.f32 %v3003, %v3195
    %3197 = vmatprep.mubr.bf16.mxu0 %v1068
    %3198 = vmatmul.mubr.bf16.gmra.mrb[0].mxu0 %v1067
    %v3199 = vpop.f32.mrb[0].mxu0
    %v3200 = vadd.f32 %v3007, %v3199
    %v3201 = vpop.f32.mrb[0].mxu0
    %v3202 = vadd.f32 %v3009, %v3201
    %v3203 = vpop.f32.mrb[0].mxu0
    %v3204 = vadd.f32 %v3011, %v3203
    %v3205 = vpop.f32.mrb[0].mxu0
    %v3206 = vadd.f32 %v3013, %v3205
    %3207 = vmatprep.mubr.bf16.mxu0 %v1080
    %3208 = vmatmul.mubr.bf16.gmra.mrb[0].mxu0 %v1079
    %v3209 = vpop.f32.mrb[0].mxu0
    %v3210 = vadd.f32 %v3017, %v3209
    %v3211 = vpop.f32.mrb[0].mxu0
    %v3212 = vadd.f32 %v3019, %v3211
    %v3213 = vpop.f32.mrb[0].mxu0
    %v3214 = vadd.f32 %v3021, %v3213
    %v3215 = vpop.f32.mrb[0].mxu0
    %v3216 = vadd.f32 %v3023, %v3215
    %3217 = vmatprep.mubr.bf16.mxu0 %v1092
    %3218 = vmatmul.mubr.bf16.gmra.mrb[0].mxu0 %v1091
    %v3219 = vpop.f32.mrb[0].mxu0
    %v3220 = vadd.f32 %v3027, %v3219
    %v3221 = vpop.f32.mrb[0].mxu0
    %v3222 = vadd.f32 %v3029, %v3221
    %v3223 = vpop.f32.mrb[0].mxu0
    %v3224 = vadd.f32 %v3031, %v3223
    %v3225 = vpop.f32.mrb[0].mxu0
    %v3226 = vadd.f32 %v3033, %v3225
    %3227 = vmatprep.mubr.bf16.mxu0 %v1104
    %3228 = vmatmul.mubr.bf16.gmra.mrb[0].mxu0 %v1103
    %v3229 = vpop.f32.mrb[0].mxu0
    %v3230 = vadd.f32 %v3037, %v3229
    %v3231 = vpop.f32.mrb[0].mxu0
    %v3232 = vadd.f32 %v3039, %v3231
    %v3233 = vpop.f32.mrb[0].mxu0
    %v3234 = vadd.f32 %v3041, %v3233
    %v3235 = vpop.f32.mrb[0].mxu0
    %v3236 = vadd.f32 %v3043, %v3235
    %3237 = vmatprep.mubr.bf16.mxu0 %v1116
    %3238 = vmatmul.mubr.bf16.gmra.mrb[0].mxu0 %v1115
    %v3239 = vpop.f32.mrb[0].mxu0
    %v3240 = vadd.f32 %v3047, %v3239
    %v3241 = vpop.f32.mrb[0].mxu0
    %v3242 = vadd.f32 %v3049, %v3241
    %v3243 = vpop.f32.mrb[0].mxu0
    %v3244 = vadd.f32 %v3051, %v3243
    %v3245 = vpop.f32.mrb[0].mxu0
    %v3246 = vadd.f32 %v3053, %v3245
    %3247 = vmatprep.mubr.bf16.mxu0 %v1128
    %3248 = vmatmul.mubr.bf16.gmra.mrb[0].mxu0 %v1127
    %v3249 = vpop.f32.mrb[0].mxu0
    %v3250 = vadd.f32 %v3057, %v3249
    %v3251 = vpop.f32.mrb[0].mxu0
    %v3252 = vadd.f32 %v3059, %v3251
    %v3253 = vpop.f32.mrb[0].mxu0
    %v3254 = vadd.f32 %v3061, %v3253
    %v3255 = vpop.f32.mrb[0].mxu0
    %v3256 = vadd.f32 %v3063, %v3255
    %3257 = vmatprep.mubr.bf16.mxu0 %v1140
    %3258 = vmatmul.mubr.bf16.gmra.mrb[0].mxu0 %v1139
    %v3259 = vpop.f32.mrb[0].mxu0
    %v3260 = vadd.f32 %v3067, %v3259
    %v3261 = vpop.f32.mrb[0].mxu0
    %v3262 = vadd.f32 %v3069, %v3261
    %v3263 = vpop.f32.mrb[0].mxu0
    %v3264 = vadd.f32 %v3071, %v3263
    %v3265 = vpop.f32.mrb[0].mxu0
    %v3266 = vadd.f32 %v3073, %v3265
    %3267 = vmatprep.mubr.bf16.mxu0 %v1152
    %3268 = vmatmul.mubr.bf16.gmra.mrb[0].mxu0 %v1151
    %v3269 = vpop.f32.mrb[0].mxu0
    %v3270 = vadd.f32 %v3077, %v3269
    %v3271 = vpop.f32.mrb[0].mxu0
    %v3272 = vadd.f32 %v3079, %v3271
    %v3273 = vpop.f32.mrb[0].mxu0
    %v3274 = vadd.f32 %v3081, %v3273
    %v3275 = vpop.f32.mrb[0].mxu0
    %v3276 = vadd.f32 %v3083, %v3275
    %3277 = vmatprep.mubr.bf16.mxu0 %v1164
    %3278 = vmatmul.mubr.bf16.gmra.mrb[0].mxu0 %v1163
    %v3279 = vpop.f32.mrb[0].mxu0
    %v3280 = vadd.f32 %v3087, %v3279
    %v3281 = vpop.f32.mrb[0].mxu0
    %v3282 = vadd.f32 %v3089, %v3281
    %v3283 = vpop.f32.mrb[0].mxu0
    %v3284 = vadd.f32 %v3091, %v3283
    %v3285 = vpop.f32.mrb[0].mxu0
    %v3286 = vadd.f32 %v3093, %v3285
    %3287 = vmatprep.mubr.bf16.mxu0 %v1176
    %3288 = vmatmul.mubr.bf16.gmra.mrb[0].mxu0 %v1175
    %v3289 = vpop.f32.mrb[0].mxu0
    %v3290 = vadd.f32 %v3097, %v3289
    %v3291 = vpop.f32.mrb[0].mxu0
    %v3292 = vadd.f32 %v3099, %v3291
    %v3293 = vpop.f32.mrb[0].mxu0
    %v3294 = vadd.f32 %v3101, %v3293
    %v3295 = vpop.f32.mrb[0].mxu0
    %v3296 = vadd.f32 %v3103, %v3295
    %3297 = vmatprep.mubr.bf16.mxu0 %v1188
    %3298 = vmatmul.mubr.bf16.gmra.mrb[0].mxu0 %v1187
    %v3299 = vpop.f32.mrb[0].mxu0
    %v3300 = vadd.f32 %v3107, %v3299
    %v3301 = vpop.f32.mrb[0].mxu0
    %v3302 = vadd.f32 %v3109, %v3301
    %v3303 = vpop.f32.mrb[0].mxu0
    %v3304 = vadd.f32 %v3111, %v3303
    %v3305 = vpop.f32.mrb[0].mxu0
    %v3306 = vadd.f32 %v3113, %v3305
    %3307 = vdwg.mxu0
    %3308 = vmatprep.subr.bf16.mxu0 %v2120
    %3309 = vmatpush1.bf16.msra.mxu0 %v2119
    %3310 = vmatprep.subr.bf16.mxu0 %v2122
    %3311 = vmatpush1.bf16.msra.mxu0 %v2121
    %3312 = vmatprep.subr.bf16.mxu0 %v2124
    %3313 = vmatpush1.bf16.msra.mxu0 %v2123
    %3314 = vmatprep.subr.bf16.mxu0 %v2126
    %3315 = vmatpush1.bf16.msra.mxu0 %v2125
    %3316 = vmatprep.subr.bf16.mxu0 %v2128
    %3317 = vmatpush1.bf16.msra.mxu0 %v2127
    %3318 = vmatprep.subr.bf16.mxu0 %v2130
    %3319 = vmatpush1.bf16.msra.mxu0 %v2129
    %3320 = vmatprep.subr.bf16.mxu0 %v2132
    %3321 = vmatpush1.bf16.msra.mxu0 %v2131
    %3322 = vmatprep.subr.bf16.mxu0 %v2134
    %3323 = vmatpush1.bf16.msra.mxu0 %v2133
    %3324 = vmatprep.subr.bf16.mxu0 %v2136
    %3325 = vmatpush1.bf16.msra.mxu0 %v2135
    %3326 = vmatprep.subr.bf16.mxu0 %v2138
    %3327 = vmatpush1.bf16.msra.mxu0 %v2137
    %3328 = vmatprep.subr.bf16.mxu0 %v2140
    %3329 = vmatpush1.bf16.msra.mxu0 %v2139
    %3330 = vmatprep.subr.bf16.mxu0 %v2142
    %3331 = vmatpush1.bf16.msra.mxu0 %v2141
    %3332 = vmatprep.subr.bf16.mxu0 %v2144
    %3333 = vmatpush1.bf16.msra.mxu0 %v2143
    %3334 = vmatprep.subr.bf16.mxu0 %v2146
    %3335 = vmatpush1.bf16.msra.mxu0 %v2145
    %3336 = vmatprep.subr.bf16.mxu0 %v2148
    %3337 = vmatpush1.bf16.msra.mxu0 %v2147
    %3338 = vmatprep.subr.bf16.mxu0 %v2150
    %3339 = vmatpush1.bf16.msra.mxu0 %v2149
    %3340 = vmatprep.mubr.bf16.mxu0 %v1010
    %3341 = vmatmul.mubr.bf16.gmra.mrb[0].mxu0 %v1009
    %v3342 = vpop.f32.mrb[0].mxu0
    %v3343 = vadd.f32 %v3150, %v3342
    %v3344 = vpop.f32.mrb[0].mxu0
    %v3345 = vadd.f32 %v3152, %v3344
    %v3346 = vpop.f32.mrb[0].mxu0
    %v3347 = vadd.f32 %v3154, %v3346
    %v3348 = vpop.f32.mrb[0].mxu0
    %v3349 = vadd.f32 %v3156, %v3348
    %3350 = vmatprep.mubr.bf16.mxu0 %v1022
    %3351 = vmatmul.mubr.bf16.gmra.mrb[0].mxu0 %v1021
    %v3352 = vpop.f32.mrb[0].mxu0
    %v3353 = vadd.f32 %v3160, %v3352
    %v3354 = vpop.f32.mrb[0].mxu0
    %v3355 = vadd.f32 %v3162, %v3354
    %v3356 = vpop.f32.mrb[0].mxu0
    %v3357 = vadd.f32 %v3164, %v3356
    %v3358 = vpop.f32.mrb[0].mxu0
    %v3359 = vadd.f32 %v3166, %v3358
    %3360 = vmatprep.mubr.bf16.mxu0 %v1034
    %3361 = vmatmul.mubr.bf16.gmra.mrb[0].mxu0 %v1033
    %v3362 = vpop.f32.mrb[0].mxu0
    %v3363 = vadd.f32 %v3170, %v3362
    %v3364 = vpop.f32.mrb[0].mxu0
    %v3365 = vadd.f32 %v3172, %v3364
    %v3366 = vpop.f32.mrb[0].mxu0
    %v3367 = vadd.f32 %v3174, %v3366
    %v3368 = vpop.f32.mrb[0].mxu0
    %v3369 = vadd.f32 %v3176, %v3368
    %3370 = vmatprep.mubr.bf16.mxu0 %v1046
    %3371 = vmatmul.mubr.bf16.gmra.mrb[0].mxu0 %v1045
    %v3372 = vpop.f32.mrb[0].mxu0
    %v3373 = vadd.f32 %v3180, %v3372
    %v3374 = vpop.f32.mrb[0].mxu0
    %v3375 = vadd.f32 %v3182, %v3374
    %v3376 = vpop.f32.mrb[0].mxu0
    %v3377 = vadd.f32 %v3184, %v3376
    %v3378 = vpop.f32.mrb[0].mxu0
    %v3379 = vadd.f32 %v3186, %v3378
    %3380 = vmatprep.mubr.bf16.mxu0 %v1058
    %3381 = vmatmul.mubr.bf16.gmra.mrb[0].mxu0 %v1057
    %v3382 = vpop.f32.mrb[0].mxu0
    %v3383 = vadd.f32 %v3190, %v3382
    %v3384 = vpop.f32.mrb[0].mxu0
    %v3385 = vadd.f32 %v3192, %v3384
    %v3386 = vpop.f32.mrb[0].mxu0
    %v3387 = vadd.f32 %v3194, %v3386
    %v3388 = vpop.f32.mrb[0].mxu0
    %v3389 = vadd.f32 %v3196, %v3388
    %3390 = vmatprep.mubr.bf16.mxu0 %v1070
    %3391 = vmatmul.mubr.bf16.gmra.mrb[0].mxu0 %v1069
    %v3392 = vpop.f32.mrb[0].mxu0
    %v3393 = vadd.f32 %v3200, %v3392
    %v3394 = vpop.f32.mrb[0].mxu0
    %v3395 = vadd.f32 %v3202, %v3394
    %v3396 = vpop.f32.mrb[0].mxu0
    %v3397 = vadd.f32 %v3204, %v3396
    %v3398 = vpop.f32.mrb[0].mxu0
    %v3399 = vadd.f32 %v3206, %v3398
    %3400 = vmatprep.mubr.bf16.mxu0 %v1082
    %3401 = vmatmul.mubr.bf16.gmra.mrb[0].mxu0 %v1081
    %v3402 = vpop.f32.mrb[0].mxu0
    %v3403 = vadd.f32 %v3210, %v3402
    %v3404 = vpop.f32.mrb[0].mxu0
    %v3405 = vadd.f32 %v3212, %v3404
    %v3406 = vpop.f32.mrb[0].mxu0
    %v3407 = vadd.f32 %v3214, %v3406
    %v3408 = vpop.f32.mrb[0].mxu0
    %v3409 = vadd.f32 %v3216, %v3408
    %3410 = vmatprep.mubr.bf16.mxu0 %v1094
    %3411 = vmatmul.mubr.bf16.gmra.mrb[0].mxu0 %v1093
    %v3412 = vpop.f32.mrb[0].mxu0
    %v3413 = vadd.f32 %v3220, %v3412
    %v3414 = vpop.f32.mrb[0].mxu0
    %v3415 = vadd.f32 %v3222, %v3414
    %v3416 = vpop.f32.mrb[0].mxu0
    %v3417 = vadd.f32 %v3224, %v3416
    %v3418 = vpop.f32.mrb[0].mxu0
    %v3419 = vadd.f32 %v3226, %v3418
    %3420 = vmatprep.mubr.bf16.mxu0 %v1106
    %3421 = vmatmul.mubr.bf16.gmra.mrb[0].mxu0 %v1105
    %v3422 = vpop.f32.mrb[0].mxu0
    %v3423 = vadd.f32 %v3230, %v3422
    %v3424 = vpop.f32.mrb[0].mxu0
    %v3425 = vadd.f32 %v3232, %v3424
    %v3426 = vpop.f32.mrb[0].mxu0
    %v3427 = vadd.f32 %v3234, %v3426
    %v3428 = vpop.f32.mrb[0].mxu0
    %v3429 = vadd.f32 %v3236, %v3428
    %3430 = vmatprep.mubr.bf16.mxu0 %v1118
    %3431 = vmatmul.mubr.bf16.gmra.mrb[0].mxu0 %v1117
    %v3432 = vpop.f32.mrb[0].mxu0
    %v3433 = vadd.f32 %v3240, %v3432
    %v3434 = vpop.f32.mrb[0].mxu0
    %v3435 = vadd.f32 %v3242, %v3434
    %v3436 = vpop.f32.mrb[0].mxu0
    %v3437 = vadd.f32 %v3244, %v3436
    %v3438 = vpop.f32.mrb[0].mxu0
    %v3439 = vadd.f32 %v3246, %v3438
    %3440 = vmatprep.mubr.bf16.mxu0 %v1130
    %3441 = vmatmul.mubr.bf16.gmra.mrb[0].mxu0 %v1129
    %v3442 = vpop.f32.mrb[0].mxu0
    %v3443 = vadd.f32 %v3250, %v3442
    %v3444 = vpop.f32.mrb[0].mxu0
    %v3445 = vadd.f32 %v3252, %v3444
    %v3446 = vpop.f32.mrb[0].mxu0
    %v3447 = vadd.f32 %v3254, %v3446
    %v3448 = vpop.f32.mrb[0].mxu0
    %v3449 = vadd.f32 %v3256, %v3448
    %3450 = vmatprep.mubr.bf16.mxu0 %v1142
    %3451 = vmatmul.mubr.bf16.gmra.mrb[0].mxu0 %v1141
    %v3452 = vpop.f32.mrb[0].mxu0
    %v3453 = vadd.f32 %v3260, %v3452
    %v3454 = vpop.f32.mrb[0].mxu0
    %v3455 = vadd.f32 %v3262, %v3454
    %v3456 = vpop.f32.mrb[0].mxu0
    %v3457 = vadd.f32 %v3264, %v3456
    %v3458 = vpop.f32.mrb[0].mxu0
    %v3459 = vadd.f32 %v3266, %v3458
    %3460 = vmatprep.mubr.bf16.mxu0 %v1154
    %3461 = vmatmul.mubr.bf16.gmra.mrb[0].mxu0 %v1153
    %v3462 = vpop.f32.mrb[0].mxu0
    %v3463 = vadd.f32 %v3270, %v3462
    %v3464 = vpop.f32.mrb[0].mxu0
    %v3465 = vadd.f32 %v3272, %v3464
    %v3466 = vpop.f32.mrb[0].mxu0
    %v3467 = vadd.f32 %v3274, %v3466
    %v3468 = vpop.f32.mrb[0].mxu0
    %v3469 = vadd.f32 %v3276, %v3468
    %3470 = vmatprep.mubr.bf16.mxu0 %v1166
    %3471 = vmatmul.mubr.bf16.gmra.mrb[0].mxu0 %v1165
    %v3472 = vpop.f32.mrb[0].mxu0
    %v3473 = vadd.f32 %v3280, %v3472
    %v3474 = vpop.f32.mrb[0].mxu0
    %v3475 = vadd.f32 %v3282, %v3474
    %v3476 = vpop.f32.mrb[0].mxu0
    %v3477 = vadd.f32 %v3284, %v3476
    %v3478 = vpop.f32.mrb[0].mxu0
    %v3479 = vadd.f32 %v3286, %v3478
    %3480 = vmatprep.mubr.bf16.mxu0 %v1178
    %3481 = vmatmul.mubr.bf16.gmra.mrb[0].mxu0 %v1177
    %v3482 = vpop.f32.mrb[0].mxu0
    %v3483 = vadd.f32 %v3290, %v3482
    %v3484 = vpop.f32.mrb[0].mxu0
    %v3485 = vadd.f32 %v3292, %v3484
    %v3486 = vpop.f32.mrb[0].mxu0
    %v3487 = vadd.f32 %v3294, %v3486
    %v3488 = vpop.f32.mrb[0].mxu0
    %v3489 = vadd.f32 %v3296, %v3488
    %3490 = vmatprep.mubr.bf16.mxu0 %v1190
    %3491 = vmatmul.mubr.bf16.gmra.mrb[0].mxu0 %v1189
    %v3492 = vpop.f32.mrb[0].mxu0
    %v3493 = vadd.f32 %v3300, %v3492
    %v3494 = vpop.f32.mrb[0].mxu0
    %v3495 = vadd.f32 %v3302, %v3494
    %v3496 = vpop.f32.mrb[0].mxu0
    %v3497 = vadd.f32 %v3304, %v3496
    %v3498 = vpop.f32.mrb[0].mxu0
    %v3499 = vadd.f32 %v3306, %v3498
    %3500 = vdwg.mxu0
    %v3501 = vpack.c.bf16 %v3347, %v3343
    %v3502 = vpack.c.bf16 %v3349, %v3345
    %v3503 = vpack.c.bf16 %v3357, %v3353
    %v3504 = vpack.c.bf16 %v3359, %v3355
    %v3505 = vpack.c.bf16 %v3367, %v3363
    %v3506 = vpack.c.bf16 %v3369, %v3365
    %v3507 = vpack.c.bf16 %v3377, %v3373
    %v3508 = vpack.c.bf16 %v3379, %v3375
    %v3509 = vpack.c.bf16 %v3387, %v3383
    %v3510 = vpack.c.bf16 %v3389, %v3385
    %v3511 = vpack.c.bf16 %v3397, %v3393
    %v3512 = vpack.c.bf16 %v3399, %v3395
    %v3513 = vpack.c.bf16 %v3407, %v3403
    %v3514 = vpack.c.bf16 %v3409, %v3405
    %v3515 = vpack.c.bf16 %v3417, %v3413
    %v3516 = vpack.c.bf16 %v3419, %v3415
    %v3517 = vpack.c.bf16 %v3427, %v3423
    %v3518 = vpack.c.bf16 %v3429, %v3425
    %v3519 = vpack.c.bf16 %v3437, %v3433
    %v3520 = vpack.c.bf16 %v3439, %v3435
    %v3521 = vpack.c.bf16 %v3447, %v3443
    %v3522 = vpack.c.bf16 %v3449, %v3445
    %v3523 = vpack.c.bf16 %v3457, %v3453
    %v3524 = vpack.c.bf16 %v3459, %v3455
    %v3525 = vpack.c.bf16 %v3467, %v3463
    %v3526 = vpack.c.bf16 %v3469, %v3465
    %v3527 = vpack.c.bf16 %v3477, %v3473
    %v3528 = vpack.c.bf16 %v3479, %v3475
    %v3529 = vpack.c.bf16 %v3487, %v3483
    %v3530 = vpack.c.bf16 %v3489, %v3485
    %v3531 = vpack.c.bf16 %v3497, %v3493
    %v3532 = vpack.c.bf16 %v3499, %v3495
    %v3565 = vunpack.c.l.b16 %v3501
    %v3566 = vunpack.c.l.b16 %v3502
    %v3567 = vunpack.c.h.b16 %v3501
    %v3568 = vunpack.c.h.b16 %v3502
    %v3569 = vunpack.c.l.b16 %v3503
    %v3570 = vunpack.c.l.b16 %v3504
    %v3571 = vunpack.c.h.b16 %v3503
    %v3572 = vunpack.c.h.b16 %v3504
    %v3573 = vunpack.c.l.b16 %v3505
    %v3574 = vunpack.c.l.b16 %v3506
    %v3575 = vunpack.c.h.b16 %v3505
    %v3576 = vunpack.c.h.b16 %v3506
    %v3577 = vunpack.c.l.b16 %v3507
    %v3578 = vunpack.c.l.b16 %v3508
    %v3579 = vunpack.c.h.b16 %v3507
    %v3580 = vunpack.c.h.b16 %v3508
    %v3581 = vunpack.c.l.b16 %v3509
    %v3582 = vunpack.c.l.b16 %v3510
    %v3583 = vunpack.c.h.b16 %v3509
    %v3584 = vunpack.c.h.b16 %v3510
    %v3585 = vunpack.c.l.b16 %v3511
    %v3586 = vunpack.c.l.b16 %v3512
    %v3587 = vunpack.c.h.b16 %v3511
    %v3588 = vunpack.c.h.b16 %v3512
    %v3589 = vunpack.c.l.b16 %v3513
    %v3590 = vunpack.c.l.b16 %v3514
    %v3591 = vunpack.c.h.b16 %v3513
    %v3592 = vunpack.c.h.b16 %v3514
    %v3593 = vunpack.c.l.b16 %v3515
    %v3594 = vunpack.c.l.b16 %v3516
    %v3595 = vunpack.c.h.b16 %v3515
    %v3596 = vunpack.c.h.b16 %v3516
    %v3597 = vunpack.c.l.b16 %v3517
    %v3598 = vunpack.c.l.b16 %v3518
    %v3599 = vunpack.c.h.b16 %v3517
    %v3600 = vunpack.c.h.b16 %v3518
    %v3601 = vunpack.c.l.b16 %v3519
    %v3602 = vunpack.c.l.b16 %v3520
    %v3603 = vunpack.c.h.b16 %v3519
    %v3604 = vunpack.c.h.b16 %v3520
    %v3605 = vunpack.c.l.b16 %v3521
    %v3606 = vunpack.c.l.b16 %v3522
    %v3607 = vunpack.c.h.b16 %v3521
    %v3608 = vunpack.c.h.b16 %v3522
    %v3609 = vunpack.c.l.b16 %v3523
    %v3610 = vunpack.c.l.b16 %v3524
    %v3611 = vunpack.c.h.b16 %v3523
    %v3612 = vunpack.c.h.b16 %v3524
    %v3613 = vunpack.c.l.b16 %v3525
    %v3614 = vunpack.c.l.b16 %v3526
    %v3615 = vunpack.c.h.b16 %v3525
    %v3616 = vunpack.c.h.b16 %v3526
    %v3617 = vunpack.c.l.b16 %v3527
    %v3618 = vunpack.c.l.b16 %v3528
    %v3619 = vunpack.c.h.b16 %v3527
    %v3620 = vunpack.c.h.b16 %v3528
    %v3621 = vunpack.c.l.b16 %v3529
    %v3622 = vunpack.c.l.b16 %v3530
    %v3623 = vunpack.c.h.b16 %v3529
    %v3624 = vunpack.c.h.b16 %v3530
    %v3625 = vunpack.c.l.b16 %v3531
    %v3626 = vunpack.c.l.b16 %v3532
    %v3627 = vunpack.c.h.b16 %v3531
    %v3628 = vunpack.c.h.b16 %v3532
    %v3629 = vpack.c.b16 %v3566, %v3565
    %v3630 = vpack.c.b16 %v3568, %v3567
    %v3631 = vpack.c.b16 %v3570, %v3569
    %v3632 = vpack.c.b16 %v3572, %v3571
    %v3633 = vpack.c.b16 %v3574, %v3573
    %v3634 = vpack.c.b16 %v3576, %v3575
    %v3635 = vpack.c.b16 %v3578, %v3577
    %v3636 = vpack.c.b16 %v3580, %v3579
    %v3637 = vpack.c.b16 %v3582, %v3581
    %v3638 = vpack.c.b16 %v3584, %v3583
    %v3639 = vpack.c.b16 %v3586, %v3585
    %v3640 = vpack.c.b16 %v3588, %v3587
    %v3641 = vpack.c.b16 %v3590, %v3589
    %v3642 = vpack.c.b16 %v3592, %v3591
    %v3643 = vpack.c.b16 %v3594, %v3593
    %v3644 = vpack.c.b16 %v3596, %v3595
    %v3645 = vpack.c.b16 %v3598, %v3597
    %v3646 = vpack.c.b16 %v3600, %v3599
    %v3647 = vpack.c.b16 %v3602, %v3601
    %v3648 = vpack.c.b16 %v3604, %v3603
    %v3649 = vpack.c.b16 %v3606, %v3605
    %v3650 = vpack.c.b16 %v3608, %v3607
    %v3651 = vpack.c.b16 %v3610, %v3609
    %v3652 = vpack.c.b16 %v3612, %v3611
    %v3653 = vpack.c.b16 %v3614, %v3613
    %v3654 = vpack.c.b16 %v3616, %v3615
    %v3655 = vpack.c.b16 %v3618, %v3617
    %v3656 = vpack.c.b16 %v3620, %v3619
    %v3657 = vpack.c.b16 %v3622, %v3621
    %v3658 = vpack.c.b16 %v3624, %v3623
    %v3659 = vpack.c.b16 %v3626, %v3625
    %v3660 = vpack.c.b16 %v3628, %v3627
    %3693 = vst [vmem:[%s2] sm:$0xff] %v3629
    %3694 = vst [vmem:[%s2 + $0x8] sm:$0xff] %v3630
    %3695 = vst [vmem:[%s2 + $0x10] sm:$0xff] %v3631
    %3696 = vst [vmem:[%s2 + $0x18] sm:$0xff] %v3632
    %3697 = vst [vmem:[%s2 + $0x20] sm:$0xff] %v3633
    %3698 = vst [vmem:[%s2 + $0x28] sm:$0xff] %v3634
    %3699 = vst [vmem:[%s2 + $0x30] sm:$0xff] %v3635
    %3700 = vst [vmem:[%s2 + $0x38] sm:$0xff] %v3636
    %3701 = vst [vmem:[%s2 + $0x40] sm:$0xff] %v3637
    %3702 = vst [vmem:[%s2 + $0x48] sm:$0xff] %v3638
    %3703 = vst [vmem:[%s2 + $0x50] sm:$0xff] %v3639
    %3704 = vst [vmem:[%s2 + $0x58] sm:$0xff] %v3640
    %3705 = vst [vmem:[%s2 + $0x60] sm:$0xff] %v3641
    %3706 = vst [vmem:[%s2 + $0x68] sm:$0xff] %v3642
    %3707 = vst [vmem:[%s2 + $0x70] sm:$0xff] %v3643
    %3708 = vst [vmem:[%s2 + $0x78] sm:$0xff] %v3644
    %3709 = vst [vmem:[%s2 + $0x80] sm:$0xff] %v3645
    %3710 = vst [vmem:[%s2 + $0x88] sm:$0xff] %v3646
    %3711 = vst [vmem:[%s2 + $0x90] sm:$0xff] %v3647
    %3712 = vst [vmem:[%s2 + $0x98] sm:$0xff] %v3648
    %3713 = vst [vmem:[%s2 + $0xa0] sm:$0xff] %v3649
    %3714 = vst [vmem:[%s2 + $0xa8] sm:$0xff] %v3650
    %3715 = vst [vmem:[%s2 + $0xb0] sm:$0xff] %v3651
    %3716 = vst [vmem:[%s2 + $0xb8] sm:$0xff] %v3652
    %3717 = vst [vmem:[%s2 + $0xc0] sm:$0xff] %v3653
    %3718 = vst [vmem:[%s2 + $0xc8] sm:$0xff] %v3654
    %3719 = vst [vmem:[%s2 + $0xd0] sm:$0xff] %v3655
    %3720 = vst [vmem:[%s2 + $0xd8] sm:$0xff] %v3656
    %3721 = vst [vmem:[%s2 + $0xe0] sm:$0xff] %v3657
    %3722 = vst [vmem:[%s2 + $0xe8] sm:$0xff] %v3658
    %3723 = vst [vmem:[%s2 + $0xf0] sm:$0xff] %v3659
    %3724 = vst [vmem:[%s2 + $0xf8] sm:$0xff] %v3660
    // Predicated region
    $region18: #{gcn_forward_padded.2} parent=1 // pred_check
      _
    $region19: #{gcn_forward_padded.2} parent=1 // pred_check_branch
      %3726 = sbr.rel (0) target = $region21
    $region20: #{gcn_forward_padded.2} parent=1 // pred_region
      _
    $region21: #{gcn_forward_padded.2} parent=1 // pred_fallthru
      _
    // Predicated region
    $region22: #{gcn_forward_padded.2} parent=1 // pred_check
      _
    $region23: #{gcn_forward_padded.2} parent=1 // pred_check_branch
      %3728 = sbr.rel (0) target = $region25
    $region24: #{gcn_forward_padded.2} parent=1 // pred_region
      _
    $region25: #{gcn_forward_padded.2} parent=1 // pred_fallthru
      _
    %3729 = vsyncpa [#allocation3], 1
    %3730 = vsyncpa [#allocation5], 1

</llo_original>
